<compile_context>
chip_gen: v7x
topology: tpu7x:2x2x1
jax: 0.10.0
libtpu: 0.0.40
codegen_flags: <defaults>
</compile_context>

<pallas_src>
import jax
import jax.numpy as jnp
import numpy as np
from jax.experimental import pallas as pl
from jax.experimental.pallas import tpu as pltpu


def _round_up(x, m):
    return ((x + m - 1) // m) * m


# -----------------------------------------------------------------------------
# Fused kernel.  Grid: (num_triple_tiles,) -- "arbitrary" (pooling is a serial
# reduction over triples; the object-side epilogue runs at the last step).
# -----------------------------------------------------------------------------
def _fused_kernel(edges_ref, edges_t_ref, pred_ref, obj_ref,
                  w1so_ref, w1p_ref, b1_ref, w2_ref, b2_ref,
                  w3_ref, b3_ref, w4_ref, b4_ref,
                  wproj_ref, bproj_ref, wpp_ref, bpp_ref,
                  p_out_ref, obj_out_ref,
                  proj_ref, pooled_ref, counts_ref):
    t = pl.program_id(0)
    num_t = pl.num_programs(0)
    tile_t, Dp = pred_ref.shape
    O_pad, H = pooled_ref.shape
    f32, bf16 = jnp.float32, jnp.bfloat16

    # ---- Step 0: pre-project object vectors through [w1_s | w1_o] in ONE N=2H matmul,
    # store the result stacked as (2*O_pad, H) bf16 (s-block on top of o-block), and
    # zero the pooled/count accumulators.
    @pl.when(t == 0)
    def _init():
        so = jnp.dot(obj_ref[...], w1so_ref[...], preferred_element_type=f32)  # (O_pad, 2H)
        proj_ref[0:O_pad, :] = so[:, :H].astype(bf16)
        proj_ref[O_pad:2 * O_pad, :] = so[:, H:].astype(bf16)
        pooled_ref[...] = jnp.zeros_like(pooled_ref)
        counts_ref[...] = jnp.zeros_like(counts_ref)

    # ---- Fused s/o gather: one (tile_t, 2*O_pad) one-hot, K = 2*O_pad.
    # Padded triple rows carry the sentinel index 2*O_pad -> all-zero one-hot row.
    e = edges_ref[...]                                             # (tile_t, 2) int32
    s_col = e[:, 0:1]
    o_col = e[:, 1:2]
    lane = jax.lax.broadcasted_iota(jnp.int32, (tile_t, 2 * O_pad), 1)
    oh_g = ((lane == s_col) | (lane == (o_col + O_pad))).astype(bf16)

    pred_b = pred_ref[...]                                         # bf16 (tile_t, Dp)
    h = (jnp.dot(oh_g, proj_ref[...], preferred_element_type=f32)
         + jnp.dot(pred_b, w1p_ref[...], preferred_element_type=f32)
         + b1_ref[...])
    h = jnp.maximum(h, 0.0)

    # net1 layer 2 (build_mlp applies ReLU after the final layer too).
    t_vecs = jnp.dot(h.astype(bf16), w2_ref[...], preferred_element_type=f32) + b2_ref[...]
    t_vecs = jnp.maximum(t_vecs, 0.0)                              # (tile_t, 2H + Dp)
    new_s = t_vecs[:, :H]
    new_p = t_vecs[:, H:H + Dp]
    new_o = t_vecs[:, H + Dp:]

    # Predicate output (+ residual projection), streamed back per tile.
    p_out_ref[...] = new_p + (
        jnp.dot(pred_b, wpp_ref[...], preferred_element_type=f32) + bpp_ref[...])

    # ---- Scatter-add pooling: one-hots built directly TRANSPOSED (O_pad, tile_t) from
    # the lane-major edge copy (no XLU transpose, no concat), two bf16 accumulating dots.
    et = edges_t_ref[...]                                          # (2, tile_t) int32
    s_row = et[0:1, :]
    o_row = et[1:2, :]
    sub = jax.lax.broadcasted_iota(jnp.int32, (O_pad, tile_t), 0)
    m_s = sub == s_row                                             # (O_pad, tile_t) bool
    m_o = sub == o_row
    counts_ref[...] += jnp.sum(m_s.astype(f32) + m_o.astype(f32), axis=1, keepdims=True)
    pooled_ref[...] += (
        jnp.dot(m_s.astype(bf16), new_s.astype(bf16), preferred_element_type=f32)
        + jnp.dot(m_o.astype(bf16), new_o.astype(bf16), preferred_element_type=f32))

    # ---- Last step: 'avg' normalize, net2, object residual projection.
    @pl.when(t == num_t - 1)
    def _finish():
        avg = pooled_ref[...] / jnp.maximum(counts_ref[...], 1.0)  # clamp(min=1)
        h2 = jnp.maximum(
            jnp.dot(avg.astype(bf16), w3_ref[...], preferred_element_type=f32)
            + b3_ref[...], 0.0)
        out = jnp.maximum(
            jnp.dot(h2.astype(bf16), w4_ref[...], preferred_element_type=f32)
            + b4_ref[...], 0.0)
        obj_out_ref[...] = out + (
            jnp.dot(obj_ref[...], wproj_ref[...], preferred_element_type=f32)
            + bproj_ref[...])


# -----------------------------------------------------------------------------
# Wrapper
# -----------------------------------------------------------------------------
def graph_triple_conv(obj_vecs, pred_vecs, edges, params, *, tile_t=None):
    """Fused Pallas forward for GraphTripleConv (pooling='avg', residual=True)."""
    num_objs, Din_obj = obj_vecs.shape
    num_triples, Din_pred = pred_vecs.shape
    H = params["w1"].shape[1]
    Dout = params["w4"].shape[1]
    f32, bf16 = jnp.float32, jnp.bfloat16

    # Object axis padded to a lane multiple -> lane-dense one-hots / pooled accumulator,
    # and K = 2*O_pad (>=256) for the fused gather matmul.
    O_pad = _round_up(max(num_objs, 1), 128)

    # Triple tiles are multiples of 128 (required by the (2, tile_t) transposed-edge block,
    # and bigger tiles amortize the ~0.35us/step overhead).
    if tile_t is None:
        tile_t = min(512, _round_up(max(num_triples, 1), 128))
    tile_t = max(128, _round_up(tile_t, 128))
    t_pad = _round_up(max(num_triples, 1), tile_t)
    num_tiles = t_pad // tile_t

    # Pad the triple axis; padded edges carry a sentinel that matches no one-hot column.
    sentinel = 2 * O_pad
    edges = edges.astype(jnp.int32)
    if t_pad > num_triples:
        pad = t_pad - num_triples
        edges_p = jnp.concatenate(
            [edges, jnp.full((pad, 2), sentinel, jnp.int32)], axis=0)
        pred_p = jnp.concatenate(
            [pred_vecs, jnp.zeros((pad, Din_pred), pred_vecs.dtype)], axis=0)
    else:
        edges_p, pred_p = edges, pred_vecs
    edges_t = edges_p.T                                   # (2, t_pad) lane-major copy

    obj_p = obj_vecs
    if O_pad > num_objs:
        obj_p = jnp.concatenate(
            [obj_vecs, jnp.zeros((O_pad - num_objs, Din_obj), obj_vecs.dtype)], axis=0)

    # Split net1's first weight into s/p/o row blocks; [w1_s | w1_o] concatenated host-side
    # so the step-0 pre-projection is a single N=2H matmul. bf16 MXU operands, f32 biases.
    w1 = params["w1"]
    w1_s = w1[:Din_obj]
    w1_p = w1[Din_obj:Din_obj + Din_pred]
    w1_o = w1[Din_obj + Din_pred:]
    w1_so = jnp.concatenate([w1_s, w1_o], axis=1)         # (Din_obj, 2H)

    in_arrays = [
        edges_p,                                          # (t_pad, 2) int32
        edges_t,                                          # (2, t_pad) int32
        pred_p.astype(bf16),                              # (t_pad, Dp)
        obj_p.astype(bf16),                               # (O_pad, Din_obj)
        w1_so.astype(bf16),
        w1_p.astype(bf16),
        params["b1"].astype(f32),
        params["w2"].astype(bf16), params["b2"].astype(f32),
        params["w3"].astype(bf16), params["b3"].astype(f32),
        params["w4"].astype(bf16), params["b4"].astype(f32),
        params["wproj"].astype(bf16), params["bproj"].astype(f32),
        params["wpp"].astype(bf16), params["bpp"].astype(f32),
    ]

    def resident(arr):        # whole array, stays in VMEM across the grid
        return pl.BlockSpec(arr.shape, lambda i: (0,) * arr.ndim)

    in_specs = ([pl.BlockSpec((tile_t, 2), lambda i: (i, 0)),          # edges (streamed)
                 pl.BlockSpec((2, tile_t), lambda i: (0, i)),          # edges^T (streamed)
                 pl.BlockSpec((tile_t, Din_pred), lambda i: (i, 0))]   # pred (streamed)
                + [resident(a) for a in in_arrays[3:]])

    out_shape = (jax.ShapeDtypeStruct((t_pad, Din_pred), f32),
                 jax.ShapeDtypeStruct((O_pad, Dout), f32))
    out_specs = (pl.BlockSpec((tile_t, Din_pred), lambda i: (i, 0)),
                 pl.BlockSpec((O_pad, Dout), lambda i: (0, 0)))

    grid_spec = pltpu.PrefetchScalarGridSpec(
        num_scalar_prefetch=0,
        grid=(num_tiles,),
        in_specs=in_specs,
        out_specs=out_specs,
        scratch_shapes=[pltpu.VMEM((2 * O_pad, H), bf16),   # stacked obj @ [w1_s ; w1_o]
                        pltpu.VMEM((O_pad, H), f32),        # pooled sums
                        pltpu.VMEM((O_pad, 1), f32)],       # per-object edge counts
    )

    flops = 2 * (
        O_pad * Din_obj * 2 * H                       # pre-projection (step 0)
        + t_pad * 2 * O_pad * H                       # fused s/o gather matmul
        + t_pad * Din_pred * H                        # pred @ w1_p
        + t_pad * H * (2 * H + Din_pred)              # net1 layer 2
        + t_pad * Din_pred * Din_pred                 # predicate residual proj
        + 2 * O_pad * t_pad * H                       # pooling matmuls
        + O_pad * (H * H + H * Dout + Din_obj * Dout))  # net2 + obj residual
    bytes_accessed = int(
        sum(int(np.prod(a.shape)) * a.dtype.itemsize for a in in_arrays)
        + t_pad * Din_pred * 4 + O_pad * Dout * 4)

    new_p_pad, new_obj_pad = pl.pallas_call(
        _fused_kernel,
        grid_spec=grid_spec,
        out_shape=out_shape,
        compiler_params=pltpu.CompilerParams(
            dimension_semantics=("arbitrary",)),           # serial accumulation over triples
        cost_estimate=pl.CostEstimate(
            flops=int(flops), transcendentals=0, bytes_accessed=bytes_accessed),
    )(*in_arrays)

    return new_obj_pad[:num_objs], new_p_pad[:num_triples]


# -----------------------------------------------------------------------------
# References.
#  - reference_f32: exact PyTorch-semantics forward (loose check).
#  - reference_mirror: mirrors the kernel's precision policy (bf16 MXU inputs, f32 acc,
#    bf16-stored pre-projection, bf16 pooled values) for a tight check.
# -----------------------------------------------------------------------------
def reference_f32(obj_vecs, pred_vecs, edges, p):
    def mm(x, w):
        return jnp.dot(x, w, preferred_element_type=jnp.float32)

    s_idx, o_idx = edges[:, 0], edges[:, 1]
    H = p["w1"].shape[1]
    Dp = pred_vecs.shape[1]
    cur_t = jnp.concatenate([obj_vecs[s_idx], pred_vecs, obj_vecs[o_idx]], axis=1)
    h = jax.nn.relu(mm(cur_t, p["w1"]) + p["b1"])
    t = jax.nn.relu(mm(h, p["w2"]) + p["b2"])
    new_s, new_pv, new_o = t[:, :H], t[:, H:H + Dp], t[:, H + Dp:]
    num_objs = obj_vecs.shape[0]
    pooled = jnp.zeros((num_objs, H), jnp.float32)
    pooled = pooled.at[s_idx].add(new_s).at[o_idx].add(new_o)
    counts = jnp.zeros((num_objs,), jnp.float32).at[s_idx].add(1.0).at[o_idx].add(1.0)
    pooled = pooled / jnp.clip(counts, 1.0, None)[:, None]
    h2 = jax.nn.relu(mm(pooled, p["w3"]) + p["b3"])
    out = jax.nn.relu(mm(h2, p["w4"]) + p["b4"])
    new_obj = out + mm(obj_vecs, p["wproj"]) + p["bproj"]
    new_pv = new_pv + mm(pred_vecs, p["wpp"]) + p["bpp"]
    return new_obj, new_pv


def reference_mirror(obj_vecs, pred_vecs, edges, p):
    bf16, f32 = jnp.bfloat16, jnp.float32

    def mm(x, w):
        return jnp.dot(x.astype(bf16), w.astype(bf16), preferred_element_type=f32)

    H = p["w1"].shape[1]
    Dp = pred_vecs.shape[1]
    Din_obj = obj_vecs.shape[1]
    w1 = p["w1"]
    w1_s, w1_p, w1_o = w1[:Din_obj], w1[Din_obj:Din_obj + Dp], w1[Din_obj + Dp:]
    proj_s = mm(obj_vecs, w1_s).astype(bf16).astype(f32)   # stored bf16 in the kernel
    proj_o = mm(obj_vecs, w1_o).astype(bf16).astype(f32)
    s_idx, o_idx = edges[:, 0], edges[:, 1]
    h = jax.nn.relu(proj_s[s_idx] + proj_o[o_idx] + mm(pred_vecs, w1_p) + p["b1"])
    t = jax.nn.relu(mm(h, p["w2"]) + p["b2"])
    new_s, new_pv, new_o = t[:, :H], t[:, H:H + Dp], t[:, H + Dp:]
    num_objs = obj_vecs.shape[0]
    pooled = jnp.zeros((num_objs, H), f32)
    pooled = pooled.at[s_idx].add(new_s.astype(bf16).astype(f32))   # bf16 pooled values
    pooled = pooled.at[o_idx].add(new_o.astype(bf16).astype(f32))
    counts = jnp.zeros((num_objs,), f32).at[s_idx].add(1.0).at[o_idx].add(1.0)
    pooled = pooled / jnp.clip(counts, 1.0, None)[:, None]
    h2 = jax.nn.relu(mm(pooled, p["w3"]) + p["b3"])
    out = jax.nn.relu(mm(h2, p["w4"]) + p["b4"])
    new_obj = out + mm(obj_vecs, p["wproj"]) + p["bproj"]
    new_pv = new_pv + mm(pred_vecs, p["wpp"]) + p["bpp"]
    return new_obj, new_pv


if __name__ == "__main__":
    # Module config (pooling='avg', mlp_normalization='none', residual=True)
    Din_obj, Din_pred, H, Dout = 128, 128, 128, 128
    num_objs, num_triples = 10, 200     # not tile-aligned -> exercises padding + sentinel

    key = jax.random.PRNGKey(0)
    keys = jax.random.split(key, 16)

    def kaiming(k, fan_in, fan_out):    # stored as (in, out), i.e. W.T of torch
        return jax.random.normal(k, (fan_in, fan_out), jnp.float32) * np.sqrt(2.0 / fan_in)

    params = {
        # net1: [2*Din_obj + Din_pred -> H -> 2*H + Din_pred], ReLU after each layer
        "w1": kaiming(keys[0], 2 * Din_obj + Din_pred, H),
        "b1": jax.random.normal(keys[1], (1, H), jnp.float32) * 0.01,
        "w2": kaiming(keys[2], H, 2 * H + Din_pred),
        "b2": jax.random.normal(keys[3], (1, 2 * H + Din_pred), jnp.float32) * 0.01,
        # net2: [H -> H -> Dout], ReLU after each layer
        "w3": kaiming(keys[4], H, H),
        "b3": jax.random.normal(keys[5], (1, H), jnp.float32) * 0.01,
        "w4": kaiming(keys[6], H, Dout),
        "b4": jax.random.normal(keys[7], (1, Dout), jnp.float32) * 0.01,
        # residual projections
        "wproj": jax.random.normal(keys[8], (Din_obj, Dout), jnp.float32) * 0.05,
        "bproj": jax.random.normal(keys[9], (1, Dout), jnp.float32) * 0.01,
        "wpp": jax.random.normal(keys[10], (Din_pred, Din_pred), jnp.float32) * 0.05,
        "bpp": jax.random.normal(keys[11], (1, Din_pred), jnp.float32) * 0.01,
    }

    obj_vecs = jax.random.normal(keys[12], (num_objs, Din_obj), jnp.float32)
    pred_vecs = jax.random.normal(keys[13], (num_triples, Din_pred), jnp.float32)
    edges = jax.random.randint(keys[14], (num_triples, 2), 0, num_objs, jnp.int32)

    # tile_t=128 -> 2 grid steps with 56 padded triple rows (tests accumulation + sentinel).
    new_obj, new_pred = graph_triple_conv(obj_vecs, pred_vecs, edges, params, tile_t=128)
    new_obj, new_pred = jax.block_until_ready((new_obj, new_pred))

    # Tight check vs the precision-mirrored reference (validates gather / MLPs / scatter-add
    # / avg-normalization / slicing / residuals up to f32 summation order).
    ref_obj_m, ref_pred_m = reference_mirror(obj_vecs, pred_vecs, edges, params)
    np.testing.assert_allclose(np.asarray(new_obj), np.asarray(ref_obj_m),
                               rtol=2e-3, atol=2e-3)
    np.testing.assert_allclose(np.asarray(new_pred), np.asarray(ref_pred_m),
                               rtol=2e-3, atol=2e-3)

    # Loose sanity check vs the full-f32 (PyTorch-semantics) reference.
    ref_obj, ref_pred = reference_f32(obj_vecs, pred_vecs, edges, params)
    np.testing.assert_allclose(np.asarray(new_obj), np.asarray(ref_obj),
                               rtol=1e-1, atol=1e-1)
    np.testing.assert_allclose(np.asarray(new_pred), np.asarray(ref_pred),
                               rtol=1e-1, atol=1e-1)

    print("KERNEL_OK")
</pallas_src>

<mosaic_0001>
module attributes {stable_mosaic.version = 11 : i64} {
  func.func @_fused_kernel(%arg0: i32, %arg1: memref<128x2xi32, #tpu.memory_space<vmem>>, %arg2: memref<2x128xi32, #tpu.memory_space<vmem>>, %arg3: memref<128x128xbf16, #tpu.memory_space<vmem>>, %arg4: memref<128x128xbf16, #tpu.memory_space<vmem>>, %arg5: memref<128x256xbf16, #tpu.memory_space<vmem>>, %arg6: memref<128x128xbf16, #tpu.memory_space<vmem>>, %arg7: memref<1x128xf32, #tpu.memory_space<vmem>>, %arg8: memref<128x384xbf16, #tpu.memory_space<vmem>>, %arg9: memref<1x384xf32, #tpu.memory_space<vmem>>, %arg10: memref<128x128xbf16, #tpu.memory_space<vmem>>, %arg11: memref<1x128xf32, #tpu.memory_space<vmem>>, %arg12: memref<128x128xbf16, #tpu.memory_space<vmem>>, %arg13: memref<1x128xf32, #tpu.memory_space<vmem>>, %arg14: memref<128x128xbf16, #tpu.memory_space<vmem>>, %arg15: memref<1x128xf32, #tpu.memory_space<vmem>>, %arg16: memref<128x128xbf16, #tpu.memory_space<vmem>>, %arg17: memref<1x128xf32, #tpu.memory_space<vmem>>, %arg18: memref<128x128xf32, #tpu.memory_space<vmem>>, %arg19: memref<128x128xf32, #tpu.memory_space<vmem>>, %arg20: memref<256x128xbf16, #tpu.memory_space<vmem>>, %arg21: memref<128x128xf32, #tpu.memory_space<vmem>>, %arg22: memref<128x1xf32, #tpu.memory_space<vmem>>) attributes {dimension_semantics = [#tpu.dimension_semantics<arbitrary>], iteration_bounds = array<i64: 2>, scalar_prefetch = 0 : i64, scratch_operands = 3 : i64, tpu.core_type = #tpu.core_type<tc>, window_params = [{transform_indices = @transform_0, window_bounds = array<i64: 128, 2>}, {transform_indices = @transform_1, window_bounds = array<i64: 2, 128>}, {transform_indices = @transform_2, window_bounds = array<i64: 128, 128>}, {pipeline_mode = #tpu.pipeline_mode<synchronous>, transform_indices = @transform_3, window_bounds = array<i64: 128, 128>}, {pipeline_mode = #tpu.pipeline_mode<synchronous>, transform_indices = @transform_4, window_bounds = array<i64: 128, 256>}, {pipeline_mode = #tpu.pipeline_mode<synchronous>, transform_indices = @transform_5, window_bounds = array<i64: 128, 128>}, {pipeline_mode = #tpu.pipeline_mode<synchronous>, transform_indices = @transform_6, window_bounds = array<i64: 1, 128>}, {pipeline_mode = #tpu.pipeline_mode<synchronous>, transform_indices = @transform_7, window_bounds = array<i64: 128, 384>}, {pipeline_mode = #tpu.pipeline_mode<synchronous>, transform_indices = @transform_8, window_bounds = array<i64: 1, 384>}, {pipeline_mode = #tpu.pipeline_mode<synchronous>, transform_indices = @transform_9, window_bounds = array<i64: 128, 128>}, {pipeline_mode = #tpu.pipeline_mode<synchronous>, transform_indices = @transform_10, window_bounds = array<i64: 1, 128>}, {pipeline_mode = #tpu.pipeline_mode<synchronous>, transform_indices = @transform_11, window_bounds = array<i64: 128, 128>}, {pipeline_mode = #tpu.pipeline_mode<synchronous>, transform_indices = @transform_12, window_bounds = array<i64: 1, 128>}, {pipeline_mode = #tpu.pipeline_mode<synchronous>, transform_indices = @transform_13, window_bounds = array<i64: 128, 128>}, {pipeline_mode = #tpu.pipeline_mode<synchronous>, transform_indices = @transform_14, window_bounds = array<i64: 1, 128>}, {pipeline_mode = #tpu.pipeline_mode<synchronous>, transform_indices = @transform_15, window_bounds = array<i64: 128, 128>}, {pipeline_mode = #tpu.pipeline_mode<synchronous>, transform_indices = @transform_16, window_bounds = array<i64: 1, 128>}, {transform_indices = @transform_17, window_bounds = array<i64: 128, 128>}, {pipeline_mode = #tpu.pipeline_mode<synchronous>, transform_indices = @transform_18, window_bounds = array<i64: 128, 128>}]} {
    %c0_i32 = arith.constant 0 : i32
    %0 = arith.cmpi eq, %arg0, %c0_i32 : i32
    %1 = arith.extui %0 : i1 to i32
    %c0_i32_0 = arith.constant 0 : i32
    %2 = arith.cmpi ne, %1, %c0_i32_0 : i32
    scf.if %2 {
      %c0_39 = arith.constant 0 : index
      %c0_40 = arith.constant 0 : index
      %81 = vector.load %arg4[%c0_39, %c0_40] : memref<128x128xbf16, #tpu.memory_space<vmem>>, vector<128x128xbf16>
      %c0_41 = arith.constant 0 : index
      %c0_42 = arith.constant 0 : index
      %82 = vector.load %arg5[%c0_41, %c0_42] : memref<128x256xbf16, #tpu.memory_space<vmem>>, vector<128x256xbf16>
      %cst_43 = arith.constant dense<0.000000e+00> : vector<128x256xf32>
      %83 = tpu.matmul %81, %82, %cst_43 {dimension_numbers = #tpu.dot_dimension_numbers<[1], [0], [0], [1], [0, 0, 1, 1], [], []>} : vector<128x128xbf16>, vector<128x256xbf16>, vector<128x256xf32> -> vector<128x256xf32>
      %84 = vector.extract_strided_slice %83 {offsets = [0, 0], sizes = [128, 128], strides = [1, 1]} : vector<128x256xf32> to vector<128x128xf32>
      %85 = arith.truncf %84 : vector<128x128xf32> to vector<128x128xbf16>
      %c0_44 = arith.constant 0 : index
      %c0_45 = arith.constant 0 : index
      %86 = vector.load %arg20[%c0_44, %c0_45] : memref<256x128xbf16, #tpu.memory_space<vmem>>, vector<128x128xbf16>
      tpu.vector_store %arg20[%c0_44, %c0_45], %85 {strides = array<i32>} : memref<256x128xbf16, #tpu.memory_space<vmem>>, vector<128x128xbf16>,
      %87 = vector.extract_strided_slice %83 {offsets = [0, 128], sizes = [128, 128], strides = [1, 1]} : vector<128x256xf32> to vector<128x128xf32>
      %88 = arith.truncf %87 : vector<128x128xf32> to vector<128x128xbf16>
      %c128 = arith.constant 128 : index
      %c0_46 = arith.constant 0 : index
      %89 = vector.load %arg20[%c128, %c0_46] : memref<256x128xbf16, #tpu.memory_space<vmem>>, vector<128x128xbf16>
      tpu.vector_store %arg20[%c128, %c0_46], %88 {strides = array<i32>} : memref<256x128xbf16, #tpu.memory_space<vmem>>, vector<128x128xbf16>,
      %cst_47 = arith.constant 0.000000e+00 : f32
      %90 = vector.broadcast %cst_47 : f32 to vector<128x128xf32>
      %c0_48 = arith.constant 0 : index
      %c0_49 = arith.constant 0 : index
      %91 = vector.load %arg21[%c0_48, %c0_49] : memref<128x128xf32, #tpu.memory_space<vmem>>, vector<128x128xf32>
      tpu.vector_store %arg21[%c0_48, %c0_49], %90 {strides = array<i32>} : memref<128x128xf32, #tpu.memory_space<vmem>>, vector<128x128xf32>,
      %cst_50 = arith.constant 0.000000e+00 : f32
      %92 = vector.broadcast %cst_50 : f32 to vector<128x1xf32>
      %c0_51 = arith.constant 0 : index
      %c0_52 = arith.constant 0 : index
      %93 = vector.load %arg22[%c0_51, %c0_52] : memref<128x1xf32, #tpu.memory_space<vmem>>, vector<128x1xf32>
      tpu.vector_store %arg22[%c0_51, %c0_52], %92 {strides = array<i32>} : memref<128x1xf32, #tpu.memory_space<vmem>>, vector<128x1xf32>,
    } else {
    }
    %c0 = arith.constant 0 : index
    %c0_1 = arith.constant 0 : index
    %3 = vector.load %arg1[%c0, %c0_1] : memref<128x2xi32, #tpu.memory_space<vmem>>, vector<128x2xi32>
    %4 = vector.extract_strided_slice %3 {offsets = [0, 0], sizes = [128, 1], strides = [1, 1]} : vector<128x2xi32> to vector<128x1xi32>
    %5 = vector.extract_strided_slice %3 {offsets = [0, 1], sizes = [128, 1], strides = [1, 1]} : vector<128x2xi32> to vector<128x1xi32>
    %6 = tpu.iota {dimensions = array<i32: 1>} : vector<128x256xi32>
    %7 = vector.broadcast %4 : vector<128x1xi32> to vector<128x256xi32>
    %8 = arith.cmpi eq, %6, %7 : vector<128x256xi32>
    %c128_i32 = arith.constant 128 : i32
    %9 = vector.broadcast %c128_i32 : i32 to vector<128x1xi32>
    %10 = arith.addi %5, %9 : vector<128x1xi32>
    %11 = vector.broadcast %10 : vector<128x1xi32> to vector<128x256xi32>
    %12 = arith.cmpi eq, %6, %11 : vector<128x256xi32>
    %13 = arith.ori %8, %12 : vector<128x256xi1>
    %14 = arith.extui %13 : vector<128x256xi1> to vector<128x256xi32>
    %15 = arith.sitofp %14 : vector<128x256xi32> to vector<128x256xf32>
    %16 = arith.truncf %15 : vector<128x256xf32> to vector<128x256xbf16>
    %c0_2 = arith.constant 0 : index
    %c0_3 = arith.constant 0 : index
    %17 = vector.load %arg3[%c0_2, %c0_3] : memref<128x128xbf16, #tpu.memory_space<vmem>>, vector<128x128xbf16>
    %c0_4 = arith.constant 0 : index
    %c0_5 = arith.constant 0 : index
    %18 = vector.load %arg20[%c0_4, %c0_5] : memref<256x128xbf16, #tpu.memory_space<vmem>>, vector<256x128xbf16>
    %cst = arith.constant dense<0.000000e+00> : vector<128x128xf32>
    %19 = tpu.matmul %16, %18, %cst {dimension_numbers = #tpu.dot_dimension_numbers<[1], [0], [0], [1], [0, 0, 1, 1], [], []>} : vector<128x256xbf16>, vector<256x128xbf16>, vector<128x128xf32> -> vector<128x128xf32>
    %c0_6 = arith.constant 0 : index
    %c0_7 = arith.constant 0 : index
    %20 = vector.load %arg6[%c0_6, %c0_7] : memref<128x128xbf16, #tpu.memory_space<vmem>>, vector<128x128xbf16>
    %cst_8 = arith.constant dense<0.000000e+00> : vector<128x128xf32>
    %21 = tpu.matmul %17, %20, %cst_8 {dimension_numbers = #tpu.dot_dimension_numbers<[1], [0], [0], [1], [0, 0, 1, 1], [], []>} : vector<128x128xbf16>, vector<128x128xbf16>, vector<128x128xf32> -> vector<128x128xf32>
    %22 = arith.addf %19, %21 : vector<128x128xf32>
    %c0_9 = arith.constant 0 : index
    %c0_10 = arith.constant 0 : index
    %23 = vector.load %arg7[%c0_9, %c0_10] : memref<1x128xf32, #tpu.memory_space<vmem>>, vector<1x128xf32>
    %24 = vector.broadcast %23 : vector<1x128xf32> to vector<128x128xf32>
    %25 = arith.addf %22, %24 : vector<128x128xf32>
    %cst_11 = arith.constant 0.000000e+00 : f32
    %26 = vector.broadcast %cst_11 : f32 to vector<128x128xf32>
    %27 = arith.maximumf %25, %26 : vector<128x128xf32>
    %28 = arith.truncf %27 : vector<128x128xf32> to vector<128x128xbf16>
    %c0_12 = arith.constant 0 : index
    %c0_13 = arith.constant 0 : index
    %29 = vector.load %arg8[%c0_12, %c0_13] : memref<128x384xbf16, #tpu.memory_space<vmem>>, vector<128x384xbf16>
    %cst_14 = arith.constant dense<0.000000e+00> : vector<128x384xf32>
    %30 = tpu.matmul %28, %29, %cst_14 {dimension_numbers = #tpu.dot_dimension_numbers<[1], [0], [0], [1], [0, 0, 1, 1], [], []>} : vector<128x128xbf16>, vector<128x384xbf16>, vector<128x384xf32> -> vector<128x384xf32>
    %c0_15 = arith.constant 0 : index
    %c0_16 = arith.constant 0 : index
    %31 = vector.load %arg9[%c0_15, %c0_16] : memref<1x384xf32, #tpu.memory_space<vmem>>, vector<1x384xf32>
    %32 = vector.broadcast %31 : vector<1x384xf32> to vector<128x384xf32>
    %33 = arith.addf %30, %32 : vector<128x384xf32>
    %cst_17 = arith.constant 0.000000e+00 : f32
    %34 = vector.broadcast %cst_17 : f32 to vector<128x384xf32>
    %35 = arith.maximumf %33, %34 : vector<128x384xf32>
    %36 = vector.extract_strided_slice %35 {offsets = [0, 0], sizes = [128, 128], strides = [1, 1]} : vector<128x384xf32> to vector<128x128xf32>
    %37 = vector.extract_strided_slice %35 {offsets = [0, 128], sizes = [128, 128], strides = [1, 1]} : vector<128x384xf32> to vector<128x128xf32>
    %38 = vector.extract_strided_slice %35 {offsets = [0, 256], sizes = [128, 128], strides = [1, 1]} : vector<128x384xf32> to vector<128x128xf32>
    %c0_18 = arith.constant 0 : index
    %c0_19 = arith.constant 0 : index
    %39 = vector.load %arg16[%c0_18, %c0_19] : memref<128x128xbf16, #tpu.memory_space<vmem>>, vector<128x128xbf16>
    %cst_20 = arith.constant dense<0.000000e+00> : vector<128x128xf32>
    %40 = tpu.matmul %17, %39, %cst_20 {dimension_numbers = #tpu.dot_dimension_numbers<[1], [0], [0], [1], [0, 0, 1, 1], [], []>} : vector<128x128xbf16>, vector<128x128xbf16>, vector<128x128xf32> -> vector<128x128xf32>
    %c0_21 = arith.constant 0 : index
    %c0_22 = arith.constant 0 : index
    %41 = vector.load %arg17[%c0_21, %c0_22] : memref<1x128xf32, #tpu.memory_space<vmem>>, vector<1x128xf32>
    %42 = vector.broadcast %41 : vector<1x128xf32> to vector<128x128xf32>
    %43 = arith.addf %40, %42 : vector<128x128xf32>
    %44 = arith.addf %37, %43 : vector<128x128xf32>
    %c0_23 = arith.constant 0 : index
    %c0_24 = arith.constant 0 : index
    %45 = vector.load %arg18[%c0_23, %c0_24] : memref<128x128xf32, #tpu.memory_space<vmem>>, vector<128x128xf32>
    tpu.vector_store %arg18[%c0_23, %c0_24], %44 {strides = array<i32>} : memref<128x128xf32, #tpu.memory_space<vmem>>, vector<128x128xf32>,
    %c0_25 = arith.constant 0 : index
    %c0_26 = arith.constant 0 : index
    %46 = vector.load %arg2[%c0_25, %c0_26] : memref<2x128xi32, #tpu.memory_space<vmem>>, vector<2x128xi32>
    %47 = vector.extract_strided_slice %46 {offsets = [0, 0], sizes = [1, 128], strides = [1, 1]} : vector<2x128xi32> to vector<1x128xi32>
    %48 = vector.extract_strided_slice %46 {offsets = [1, 0], sizes = [1, 128], strides = [1, 1]} : vector<2x128xi32> to vector<1x128xi32>
    %49 = tpu.iota {dimensions = array<i32: 0>} : vector<128x128xi32>
    %50 = vector.broadcast %47 : vector<1x128xi32> to vector<128x128xi32>
    %51 = arith.cmpi eq, %49, %50 : vector<128x128xi32>
    %52 = vector.broadcast %48 : vector<1x128xi32> to vector<128x128xi32>
    %53 = arith.cmpi eq, %49, %52 : vector<128x128xi32>
    %c0_27 = arith.constant 0 : index
    %c0_28 = arith.constant 0 : index
    %54 = vector.load %arg22[%c0_27, %c0_28] : memref<128x1xf32, #tpu.memory_space<vmem>>, vector<128x1xf32>
    %55 = arith.extui %51 : vector<128x128xi1> to vector<128x128xi32>
    %56 = arith.sitofp %55 : vector<128x128xi32> to vector<128x128xf32>
    %57 = arith.extui %53 : vector<128x128xi1> to vector<128x128xi32>
    %58 = arith.sitofp %57 : vector<128x128xi32> to vector<128x128xf32>
    %59 = arith.addf %56, %58 : vector<128x128xf32>
    %cst_29 = arith.constant dense<0.000000e+00> : vector<128xf32>
    %60 = vector.multi_reduction <add>, %59, %cst_29 [1] : vector<128x128xf32> to vector<128xf32>
    %61 = vector.shape_cast %60 : vector<128xf32> to vector<128x1xf32>
    %62 = arith.addf %54, %61 : vector<128x1xf32>
    %c0_30 = arith.constant 0 : index
    %c0_31 = arith.constant 0 : index
    %63 = vector.load %arg22[%c0_30, %c0_31] : memref<128x1xf32, #tpu.memory_space<vmem>>, vector<128x1xf32>
    tpu.vector_store %arg22[%c0_30, %c0_31], %62 {strides = array<i32>} : memref<128x1xf32, #tpu.memory_space<vmem>>, vector<128x1xf32>,
    %c0_32 = arith.constant 0 : index
    %c0_33 = arith.constant 0 : index
    %64 = vector.load %arg21[%c0_32, %c0_33] : memref<128x128xf32, #tpu.memory_space<vmem>>, vector<128x128xf32>
    %65 = arith.extui %51 : vector<128x128xi1> to vector<128x128xi32>
    %66 = arith.sitofp %65 : vector<128x128xi32> to vector<128x128xf32>
    %67 = arith.truncf %66 : vector<128x128xf32> to vector<128x128xbf16>
    %68 = arith.truncf %36 : vector<128x128xf32> to vector<128x128xbf16>
    %cst_34 = arith.constant dense<0.000000e+00> : vector<128x128xf32>
    %69 = tpu.matmul %67, %68, %cst_34 {dimension_numbers = #tpu.dot_dimension_numbers<[1], [0], [0], [1], [0, 0, 1, 1], [], []>} : vector<128x128xbf16>, vector<128x128xbf16>, vector<128x128xf32> -> vector<128x128xf32>
    %70 = arith.extui %53 : vector<128x128xi1> to vector<128x128xi32>
    %71 = arith.sitofp %70 : vector<128x128xi32> to vector<128x128xf32>
    %72 = arith.truncf %71 : vector<128x128xf32> to vector<128x128xbf16>
    %73 = arith.truncf %38 : vector<128x128xf32> to vector<128x128xbf16>
    %cst_35 = arith.constant dense<0.000000e+00> : vector<128x128xf32>
    %74 = tpu.matmul %72, %73, %cst_35 {dimension_numbers = #tpu.dot_dimension_numbers<[1], [0], [0], [1], [0, 0, 1, 1], [], []>} : vector<128x128xbf16>, vector<128x128xbf16>, vector<128x128xf32> -> vector<128x128xf32>
    %75 = arith.addf %69, %74 : vector<128x128xf32>
    %76 = arith.addf %64, %75 : vector<128x128xf32>
    %c0_36 = arith.constant 0 : index
    %c0_37 = arith.constant 0 : index
    %77 = vector.load %arg21[%c0_36, %c0_37] : memref<128x128xf32, #tpu.memory_space<vmem>>, vector<128x128xf32>
    tpu.vector_store %arg21[%c0_36, %c0_37], %76 {strides = array<i32>} : memref<128x128xf32, #tpu.memory_space<vmem>>, vector<128x128xf32>,
    %c1_i32 = arith.constant 1 : i32
    %78 = arith.cmpi eq, %arg0, %c1_i32 : i32
    %79 = arith.extui %78 : i1 to i32
    %c0_i32_38 = arith.constant 0 : i32
    %80 = arith.cmpi ne, %79, %c0_i32_38 : i32
    scf.if %80 {
      %c0_39 = arith.constant 0 : index
      %c0_40 = arith.constant 0 : index
      %81 = vector.load %arg21[%c0_39, %c0_40] : memref<128x128xf32, #tpu.memory_space<vmem>>, vector<128x128xf32>
      %c0_41 = arith.constant 0 : index
      %c0_42 = arith.constant 0 : index
      %82 = vector.load %arg22[%c0_41, %c0_42] : memref<128x1xf32, #tpu.memory_space<vmem>>, vector<128x1xf32>
      %cst_43 = arith.constant 1.000000e+00 : f32
      %83 = vector.broadcast %cst_43 : f32 to vector<128x1xf32>
      %84 = arith.maximumf %82, %83 : vector<128x1xf32>
      %85 = vector.broadcast %84 : vector<128x1xf32> to vector<128x128xf32>
      %86 = arith.divf %81, %85 : vector<128x128xf32>
      %87 = arith.truncf %86 : vector<128x128xf32> to vector<128x128xbf16>
      %c0_44 = arith.constant 0 : index
      %c0_45 = arith.constant 0 : index
      %88 = vector.load %arg10[%c0_44, %c0_45] : memref<128x128xbf16, #tpu.memory_space<vmem>>, vector<128x128xbf16>
      %cst_46 = arith.constant dense<0.000000e+00> : vector<128x128xf32>
      %89 = tpu.matmul %87, %88, %cst_46 {dimension_numbers = #tpu.dot_dimension_numbers<[1], [0], [0], [1], [0, 0, 1, 1], [], []>} : vector<128x128xbf16>, vector<128x128xbf16>, vector<128x128xf32> -> vector<128x128xf32>
      %c0_47 = arith.constant 0 : index
      %c0_48 = arith.constant 0 : index
      %90 = vector.load %arg11[%c0_47, %c0_48] : memref<1x128xf32, #tpu.memory_space<vmem>>, vector<1x128xf32>
      %91 = vector.broadcast %90 : vector<1x128xf32> to vector<128x128xf32>
      %92 = arith.addf %89, %91 : vector<128x128xf32>
      %cst_49 = arith.constant 0.000000e+00 : f32
      %93 = vector.broadcast %cst_49 : f32 to vector<128x128xf32>
      %94 = arith.maximumf %92, %93 : vector<128x128xf32>
      %95 = arith.truncf %94 : vector<128x128xf32> to vector<128x128xbf16>
      %c0_50 = arith.constant 0 : index
      %c0_51 = arith.constant 0 : index
      %96 = vector.load %arg12[%c0_50, %c0_51] : memref<128x128xbf16, #tpu.memory_space<vmem>>, vector<128x128xbf16>
      %cst_52 = arith.constant dense<0.000000e+00> : vector<128x128xf32>
      %97 = tpu.matmul %95, %96, %cst_52 {dimension_numbers = #tpu.dot_dimension_numbers<[1], [0], [0], [1], [0, 0, 1, 1], [], []>} : vector<128x128xbf16>, vector<128x128xbf16>, vector<128x128xf32> -> vector<128x128xf32>
      %c0_53 = arith.constant 0 : index
      %c0_54 = arith.constant 0 : index
      %98 = vector.load %arg13[%c0_53, %c0_54] : memref<1x128xf32, #tpu.memory_space<vmem>>, vector<1x128xf32>
      %99 = vector.broadcast %98 : vector<1x128xf32> to vector<128x128xf32>
      %100 = arith.addf %97, %99 : vector<128x128xf32>
      %cst_55 = arith.constant 0.000000e+00 : f32
      %101 = vector.broadcast %cst_55 : f32 to vector<128x128xf32>
      %102 = arith.maximumf %100, %101 : vector<128x128xf32>
      %c0_56 = arith.constant 0 : index
      %c0_57 = arith.constant 0 : index
      %103 = vector.load %arg4[%c0_56, %c0_57] : memref<128x128xbf16, #tpu.memory_space<vmem>>, vector<128x128xbf16>
      %c0_58 = arith.constant 0 : index
      %c0_59 = arith.constant 0 : index
      %104 = vector.load %arg14[%c0_58, %c0_59] : memref<128x128xbf16, #tpu.memory_space<vmem>>, vector<128x128xbf16>
      %cst_60 = arith.constant dense<0.000000e+00> : vector<128x128xf32>
      %105 = tpu.matmul %103, %104, %cst_60 {dimension_numbers = #tpu.dot_dimension_numbers<[1], [0], [0], [1], [0, 0, 1, 1], [], []>} : vector<128x128xbf16>, vector<128x128xbf16>, vector<128x128xf32> -> vector<128x128xf32>
      %c0_61 = arith.constant 0 : index
      %c0_62 = arith.constant 0 : index
      %106 = vector.load %arg15[%c0_61, %c0_62] : memref<1x128xf32, #tpu.memory_space<vmem>>, vector<1x128xf32>
      %107 = vector.broadcast %106 : vector<1x128xf32> to vector<128x128xf32>
      %108 = arith.addf %105, %107 : vector<128x128xf32>
      %109 = arith.addf %102, %108 : vector<128x128xf32>
      %c0_63 = arith.constant 0 : index
      %c0_64 = arith.constant 0 : index
      %110 = vector.load %arg19[%c0_63, %c0_64] : memref<128x128xf32, #tpu.memory_space<vmem>>, vector<128x128xf32>
      tpu.vector_store %arg19[%c0_63, %c0_64], %109 {strides = array<i32>} : memref<128x128xf32, #tpu.memory_space<vmem>>, vector<128x128xf32>,
    } else {
    }
    return
  }
  func.func @transform_0(%arg0: i32) -> (i32, i32) {
    %c0_i32 = arith.constant 0 : i32
    %c0_i32_0 = arith.constant 0 : i32
    return %arg0, %c0_i32 : i32, i32
  }
  func.func @transform_1(%arg0: i32) -> (i32, i32) {
    %c0_i32 = arith.constant 0 : i32
    %c0_i32_0 = arith.constant 0 : i32
    return %c0_i32, %arg0 : i32, i32
  }
  func.func @transform_2(%arg0: i32) -> (i32, i32) {
    %c0_i32 = arith.constant 0 : i32
    %c0_i32_0 = arith.constant 0 : i32
    return %arg0, %c0_i32 : i32, i32
  }
  func.func @transform_3(%arg0: i32) -> (i32, i32) {
    %c0_i32 = arith.constant 0 : i32
    %c0_i32_0 = arith.constant 0 : i32
    %c0_i32_1 = arith.constant 0 : i32
    return %c0_i32, %c0_i32_0 : i32, i32
  }
  func.func @transform_4(%arg0: i32) -> (i32, i32) {
    %c0_i32 = arith.constant 0 : i32
    %c0_i32_0 = arith.constant 0 : i32
    %c0_i32_1 = arith.constant 0 : i32
    return %c0_i32, %c0_i32_0 : i32, i32
  }
  func.func @transform_5(%arg0: i32) -> (i32, i32) {
    %c0_i32 = arith.constant 0 : i32
    %c0_i32_0 = arith.constant 0 : i32
    %c0_i32_1 = arith.constant 0 : i32
    return %c0_i32, %c0_i32_0 : i32, i32
  }
  func.func @transform_6(%arg0: i32) -> (i32, i32) {
    %c0_i32 = arith.constant 0 : i32
    %c0_i32_0 = arith.constant 0 : i32
    %c0_i32_1 = arith.constant 0 : i32
    return %c0_i32, %c0_i32_0 : i32, i32
  }
  func.func @transform_7(%arg0: i32) -> (i32, i32) {
    %c0_i32 = arith.constant 0 : i32
    %c0_i32_0 = arith.constant 0 : i32
    %c0_i32_1 = arith.constant 0 : i32
    return %c0_i32, %c0_i32_0 : i32, i32
  }
  func.func @transform_8(%arg0: i32) -> (i32, i32) {
    %c0_i32 = arith.constant 0 : i32
    %c0_i32_0 = arith.constant 0 : i32
    %c0_i32_1 = arith.constant 0 : i32
    return %c0_i32, %c0_i32_0 : i32, i32
  }
  func.func @transform_9(%arg0: i32) -> (i32, i32) {
    %c0_i32 = arith.constant 0 : i32
    %c0_i32_0 = arith.constant 0 : i32
    %c0_i32_1 = arith.constant 0 : i32
    return %c0_i32, %c0_i32_0 : i32, i32
  }
  func.func @transform_10(%arg0: i32) -> (i32, i32) {
    %c0_i32 = arith.constant 0 : i32
    %c0_i32_0 = arith.constant 0 : i32
    %c0_i32_1 = arith.constant 0 : i32
    return %c0_i32, %c0_i32_0 : i32, i32
  }
  func.func @transform_11(%arg0: i32) -> (i32, i32) {
    %c0_i32 = arith.constant 0 : i32
    %c0_i32_0 = arith.constant 0 : i32
    %c0_i32_1 = arith.constant 0 : i32
    return %c0_i32, %c0_i32_0 : i32, i32
  }
  func.func @transform_12(%arg0: i32) -> (i32, i32) {
    %c0_i32 = arith.constant 0 : i32
    %c0_i32_0 = arith.constant 0 : i32
    %c0_i32_1 = arith.constant 0 : i32
    return %c0_i32, %c0_i32_0 : i32, i32
  }
  func.func @transform_13(%arg0: i32) -> (i32, i32) {
    %c0_i32 = arith.constant 0 : i32
    %c0_i32_0 = arith.constant 0 : i32
    %c0_i32_1 = arith.constant 0 : i32
    return %c0_i32, %c0_i32_0 : i32, i32
  }
  func.func @transform_14(%arg0: i32) -> (i32, i32) {
    %c0_i32 = arith.constant 0 : i32
    %c0_i32_0 = arith.constant 0 : i32
    %c0_i32_1 = arith.constant 0 : i32
    return %c0_i32, %c0_i32_0 : i32, i32
  }
  func.func @transform_15(%arg0: i32) -> (i32, i32) {
    %c0_i32 = arith.constant 0 : i32
    %c0_i32_0 = arith.constant 0 : i32
    %c0_i32_1 = arith.constant 0 : i32
    return %c0_i32, %c0_i32_0 : i32, i32
  }
  func.func @transform_16(%arg0: i32) -> (i32, i32) {
    %c0_i32 = arith.constant 0 : i32
    %c0_i32_0 = arith.constant 0 : i32
    %c0_i32_1 = arith.constant 0 : i32
    return %c0_i32, %c0_i32_0 : i32, i32
  }
  func.func @transform_17(%arg0: i32) -> (i32, i32) {
    %c0_i32 = arith.constant 0 : i32
    %c0_i32_0 = arith.constant 0 : i32
    return %arg0, %c0_i32 : i32, i32
  }
  func.func @transform_18(%arg0: i32) -> (i32, i32) {
    %c0_i32 = arith.constant 0 : i32
    %c0_i32_0 = arith.constant 0 : i32
    %c0_i32_1 = arith.constant 0 : i32
    return %c0_i32, %c0_i32_0 : i32, i32
  }
}

</mosaic_0001>

<llo_original>
// kernel: tpu_custom_call.1
$region0: #{tpu_custom_call.1}
  #allocation0 [shape = 'u32[]', space=smem, size = 0x4, offset = 0x4, fixed_abs, tag = 'smem constant byte address 0x4 - core index']
  #allocation1 [shape = 'u32[144,128]{1,0:T(1,128)}', space=vmem, size = 0x12000, scoped, tag = 'internal scratch']
  #allocation2 [shape = 'bf16[256,128]{1,0:T(16,128)(2,1)}', space=vmem, size = 0x10000, scoped, tag = 'scratch operand']
  #allocation3 [shape = 'f32[128,128]{1,0:T(8,128)}', space=vmem, size = 0x10000, scoped, tag = 'scratch operand']
  #allocation4 [shape = 'f32[128,1]{1,0:T(8,128)}', space=vmem, size = 0x10000, scoped, tag = 'scratch operand']
  %s0 = inlined_call_operand.vmem [shape: s32[256,2], index: 0, kind: input, shape index: {}]
  %s1 = inlined_call_operand.vmem [shape: s32[2,256], index: 1, kind: input, shape index: {}]
  %s2 = inlined_call_operand.hbm [shape: bf16[256,128], index: 2, kind: input, shape index: {}]
  %s3 = inlined_call_operand.vmem [shape: bf16[128,128], index: 3, kind: input, shape index: {}]
  %s4 = inlined_call_operand.hbm [shape: bf16[128,256], index: 4, kind: input, shape index: {}]
  %s5 = inlined_call_operand.hbm [shape: bf16[128,128], index: 5, kind: input, shape index: {}]
  %s6 = inlined_call_operand.vmem [shape: f32[1,128], index: 6, kind: input, shape index: {}]
  %s7 = inlined_call_operand.vmem [shape: bf16[128,384], index: 7, kind: input, shape index: {}]
  %s8 = inlined_call_operand.vmem [shape: f32[1,384], index: 8, kind: input, shape index: {}]
  %s9 = inlined_call_operand.hbm [shape: bf16[128,128], index: 9, kind: input, shape index: {}]
  %s10 = inlined_call_operand.vmem [shape: f32[1,128], index: 10, kind: input, shape index: {}]
  %s11 = inlined_call_operand.hbm [shape: bf16[128,128], index: 11, kind: input, shape index: {}]
  %s12 = inlined_call_operand.vmem [shape: f32[1,128], index: 12, kind: input, shape index: {}]
  %s13 = inlined_call_operand.hbm [shape: bf16[128,128], index: 13, kind: input, shape index: {}]
  %s14 = inlined_call_operand.vmem [shape: f32[1,128], index: 14, kind: input, shape index: {}]
  %s15 = inlined_call_operand.hbm [shape: bf16[128,128], index: 15, kind: input, shape index: {}]
  %s16 = inlined_call_operand.vmem [shape: f32[1,128], index: 16, kind: input, shape index: {}]
  %s17 = inlined_call_operand.hbm [shape: f32[256,128], index: 17, kind: output, shape index: {0}]
  %s18 = inlined_call_operand.hbm [shape: f32[128,128], index: 18, kind: output, shape index: {1}]
  %19 = xla_tuple %s17, %s18
  %s20 = sld [smem:[#allocation0]]
  $region145: #{tpu_custom_call.1} parent=0
    _
  %s22 = ssub.s32 1, %s20
  %s23 = scalar_select 0, %s22, %s20
  $region1: #{tpu_custom_call.1} parent=0
    #allocation5 [shape = 'u8[65536]{0}', space=vmem, size = 0x10000, scoped, tag = 'input window, operand 2']
    #allocation6 [shape = 's32[2]{0}', space=sflag, size = 0x8, scoped, tag = 'scoped memory for tpu_custom_call.1']
    #allocation7 [shape = 's32[2]{0}', space=sflag, size = 0x8, scoped, tag = 'scoped memory for tpu_custom_call.1']
    #allocation8 [shape = 'u8[65536]{0}', space=vmem, size = 0x10000, scoped, tag = 'input window, operand 4, single buffered']
    #allocation9 [shape = 's32[1]{0}', space=sflag, size = 0x4, scoped, tag = 'scoped memory for tpu_custom_call.1']
    #allocation10 [shape = 'u8[32768]{0}', space=vmem, size = 0x8000, scoped, tag = 'input window, operand 5, single buffered']
    #allocation11 [shape = 'u8[32768]{0}', space=vmem, size = 0x8000, scoped, tag = 'input window, operand 9, single buffered']
    #allocation12 [shape = 's32[1]{0}', space=sflag, size = 0x4, scoped, tag = 'scoped memory for tpu_custom_call.1']
    #allocation13 [shape = 'u8[32768]{0}', space=vmem, size = 0x8000, scoped, tag = 'input window, operand 11, single buffered']
    #allocation14 [shape = 'u8[32768]{0}', space=vmem, size = 0x8000, scoped, tag = 'input window, operand 13, single buffered']
    #allocation15 [shape = 's32[1]{0}', space=sflag, size = 0x4, scoped, tag = 'scoped memory for tpu_custom_call.1']
    #allocation16 [shape = 'u8[32768]{0}', space=vmem, size = 0x8000, scoped, tag = 'input window, operand 15, single buffered']
    #allocation17 [shape = 'u8[131072]{0}', space=vmem, size = 0x20000, scoped, tag = 'output window, operand 0']
    #allocation18 [shape = 'u8[65536]{0}', space=vmem, size = 0x10000, scoped, tag = 'output window, operand 1, single buffered']
    #allocation19 [shape = 's32[1]{0}', space=sflag, size = 0x4, scoped, tag = 'scoped memory for tpu_custom_call.1']
    %24 = vsyncpa [#allocation6], 0
    %s25 = scalar_lea.sflag [#allocation6], 1
    %26 = vsyncpa %s25, 0
    %27 = vsyncpa [#allocation9], 0
    %28 = vsyncpa [#allocation12], 0
    %29 = vsyncpa [#allocation15], 0
    %30 = vsyncpa [#allocation7], 0
    %s31 = scalar_lea.sflag [#allocation7], 1
    %32 = vsyncpa %s31, 0
    %33 = vsyncpa [#allocation19], 0
    loop: start=0, step=1, limit=4
    $region2: #{tpu_custom_call.1} parent=1 // loop_pre_header
      _
    $region3: #{tpu_custom_call.1} parent=1 // loop_header
      %s35 = sphi 0, %s39
      %p36 = scmp.ge.s32.totalorder %s35, 4
      %s45 = sphi 0, %s47
      %s48 = sphi 0, %s45
      %s49 = sphi 0, %s48
      %s65 = sphi 0, %s49
      %s71 = sphi 0, %s73
      %s74 = sphi 0, %s71
      %s75 = sphi 0, %s74
      %s91 = sphi 0, %s75
      %s97 = sphi 0, %s99
      %s100 = sphi 0, %s97
      %s101 = sphi 0, %s100
      %s117 = sphi 0, %s101
      %s121 = sphi 0, %s121
      %s123 = sphi 0, %s121
      %s124 = sphi 0, %s123
      %s138 = sphi 0, %s124
      %s142 = sphi 0, %s142
      %s144 = sphi 0, %s142
      %s145 = sphi 0, %s144
      %s159 = sphi 0, %s145
      %s163 = sphi 0, %s163
      %s165 = sphi 0, %s163
      %s166 = sphi 0, %s165
      %s180 = sphi 0, %s166
      %s184 = sphi 0, %s184
      %s186 = sphi 0, %s184
      %s187 = sphi 0, %s186
      %s201 = sphi 0, %s187
      %s205 = sphi 0, %s205
      %s207 = sphi 0, %s205
      %s208 = sphi 0, %s207
      %s222 = sphi 0, %s208
      %s226 = sphi 0, %s226
      %s228 = sphi 0, %s226
      %s229 = sphi 0, %s228
      %s243 = sphi 0, %s229
      %s247 = sphi 0, %s247
      %s249 = sphi 0, %s247
      %s250 = sphi 0, %s249
      %s264 = sphi 0, %s250
      %s268 = sphi 0, %s268
      %s270 = sphi 0, %s268
      %s271 = sphi 0, %s270
      %s285 = sphi 0, %s271
      %s289 = sphi 0, %s289
      %s291 = sphi 0, %s289
      %s292 = sphi 0, %s291
      %s306 = sphi 0, %s292
      %s310 = sphi 0, %s310
      %s312 = sphi 0, %s310
      %s313 = sphi 0, %s312
      %s327 = sphi 0, %s313
      %s331 = sphi 0, %s331
      %s333 = sphi 0, %s331
      %s334 = sphi 0, %s333
      %s348 = sphi 0, %s334
      %s352 = sphi 0, %s352
      %s354 = sphi 0, %s352
      %s355 = sphi 0, %s354
      %s369 = sphi 0, %s355
      %s373 = sphi 0, %s373
      %s375 = sphi 0, %s373
      %s376 = sphi 0, %s375
      %s390 = sphi 0, %s376
      %s394 = sphi 0, %s394
      %s396 = sphi 0, %s394
      %s397 = sphi 0, %s396
      %s411 = sphi 0, %s397
      %s417 = sphi 0, %s419
      %s420 = sphi 0, %s417
      %s421 = sphi 0, %s420
      %s437 = sphi 0, %s421
      %s441 = sphi 0, %s441
      %s443 = sphi 0, %s441
      %s444 = sphi 0, %s443
      %s458 = sphi 0, %s444
    $region4: #{tpu_custom_call.1} parent=1 // loop_header_branch
      %38 = sbr.rel (%p36) target = $region8
    $region5: #{tpu_custom_call.1} parent=1 // loop_body
      %s40 = ssub.s32 %s35, 1
      %s41 = ssub.s32 %s35, 2
      %s42 = sadd.s32 %s35, 1
      %s43 = ssub.s32 %s35, %s42
      %p44 = scmp.eq.s32.totalorder %s43, 0
      %s46 = sadd.s32 %s45, 1
      %s47 = scalar_select %p44, %s45, %s46
      %p50 = pneg %p44
      %p51 = scmp.eq.s32.totalorder %s35, 1
      %p52 = por %p50, %p51
      %p53 = scmp.ne.s32.totalorder %s45, %s48
      %p54 = scmp.eq.s32.totalorder %s35, 0
      %p55 = por %p53, %p54
      %p56 = scmp.ne.s32.totalorder %s45, %s48
      %p57 = scmp.eq.s32.totalorder %s40, 1
      %p58 = por %p56, %p57
      %p59 = scmp.ne.s32.totalorder %s48, %s49
      %p60 = scmp.eq.s32.totalorder %s40, 0
      %p61 = por %p59, %p60
      %p62 = scmp.ne.s32.totalorder %s48, %s49
      %p63 = scmp.eq.s32.totalorder %s41, 1
      %p64 = por %p62, %p63
      %p66 = scmp.ne.s32.totalorder %s49, %s65
      %p67 = scmp.eq.s32.totalorder %s41, 0
      %p68 = por %p66, %p67
      %s69 = ssub.s32 %s35, %s42
      %p70 = scmp.eq.s32.totalorder %s69, 0
      %s72 = sadd.s32 %s71, 1
      %s73 = scalar_select %p70, %s71, %s72
      %p76 = pneg %p70
      %p77 = scmp.eq.s32.totalorder %s35, 1
      %p78 = por %p76, %p77
      %p79 = scmp.ne.s32.totalorder %s71, %s74
      %p80 = scmp.eq.s32.totalorder %s35, 0
      %p81 = por %p79, %p80
      %p82 = scmp.ne.s32.totalorder %s71, %s74
      %p83 = scmp.eq.s32.totalorder %s40, 1
      %p84 = por %p82, %p83
      %p85 = scmp.ne.s32.totalorder %s74, %s75
      %p86 = scmp.eq.s32.totalorder %s40, 0
      %p87 = por %p85, %p86
      %p88 = scmp.ne.s32.totalorder %s74, %s75
      %p89 = scmp.eq.s32.totalorder %s41, 1
      %p90 = por %p88, %p89
      %p92 = scmp.ne.s32.totalorder %s75, %s91
      %p93 = scmp.eq.s32.totalorder %s41, 0
      %p94 = por %p92, %p93
      %s95 = ssub.s32 %s35, %s42
      %p96 = scmp.eq.s32.totalorder %s95, 0
      %s98 = sadd.s32 %s97, 1
      %s99 = scalar_select %p96, %s97, %s98
      %p102 = pneg %p96
      %p103 = scmp.eq.s32.totalorder %s35, 1
      %p104 = por %p102, %p103
      %p105 = scmp.ne.s32.totalorder %s97, %s100
      %p106 = scmp.eq.s32.totalorder %s35, 0
      %p107 = por %p105, %p106
      %p108 = scmp.ne.s32.totalorder %s97, %s100
      %p109 = scmp.eq.s32.totalorder %s40, 1
      %p110 = por %p108, %p109
      %p111 = scmp.ne.s32.totalorder %s100, %s101
      %p112 = scmp.eq.s32.totalorder %s40, 0
      %p113 = por %p111, %p112
      %p114 = scmp.ne.s32.totalorder %s100, %s101
      %p115 = scmp.eq.s32.totalorder %s41, 1
      %p116 = por %p114, %p115
      %p118 = scmp.ne.s32.totalorder %s101, %s117
      %p119 = scmp.eq.s32.totalorder %s41, 0
      %p120 = por %p118, %p119
      %s122 = sadd.s32 %s121, 1
      %p125 = scmp.eq.s32.totalorder %s35, 1
      %p126 = scmp.ne.s32.totalorder %s121, %s123
      %p127 = scmp.eq.s32.totalorder %s35, 0
      %p128 = por %p126, %p127
      %p129 = scmp.ne.s32.totalorder %s121, %s123
      %p130 = scmp.eq.s32.totalorder %s40, 1
      %p131 = por %p129, %p130
      %p132 = scmp.ne.s32.totalorder %s123, %s124
      %p133 = scmp.eq.s32.totalorder %s40, 0
      %p134 = por %p132, %p133
      %p135 = scmp.ne.s32.totalorder %s123, %s124
      %p136 = scmp.eq.s32.totalorder %s41, 1
      %p137 = por %p135, %p136
      %p139 = scmp.ne.s32.totalorder %s124, %s138
      %p140 = scmp.eq.s32.totalorder %s41, 0
      %p141 = por %p139, %p140
      %s143 = sadd.s32 %s142, 1
      %p146 = scmp.eq.s32.totalorder %s35, 1
      %p147 = scmp.ne.s32.totalorder %s142, %s144
      %p148 = scmp.eq.s32.totalorder %s35, 0
      %p149 = por %p147, %p148
      %p150 = scmp.ne.s32.totalorder %s142, %s144
      %p151 = scmp.eq.s32.totalorder %s40, 1
      %p152 = por %p150, %p151
      %p153 = scmp.ne.s32.totalorder %s144, %s145
      %p154 = scmp.eq.s32.totalorder %s40, 0
      %p155 = por %p153, %p154
      %p156 = scmp.ne.s32.totalorder %s144, %s145
      %p157 = scmp.eq.s32.totalorder %s41, 1
      %p158 = por %p156, %p157
      %p160 = scmp.ne.s32.totalorder %s145, %s159
      %p161 = scmp.eq.s32.totalorder %s41, 0
      %p162 = por %p160, %p161
      %s164 = sadd.s32 %s163, 1
      %p167 = scmp.eq.s32.totalorder %s35, 1
      %p168 = scmp.ne.s32.totalorder %s163, %s165
      %p169 = scmp.eq.s32.totalorder %s35, 0
      %p170 = por %p168, %p169
      %p171 = scmp.ne.s32.totalorder %s163, %s165
      %p172 = scmp.eq.s32.totalorder %s40, 1
      %p173 = por %p171, %p172
      %p174 = scmp.ne.s32.totalorder %s165, %s166
      %p175 = scmp.eq.s32.totalorder %s40, 0
      %p176 = por %p174, %p175
      %p177 = scmp.ne.s32.totalorder %s165, %s166
      %p178 = scmp.eq.s32.totalorder %s41, 1
      %p179 = por %p177, %p178
      %p181 = scmp.ne.s32.totalorder %s166, %s180
      %p182 = scmp.eq.s32.totalorder %s41, 0
      %p183 = por %p181, %p182
      %s185 = sadd.s32 %s184, 1
      %p188 = scmp.eq.s32.totalorder %s35, 1
      %p189 = scmp.ne.s32.totalorder %s184, %s186
      %p190 = scmp.eq.s32.totalorder %s35, 0
      %p191 = por %p189, %p190
      %p192 = scmp.ne.s32.totalorder %s184, %s186
      %p193 = scmp.eq.s32.totalorder %s40, 1
      %p194 = por %p192, %p193
      %p195 = scmp.ne.s32.totalorder %s186, %s187
      %p196 = scmp.eq.s32.totalorder %s40, 0
      %p197 = por %p195, %p196
      %p198 = scmp.ne.s32.totalorder %s186, %s187
      %p199 = scmp.eq.s32.totalorder %s41, 1
      %p200 = por %p198, %p199
      %p202 = scmp.ne.s32.totalorder %s187, %s201
      %p203 = scmp.eq.s32.totalorder %s41, 0
      %p204 = por %p202, %p203
      %s206 = sadd.s32 %s205, 1
      %p209 = scmp.eq.s32.totalorder %s35, 1
      %p210 = scmp.ne.s32.totalorder %s205, %s207
      %p211 = scmp.eq.s32.totalorder %s35, 0
      %p212 = por %p210, %p211
      %p213 = scmp.ne.s32.totalorder %s205, %s207
      %p214 = scmp.eq.s32.totalorder %s40, 1
      %p215 = por %p213, %p214
      %p216 = scmp.ne.s32.totalorder %s207, %s208
      %p217 = scmp.eq.s32.totalorder %s40, 0
      %p218 = por %p216, %p217
      %p219 = scmp.ne.s32.totalorder %s207, %s208
      %p220 = scmp.eq.s32.totalorder %s41, 1
      %p221 = por %p219, %p220
      %p223 = scmp.ne.s32.totalorder %s208, %s222
      %p224 = scmp.eq.s32.totalorder %s41, 0
      %p225 = por %p223, %p224
      %s227 = sadd.s32 %s226, 1
      %p230 = scmp.eq.s32.totalorder %s35, 1
      %p231 = scmp.ne.s32.totalorder %s226, %s228
      %p232 = scmp.eq.s32.totalorder %s35, 0
      %p233 = por %p231, %p232
      %p234 = scmp.ne.s32.totalorder %s226, %s228
      %p235 = scmp.eq.s32.totalorder %s40, 1
      %p236 = por %p234, %p235
      %p237 = scmp.ne.s32.totalorder %s228, %s229
      %p238 = scmp.eq.s32.totalorder %s40, 0
      %p239 = por %p237, %p238
      %p240 = scmp.ne.s32.totalorder %s228, %s229
      %p241 = scmp.eq.s32.totalorder %s41, 1
      %p242 = por %p240, %p241
      %p244 = scmp.ne.s32.totalorder %s229, %s243
      %p245 = scmp.eq.s32.totalorder %s41, 0
      %p246 = por %p244, %p245
      %s248 = sadd.s32 %s247, 1
      %p251 = scmp.eq.s32.totalorder %s35, 1
      %p252 = scmp.ne.s32.totalorder %s247, %s249
      %p253 = scmp.eq.s32.totalorder %s35, 0
      %p254 = por %p252, %p253
      %p255 = scmp.ne.s32.totalorder %s247, %s249
      %p256 = scmp.eq.s32.totalorder %s40, 1
      %p257 = por %p255, %p256
      %p258 = scmp.ne.s32.totalorder %s249, %s250
      %p259 = scmp.eq.s32.totalorder %s40, 0
      %p260 = por %p258, %p259
      %p261 = scmp.ne.s32.totalorder %s249, %s250
      %p262 = scmp.eq.s32.totalorder %s41, 1
      %p263 = por %p261, %p262
      %p265 = scmp.ne.s32.totalorder %s250, %s264
      %p266 = scmp.eq.s32.totalorder %s41, 0
      %p267 = por %p265, %p266
      %s269 = sadd.s32 %s268, 1
      %p272 = scmp.eq.s32.totalorder %s35, 1
      %p273 = scmp.ne.s32.totalorder %s268, %s270
      %p274 = scmp.eq.s32.totalorder %s35, 0
      %p275 = por %p273, %p274
      %p276 = scmp.ne.s32.totalorder %s268, %s270
      %p277 = scmp.eq.s32.totalorder %s40, 1
      %p278 = por %p276, %p277
      %p279 = scmp.ne.s32.totalorder %s270, %s271
      %p280 = scmp.eq.s32.totalorder %s40, 0
      %p281 = por %p279, %p280
      %p282 = scmp.ne.s32.totalorder %s270, %s271
      %p283 = scmp.eq.s32.totalorder %s41, 1
      %p284 = por %p282, %p283
      %p286 = scmp.ne.s32.totalorder %s271, %s285
      %p287 = scmp.eq.s32.totalorder %s41, 0
      %p288 = por %p286, %p287
      %s290 = sadd.s32 %s289, 1
      %p293 = scmp.eq.s32.totalorder %s35, 1
      %p294 = scmp.ne.s32.totalorder %s289, %s291
      %p295 = scmp.eq.s32.totalorder %s35, 0
      %p296 = por %p294, %p295
      %p297 = scmp.ne.s32.totalorder %s289, %s291
      %p298 = scmp.eq.s32.totalorder %s40, 1
      %p299 = por %p297, %p298
      %p300 = scmp.ne.s32.totalorder %s291, %s292
      %p301 = scmp.eq.s32.totalorder %s40, 0
      %p302 = por %p300, %p301
      %p303 = scmp.ne.s32.totalorder %s291, %s292
      %p304 = scmp.eq.s32.totalorder %s41, 1
      %p305 = por %p303, %p304
      %p307 = scmp.ne.s32.totalorder %s292, %s306
      %p308 = scmp.eq.s32.totalorder %s41, 0
      %p309 = por %p307, %p308
      %s311 = sadd.s32 %s310, 1
      %p314 = scmp.eq.s32.totalorder %s35, 1
      %p315 = scmp.ne.s32.totalorder %s310, %s312
      %p316 = scmp.eq.s32.totalorder %s35, 0
      %p317 = por %p315, %p316
      %p318 = scmp.ne.s32.totalorder %s310, %s312
      %p319 = scmp.eq.s32.totalorder %s40, 1
      %p320 = por %p318, %p319
      %p321 = scmp.ne.s32.totalorder %s312, %s313
      %p322 = scmp.eq.s32.totalorder %s40, 0
      %p323 = por %p321, %p322
      %p324 = scmp.ne.s32.totalorder %s312, %s313
      %p325 = scmp.eq.s32.totalorder %s41, 1
      %p326 = por %p324, %p325
      %p328 = scmp.ne.s32.totalorder %s313, %s327
      %p329 = scmp.eq.s32.totalorder %s41, 0
      %p330 = por %p328, %p329
      %s332 = sadd.s32 %s331, 1
      %p335 = scmp.eq.s32.totalorder %s35, 1
      %p336 = scmp.ne.s32.totalorder %s331, %s333
      %p337 = scmp.eq.s32.totalorder %s35, 0
      %p338 = por %p336, %p337
      %p339 = scmp.ne.s32.totalorder %s331, %s333
      %p340 = scmp.eq.s32.totalorder %s40, 1
      %p341 = por %p339, %p340
      %p342 = scmp.ne.s32.totalorder %s333, %s334
      %p343 = scmp.eq.s32.totalorder %s40, 0
      %p344 = por %p342, %p343
      %p345 = scmp.ne.s32.totalorder %s333, %s334
      %p346 = scmp.eq.s32.totalorder %s41, 1
      %p347 = por %p345, %p346
      %p349 = scmp.ne.s32.totalorder %s334, %s348
      %p350 = scmp.eq.s32.totalorder %s41, 0
      %p351 = por %p349, %p350
      %s353 = sadd.s32 %s352, 1
      %p356 = scmp.eq.s32.totalorder %s35, 1
      %p357 = scmp.ne.s32.totalorder %s352, %s354
      %p358 = scmp.eq.s32.totalorder %s35, 0
      %p359 = por %p357, %p358
      %p360 = scmp.ne.s32.totalorder %s352, %s354
      %p361 = scmp.eq.s32.totalorder %s40, 1
      %p362 = por %p360, %p361
      %p363 = scmp.ne.s32.totalorder %s354, %s355
      %p364 = scmp.eq.s32.totalorder %s40, 0
      %p365 = por %p363, %p364
      %p366 = scmp.ne.s32.totalorder %s354, %s355
      %p367 = scmp.eq.s32.totalorder %s41, 1
      %p368 = por %p366, %p367
      %p370 = scmp.ne.s32.totalorder %s355, %s369
      %p371 = scmp.eq.s32.totalorder %s41, 0
      %p372 = por %p370, %p371
      %s374 = sadd.s32 %s373, 1
      %p377 = scmp.eq.s32.totalorder %s35, 1
      %p378 = scmp.ne.s32.totalorder %s373, %s375
      %p379 = scmp.eq.s32.totalorder %s35, 0
      %p380 = por %p378, %p379
      %p381 = scmp.ne.s32.totalorder %s373, %s375
      %p382 = scmp.eq.s32.totalorder %s40, 1
      %p383 = por %p381, %p382
      %p384 = scmp.ne.s32.totalorder %s375, %s376
      %p385 = scmp.eq.s32.totalorder %s40, 0
      %p386 = por %p384, %p385
      %p387 = scmp.ne.s32.totalorder %s375, %s376
      %p388 = scmp.eq.s32.totalorder %s41, 1
      %p389 = por %p387, %p388
      %p391 = scmp.ne.s32.totalorder %s376, %s390
      %p392 = scmp.eq.s32.totalorder %s41, 0
      %p393 = por %p391, %p392
      %s395 = sadd.s32 %s394, 1
      %p398 = scmp.eq.s32.totalorder %s35, 1
      %p399 = scmp.ne.s32.totalorder %s394, %s396
      %p400 = scmp.eq.s32.totalorder %s35, 0
      %p401 = por %p399, %p400
      %p402 = scmp.ne.s32.totalorder %s394, %s396
      %p403 = scmp.eq.s32.totalorder %s40, 1
      %p404 = por %p402, %p403
      %p405 = scmp.ne.s32.totalorder %s396, %s397
      %p406 = scmp.eq.s32.totalorder %s40, 0
      %p407 = por %p405, %p406
      %p408 = scmp.ne.s32.totalorder %s396, %s397
      %p409 = scmp.eq.s32.totalorder %s41, 1
      %p410 = por %p408, %p409
      %p412 = scmp.ne.s32.totalorder %s397, %s411
      %p413 = scmp.eq.s32.totalorder %s41, 0
      %p414 = por %p412, %p413
      %s415 = ssub.s32 %s35, %s42
      %p416 = scmp.eq.s32.totalorder %s415, 0
      %s418 = sadd.s32 %s417, 1
      %s419 = scalar_select %p416, %s417, %s418
      %p422 = pneg %p416
      %p423 = scmp.eq.s32.totalorder %s35, 1
      %p424 = por %p422, %p423
      %p425 = scmp.ne.s32.totalorder %s417, %s420
      %p426 = scmp.eq.s32.totalorder %s35, 0
      %p427 = por %p425, %p426
      %p428 = scmp.ne.s32.totalorder %s417, %s420
      %p429 = scmp.eq.s32.totalorder %s40, 1
      %p430 = por %p428, %p429
      %p431 = scmp.ne.s32.totalorder %s420, %s421
      %p432 = scmp.eq.s32.totalorder %s40, 0
      %p433 = por %p431, %p432
      %p434 = scmp.ne.s32.totalorder %s420, %s421
      %p435 = scmp.eq.s32.totalorder %s41, 1
      %p436 = por %p434, %p435
      %p438 = scmp.ne.s32.totalorder %s421, %s437
      %p439 = scmp.eq.s32.totalorder %s41, 0
      %p440 = por %p438, %p439
      %s442 = sadd.s32 %s441, 1
      %p445 = scmp.eq.s32.totalorder %s35, 1
      %p446 = scmp.ne.s32.totalorder %s441, %s443
      %p447 = scmp.eq.s32.totalorder %s35, 0
      %p448 = por %p446, %p447
      %p449 = scmp.ne.s32.totalorder %s441, %s443
      %p450 = scmp.eq.s32.totalorder %s40, 1
      %p451 = por %p449, %p450
      %p452 = scmp.ne.s32.totalorder %s443, %s444
      %p453 = scmp.eq.s32.totalorder %s40, 0
      %p454 = por %p452, %p453
      %p455 = scmp.ne.s32.totalorder %s443, %s444
      %p456 = scmp.eq.s32.totalorder %s41, 1
      %p457 = por %p455, %p456
      %p459 = scmp.ne.s32.totalorder %s444, %s458
      %p460 = scmp.eq.s32.totalorder %s41, 0
      %p461 = por %p459, %p460
      %p462 = scmp.le.s32.totalorder 1, %s35
      %p463 = scmp.lt.s32.totalorder %s35, 3
      %p464 = pnand %p462, %p463
      %p465 = pneg %p464
      // Predicated region
      $region9: #{tpu_custom_call.1} parent=5 // pred_check
        _
      $region10: #{tpu_custom_call.1} parent=5 // pred_check_branch
        %467 = sbr.rel (%p464) target = $region12
      $region11: #{tpu_custom_call.1} parent=5 // pred_region
        %s468 = ssub.s32 %s35, 1
        // Predicated region
        $region13: #{tpu_custom_call.1} parent=11 // pred_check
          %p469 = pneg %p134
        $region14: #{tpu_custom_call.1} parent=11 // pred_check_branch
          %471 = sbr.rel (%p469) target = $region16
        $region15: #{tpu_custom_call.1} parent=11 // pred_region
          _
        $region16: #{tpu_custom_call.1} parent=11 // pred_fallthru
          _
        // Predicated region
        $region17: #{tpu_custom_call.1} parent=11 // pred_check
          %p472 = pneg %p155
        $region18: #{tpu_custom_call.1} parent=11 // pred_check_branch
          %474 = sbr.rel (%p472) target = $region20
        $region19: #{tpu_custom_call.1} parent=11 // pred_region
          %s476 = ssub.s32 2048, 2048
          %477 = vsyncadd [#allocation9], %s476
          %s478 = sshll.u32 [#allocation8], 4
          %s479 = int_to_ptr.vmem [resolvable:$true] %s478
          %484 = dma.hbm_to_vmem [thread:$0]  %s4, 2048, %s479, [#allocation9], 128, 128, 8
        $region20: #{tpu_custom_call.1} parent=11 // pred_fallthru
          _
        // Predicated region
        $region21: #{tpu_custom_call.1} parent=11 // pred_check
          %p485 = pneg %p176
        $region22: #{tpu_custom_call.1} parent=11 // pred_check_branch
          %487 = sbr.rel (%p485) target = $region24
        $region23: #{tpu_custom_call.1} parent=11 // pred_region
          %s489 = ssub.s32 1024, 1024
          %490 = vsyncadd [#allocation9], %s489
          %s491 = sshll.u32 [#allocation10], 4
          %s492 = int_to_ptr.vmem [resolvable:$true] %s491
          %497 = dma.hbm_to_vmem [thread:$0]  %s5, 1024, %s492, [#allocation9], 64, 64, 4
        $region24: #{tpu_custom_call.1} parent=11 // pred_fallthru
          _
        // Predicated region
        $region25: #{tpu_custom_call.1} parent=11 // pred_check
          %p498 = pneg %p197
        $region26: #{tpu_custom_call.1} parent=11 // pred_check_branch
          %500 = sbr.rel (%p498) target = $region28
        $region27: #{tpu_custom_call.1} parent=11 // pred_region
          _
        $region28: #{tpu_custom_call.1} parent=11 // pred_fallthru
          _
        // Predicated region
        $region29: #{tpu_custom_call.1} parent=11 // pred_check
          %p501 = pneg %p218
        $region30: #{tpu_custom_call.1} parent=11 // pred_check_branch
          %503 = sbr.rel (%p501) target = $region32
        $region31: #{tpu_custom_call.1} parent=11 // pred_region
          _
        $region32: #{tpu_custom_call.1} parent=11 // pred_fallthru
          _
        // Predicated region
        $region33: #{tpu_custom_call.1} parent=11 // pred_check
          %p504 = pneg %p239
        $region34: #{tpu_custom_call.1} parent=11 // pred_check_branch
          %506 = sbr.rel (%p504) target = $region36
        $region35: #{tpu_custom_call.1} parent=11 // pred_region
          _
        $region36: #{tpu_custom_call.1} parent=11 // pred_fallthru
          _
        // Predicated region
        $region37: #{tpu_custom_call.1} parent=11 // pred_check
          %p507 = pneg %p260
        $region38: #{tpu_custom_call.1} parent=11 // pred_check_branch
          %509 = sbr.rel (%p507) target = $region40
        $region39: #{tpu_custom_call.1} parent=11 // pred_region
          %s511 = ssub.s32 1024, 1024
          %512 = vsyncadd [#allocation12], %s511
          %s513 = sshll.u32 [#allocation11], 4
          %s514 = int_to_ptr.vmem [resolvable:$true] %s513
          %519 = dma.hbm_to_vmem [thread:$0]  %s9, 1024, %s514, [#allocation12], 64, 64, 4
        $region40: #{tpu_custom_call.1} parent=11 // pred_fallthru
          _
        // Predicated region
        $region41: #{tpu_custom_call.1} parent=11 // pred_check
          %p520 = pneg %p281
        $region42: #{tpu_custom_call.1} parent=11 // pred_check_branch
          %522 = sbr.rel (%p520) target = $region44
        $region43: #{tpu_custom_call.1} parent=11 // pred_region
          _
        $region44: #{tpu_custom_call.1} parent=11 // pred_fallthru
          _
        // Predicated region
        $region45: #{tpu_custom_call.1} parent=11 // pred_check
          %p523 = pneg %p302
        $region46: #{tpu_custom_call.1} parent=11 // pred_check_branch
          %525 = sbr.rel (%p523) target = $region48
        $region47: #{tpu_custom_call.1} parent=11 // pred_region
          %s527 = ssub.s32 1024, 1024
          %528 = vsyncadd [#allocation12], %s527
          %s529 = sshll.u32 [#allocation13], 4
          %s530 = int_to_ptr.vmem [resolvable:$true] %s529
          %535 = dma.hbm_to_vmem [thread:$0]  %s11, 1024, %s530, [#allocation12], 64, 64, 4
        $region48: #{tpu_custom_call.1} parent=11 // pred_fallthru
          _
        // Predicated region
        $region49: #{tpu_custom_call.1} parent=11 // pred_check
          %p536 = pneg %p323
        $region50: #{tpu_custom_call.1} parent=11 // pred_check_branch
          %538 = sbr.rel (%p536) target = $region52
        $region51: #{tpu_custom_call.1} parent=11 // pred_region
          _
        $region52: #{tpu_custom_call.1} parent=11 // pred_fallthru
          _
        // Predicated region
        $region53: #{tpu_custom_call.1} parent=11 // pred_check
          %p539 = pneg %p344
        $region54: #{tpu_custom_call.1} parent=11 // pred_check_branch
          %541 = sbr.rel (%p539) target = $region56
        $region55: #{tpu_custom_call.1} parent=11 // pred_region
          %s543 = ssub.s32 1024, 1024
          %544 = vsyncadd [#allocation15], %s543
          %s545 = sshll.u32 [#allocation14], 4
          %s546 = int_to_ptr.vmem [resolvable:$true] %s545
          %551 = dma.hbm_to_vmem [thread:$0]  %s13, 1024, %s546, [#allocation15], 64, 64, 4
        $region56: #{tpu_custom_call.1} parent=11 // pred_fallthru
          _
        // Predicated region
        $region57: #{tpu_custom_call.1} parent=11 // pred_check
          %p552 = pneg %p365
        $region58: #{tpu_custom_call.1} parent=11 // pred_check_branch
          %554 = sbr.rel (%p552) target = $region60
        $region59: #{tpu_custom_call.1} parent=11 // pred_region
          _
        $region60: #{tpu_custom_call.1} parent=11 // pred_fallthru
          _
        // Predicated region
        $region61: #{tpu_custom_call.1} parent=11 // pred_check
          %p555 = pneg %p386
        $region62: #{tpu_custom_call.1} parent=11 // pred_check_branch
          %557 = sbr.rel (%p555) target = $region64
        $region63: #{tpu_custom_call.1} parent=11 // pred_region
          %s559 = ssub.s32 1024, 1024
          %560 = vsyncadd [#allocation15], %s559
          %s561 = sshll.u32 [#allocation16], 4
          %s562 = int_to_ptr.vmem [resolvable:$true] %s561
          %567 = dma.hbm_to_vmem [thread:$0]  %s15, 1024, %s562, [#allocation15], 64, 64, 4
        $region64: #{tpu_custom_call.1} parent=11 // pred_fallthru
          _
        // Predicated region
        $region65: #{tpu_custom_call.1} parent=11 // pred_check
          %p568 = pneg %p407
        $region66: #{tpu_custom_call.1} parent=11 // pred_check_branch
          %570 = sbr.rel (%p568) target = $region68
        $region67: #{tpu_custom_call.1} parent=11 // pred_region
          _
        $region68: #{tpu_custom_call.1} parent=11 // pred_fallthru
          _
      $region12: #{tpu_custom_call.1} parent=5 // pred_fallthru
        _
      %p571 = scmp.lt.s32.totalorder %s35, 2
      // Predicated region
      $region69: #{tpu_custom_call.1} parent=5 // pred_check
        %p572 = pneg %p571
      $region70: #{tpu_custom_call.1} parent=5 // pred_check_branch
        %574 = sbr.rel (%p572) target = $region72
      $region71: #{tpu_custom_call.1} parent=5 // pred_region
        // Predicated region
        $region73: #{tpu_custom_call.1} parent=71 // pred_check
          %p575 = pneg %p55
        $region74: #{tpu_custom_call.1} parent=71 // pred_check_branch
          %577 = sbr.rel (%p575) target = $region76
        $region75: #{tpu_custom_call.1} parent=71 // pred_region
          %s578 = smul.u32 16, %s35
          %p579 = scmp.lt.s32.totalorder %s578, 31
          %s580 = scalar_select %p579, %s578, 31
          %s581 = smul.addr %s580, 8
          %s582 = scalar_lea.vmem %s0, %s581
          %s583 = smul.u32 16, %s35
        $region76: #{tpu_custom_call.1} parent=71 // pred_fallthru
          _
        // Predicated region
        $region77: #{tpu_custom_call.1} parent=71 // pred_check
          %p584 = pneg %p81
        $region78: #{tpu_custom_call.1} parent=71 // pred_check_branch
          %586 = sbr.rel (%p584) target = $region80
        $region79: #{tpu_custom_call.1} parent=71 // pred_region
          %p587 = scmp.lt.s32.totalorder %s35, 1
          %s588 = scalar_select %p587, %s35, 1
          %s589 = smul.addr %s588, 2
          %s590 = scalar_lea.vmem %s1, %s589
        $region80: #{tpu_custom_call.1} parent=71 // pred_fallthru
          _
        // Predicated region
        $region81: #{tpu_custom_call.1} parent=71 // pred_check
          %p591 = pneg %p107
        $region82: #{tpu_custom_call.1} parent=71 // pred_check_branch
          %593 = sbr.rel (%p591) target = $region84
        $region83: #{tpu_custom_call.1} parent=71 // pred_region
          %s594 = sand.u32 %s97, 1
          %s595 = scalar_lea.sflag [#allocation6], %s594
          %s596 = sand.u32 %s97, 1
          %s597 = smul.addr %s596, 64
          %s598 = scalar_lea.vmem [#allocation5], %s597
          %s599 = smul.u32 16, %s35
          %s601 = ssub.s32 1024, 1024
          %602 = vsyncadd %s595, %s601
          %s603 = smul.addr %s599, 64
          %s604 = scalar_lea.hbm %s2, %s603
          %s605 = sshll.u32 %s598, 4
          %s606 = int_to_ptr.vmem [resolvable:$true] %s605
          %611 = dma.hbm_to_vmem [thread:$0]  %s604, 1024, %s606, %s595, 64, 64, 4
        $region84: #{tpu_custom_call.1} parent=71 // pred_fallthru
          _
      $region72: #{tpu_custom_call.1} parent=5 // pred_fallthru
        _
      %p612 = scmp.le.s32.totalorder 1, %s35
      %p613 = scmp.lt.s32.totalorder %s35, 3
      %p614 = pnand %p612, %p613
      %p615 = pneg %p614
      // Predicated region
      $region85: #{tpu_custom_call.1} parent=5 // pred_check
        _
      $region86: #{tpu_custom_call.1} parent=5 // pred_check_branch
        %617 = sbr.rel (%p614) target = $region88
      $region87: #{tpu_custom_call.1} parent=5 // pred_region
        %s618 = ssub.s32 %s35, 1
        %s619 = sand.u32 %s100, 1
        %s620 = scalar_lea.sflag [#allocation6], %s619
        %s621 = sand.u32 %s100, 1
        %s622 = smul.addr %s621, 64
        %s623 = scalar_lea.vmem [#allocation5], %s622
        // Predicated region
        $region89: #{tpu_custom_call.1} parent=87 // pred_check
          %p624 = pneg %p113
        $region90: #{tpu_custom_call.1} parent=87 // pred_check_branch
          %626 = sbr.rel (%p624) target = $region92
        $region91: #{tpu_custom_call.1} parent=87 // pred_region
          %627 = dma.done %s620, 1024
        $region92: #{tpu_custom_call.1} parent=87 // pred_fallthru
          _
        // Predicated region
        $region93: #{tpu_custom_call.1} parent=87 // pred_check
          %p628 = pneg %p155
        $region94: #{tpu_custom_call.1} parent=87 // pred_check_branch
          %630 = sbr.rel (%p628) target = $region96
        $region95: #{tpu_custom_call.1} parent=87 // pred_region
          %631 = dma.done [#allocation9], 2048
        $region96: #{tpu_custom_call.1} parent=87 // pred_fallthru
          _
        // Predicated region
        $region97: #{tpu_custom_call.1} parent=87 // pred_check
          %p632 = pneg %p176
        $region98: #{tpu_custom_call.1} parent=87 // pred_check_branch
          %634 = sbr.rel (%p632) target = $region100
        $region99: #{tpu_custom_call.1} parent=87 // pred_region
          %635 = dma.done [#allocation9], 1024
        $region100: #{tpu_custom_call.1} parent=87 // pred_fallthru
          _
        // Predicated region
        $region101: #{tpu_custom_call.1} parent=87 // pred_check
          %p636 = pneg %p260
        $region102: #{tpu_custom_call.1} parent=87 // pred_check_branch
          %638 = sbr.rel (%p636) target = $region104
        $region103: #{tpu_custom_call.1} parent=87 // pred_region
          %639 = dma.done [#allocation12], 1024
        $region104: #{tpu_custom_call.1} parent=87 // pred_fallthru
          _
        // Predicated region
        $region105: #{tpu_custom_call.1} parent=87 // pred_check
          %p640 = pneg %p302
        $region106: #{tpu_custom_call.1} parent=87 // pred_check_branch
          %642 = sbr.rel (%p640) target = $region108
        $region107: #{tpu_custom_call.1} parent=87 // pred_region
          %643 = dma.done [#allocation12], 1024
        $region108: #{tpu_custom_call.1} parent=87 // pred_fallthru
          _
        // Predicated region
        $region109: #{tpu_custom_call.1} parent=87 // pred_check
          %p644 = pneg %p344
        $region110: #{tpu_custom_call.1} parent=87 // pred_check_branch
          %646 = sbr.rel (%p644) target = $region112
        $region111: #{tpu_custom_call.1} parent=87 // pred_region
          %647 = dma.done [#allocation15], 1024
        $region112: #{tpu_custom_call.1} parent=87 // pred_fallthru
          _
        // Predicated region
        $region113: #{tpu_custom_call.1} parent=87 // pred_check
          %p648 = pneg %p386
        $region114: #{tpu_custom_call.1} parent=87 // pred_check_branch
          %650 = sbr.rel (%p648) target = $region116
        $region115: #{tpu_custom_call.1} parent=87 // pred_region
          %651 = dma.done [#allocation15], 1024
        $region116: #{tpu_custom_call.1} parent=87 // pred_fallthru
          _
        %s652 = smul.u32 16, %s40
        %p653 = scmp.lt.s32.totalorder %s652, 31
        %s654 = scalar_select %p653, %s652, 31
        %s655 = smul.addr %s654, 8
        %s656 = scalar_lea.vmem %s0, %s655
        %p657 = pneg %p61
        %p658 = pneg %p58
        %p659 = scmp.lt.s32.totalorder %s40, 1
        %s660 = scalar_select %p659, %s40, 1
        %s661 = smul.addr %s660, 2
        %s662 = scalar_lea.vmem %s1, %s661
        %p663 = pneg %p87
        %p664 = pneg %p84
        %s665 = sand.u32 %s100, 1
        %s666 = scalar_lea.sflag [#allocation6], %s665
        %s667 = sand.u32 %s100, 1
        %s668 = smul.addr %s667, 64
        %s669 = scalar_lea.vmem [#allocation5], %s668
        %p670 = pneg %p113
        %p671 = pneg %p110
        %p672 = pneg %p134
        %p673 = pneg %p131
        %p674 = pneg %p155
        %p675 = pneg %p152
        %p676 = pneg %p176
        %p677 = pneg %p173
        %p678 = pneg %p197
        %p679 = pneg %p194
        %p680 = pneg %p218
        %p681 = pneg %p215
        %p682 = pneg %p239
        %p683 = pneg %p236
        %p684 = pneg %p260
        %p685 = pneg %p257
        %p686 = pneg %p281
        %p687 = pneg %p278
        %p688 = pneg %p302
        %p689 = pneg %p299
        %p690 = pneg %p323
        %p691 = pneg %p320
        %p692 = pneg %p344
        %p693 = pneg %p341
        %p694 = pneg %p365
        %p695 = pneg %p362
        %p696 = pneg %p386
        %p697 = pneg %p383
        %p698 = pneg %p407
        %p699 = pneg %p404
        %p700 = pneg %p433
        %p701 = pneg %p430
        %s702 = sand.u32 %s420, 1
        %s703 = scalar_lea.sflag [#allocation7], %s702
        %s704 = sand.u32 %s420, 1
        %s705 = smul.addr %s704, 128
        %s706 = scalar_lea.vmem [#allocation17], %s705
        %p707 = pneg %p454
        %p708 = pneg %p451
        %s709 = smul.u32 16, %s40
        %p710 = scmp.lt.s32.totalorder %s709, 31
        %s711 = scalar_select %p710, %s709, 31
        %s712 = smul.addr %s711, 8
        %s713 = scalar_lea.vmem %s0, %s712
        %s714 = smul.u32 16, %s40
        %p715 = scmp.lt.s32.totalorder %s40, 1
        %s716 = scalar_select %p715, %s40, 1
        %s717 = smul.addr %s716, 2
        %s718 = scalar_lea.vmem %s1, %s717
        %s719 = smul.u32 16, %s40
        %s720 = smul.u32 16, %s40
        %p722 = scmp.eq.s32.totalorder %s40, 0
        // Predicated region
        $region117: #{tpu_custom_call.1} parent=87 // pred_check
          %p723 = pneg %p722
        $region118: #{tpu_custom_call.1} parent=87 // pred_check_branch
          %725 = sbr.rel (%p723) target = $region120
        $region119: #{tpu_custom_call.1} parent=87 // pred_region
          %v726 = vld [vmem:[%s3] sm:$0xf]
          %v727 = vld [vmem:[%s3 + $0x4] sm:$0xf]
          %v728 = vld [vmem:[%s3 + $0x8] sm:$0xf]
          %v729 = vld [vmem:[%s3 + $0xc] sm:$0xf]
          %v730 = vld [vmem:[%s3 + $0x10] sm:$0xf]
          %v731 = vld [vmem:[%s3 + $0x14] sm:$0xf]
          %v732 = vld [vmem:[%s3 + $0x18] sm:$0xf]
          %v733 = vld [vmem:[%s3 + $0x1c] sm:$0xf]
          %v734 = vld [vmem:[%s3 + $0x20] sm:$0xf]
          %v735 = vld [vmem:[%s3 + $0x24] sm:$0xf]
          %v736 = vld [vmem:[%s3 + $0x28] sm:$0xf]
          %v737 = vld [vmem:[%s3 + $0x2c] sm:$0xf]
          %v738 = vld [vmem:[%s3 + $0x30] sm:$0xf]
          %v739 = vld [vmem:[%s3 + $0x34] sm:$0xf]
          %v740 = vld [vmem:[%s3 + $0x38] sm:$0xf]
          %v741 = vld [vmem:[%s3 + $0x3c] sm:$0xf]
          %v742 = vld [vmem:[#allocation8] sm:$0xff]
          %v743 = vld [vmem:[#allocation8 + $0x8] sm:$0xff]
          %v744 = vld [vmem:[#allocation8 + $0x10] sm:$0xff]
          %v745 = vld [vmem:[#allocation8 + $0x18] sm:$0xff]
          %v746 = vld [vmem:[#allocation8 + $0x20] sm:$0xff]
          %v747 = vld [vmem:[#allocation8 + $0x28] sm:$0xff]
          %v748 = vld [vmem:[#allocation8 + $0x30] sm:$0xff]
          %v749 = vld [vmem:[#allocation8 + $0x38] sm:$0xff]
          %v750 = vld [vmem:[#allocation8 + $0x40] sm:$0xff]
          %v751 = vld [vmem:[#allocation8 + $0x48] sm:$0xff]
          %v752 = vld [vmem:[#allocation8 + $0x50] sm:$0xff]
          %v753 = vld [vmem:[#allocation8 + $0x58] sm:$0xff]
          %v754 = vld [vmem:[#allocation8 + $0x60] sm:$0xff]
          %v755 = vld [vmem:[#allocation8 + $0x68] sm:$0xff]
          %v756 = vld [vmem:[#allocation8 + $0x70] sm:$0xff]
          %v757 = vld [vmem:[#allocation8 + $0x78] sm:$0xff]
          %v774 = vunpack.c.l.b16 %v726
          %v775 = vunpack.c.l.b16 %v727
          %v776 = vunpack.c.l.b16 %v728
          %v777 = vunpack.c.l.b16 %v729
          %v778 = vunpack.c.l.b16 %v730
          %v779 = vunpack.c.l.b16 %v731
          %v780 = vunpack.c.l.b16 %v732
          %v781 = vunpack.c.l.b16 %v733
          %v782 = vunpack.c.l.b16 %v734
          %v783 = vunpack.c.l.b16 %v735
          %v784 = vunpack.c.l.b16 %v736
          %v785 = vunpack.c.l.b16 %v737
          %v786 = vunpack.c.l.b16 %v738
          %v787 = vunpack.c.l.b16 %v739
          %v788 = vunpack.c.l.b16 %v740
          %v789 = vunpack.c.l.b16 %v741
          %v790 = vpack.c.b16 %v775, %v774
          %v791 = vpack.c.b16 %v777, %v776
          %v792 = vpack.c.b16 %v779, %v778
          %v793 = vpack.c.b16 %v781, %v780
          %v794 = vpack.c.b16 %v783, %v782
          %v795 = vpack.c.b16 %v785, %v784
          %v796 = vpack.c.b16 %v787, %v786
          %v797 = vpack.c.b16 %v789, %v788
          %v822 = vunpack.c.l.b16 %v742
          %v823 = vunpack.c.h.b16 %v742
          %v824 = vunpack.c.l.b16 %v743
          %v825 = vunpack.c.h.b16 %v743
          %v826 = vunpack.c.l.b16 %v744
          %v827 = vunpack.c.h.b16 %v744
          %v828 = vunpack.c.l.b16 %v745
          %v829 = vunpack.c.h.b16 %v745
          %v830 = vunpack.c.l.b16 %v746
          %v831 = vunpack.c.h.b16 %v746
          %v832 = vunpack.c.l.b16 %v747
          %v833 = vunpack.c.h.b16 %v747
          %v834 = vunpack.c.l.b16 %v748
          %v835 = vunpack.c.h.b16 %v748
          %v836 = vunpack.c.l.b16 %v749
          %v837 = vunpack.c.h.b16 %v749
          %v838 = vunpack.c.l.b16 %v750
          %v839 = vunpack.c.h.b16 %v750
          %v840 = vunpack.c.l.b16 %v751
          %v841 = vunpack.c.h.b16 %v751
          %v842 = vunpack.c.l.b16 %v752
          %v843 = vunpack.c.h.b16 %v752
          %v844 = vunpack.c.l.b16 %v753
          %v845 = vunpack.c.h.b16 %v753
          %v846 = vunpack.c.l.b16 %v754
          %v847 = vunpack.c.h.b16 %v754
          %v848 = vunpack.c.l.b16 %v755
          %v849 = vunpack.c.h.b16 %v755
          %v850 = vunpack.c.l.b16 %v756
          %v851 = vunpack.c.h.b16 %v756
          %v852 = vunpack.c.l.b16 %v757
          %v853 = vunpack.c.h.b16 %v757
          %v854 = vpack.c.b16 %v824, %v822
          %v855 = vpack.c.b16 %v825, %v823
          %v856 = vpack.c.b16 %v828, %v826
          %v857 = vpack.c.b16 %v829, %v827
          %v858 = vpack.c.b16 %v832, %v830
          %v859 = vpack.c.b16 %v833, %v831
          %v860 = vpack.c.b16 %v836, %v834
          %v861 = vpack.c.b16 %v837, %v835
          %v862 = vpack.c.b16 %v840, %v838
          %v863 = vpack.c.b16 %v841, %v839
          %v864 = vpack.c.b16 %v844, %v842
          %v865 = vpack.c.b16 %v845, %v843
          %v866 = vpack.c.b16 %v848, %v846
          %v867 = vpack.c.b16 %v849, %v847
          %v868 = vpack.c.b16 %v852, %v850
          %v869 = vpack.c.b16 %v853, %v851
          %886 = vmatprep.subr.bf16.mxu0 %v855
          %887 = vmatpush1.bf16.msra.mxu0 %v854
          %888 = vmatprep.subr.bf16.mxu0 %v857
          %889 = vmatpush1.bf16.msra.mxu0 %v856
          %890 = vmatprep.subr.bf16.mxu0 %v859
          %891 = vmatpush1.bf16.msra.mxu0 %v858
          %892 = vmatprep.subr.bf16.mxu0 %v861
          %893 = vmatpush1.bf16.msra.mxu0 %v860
          %894 = vmatprep.subr.bf16.mxu0 %v863
          %895 = vmatpush1.bf16.msra.mxu0 %v862
          %896 = vmatprep.subr.bf16.mxu0 %v865
          %897 = vmatpush1.bf16.msra.mxu0 %v864
          %898 = vmatprep.subr.bf16.mxu0 %v867
          %899 = vmatpush1.bf16.msra.mxu0 %v866
          %900 = vmatprep.subr.bf16.mxu0 %v869
          %901 = vmatpush1.bf16.msra.mxu0 %v868
          %902 = vmatprep.subr.bf16.mxu0 0
          %903 = vmatpush1.bf16.msra.mxu0 0
          %904 = vmatprep.subr.bf16.mxu0 0
          %905 = vmatpush1.bf16.msra.mxu0 0
          %906 = vmatprep.subr.bf16.mxu0 0
          %907 = vmatpush1.bf16.msra.mxu0 0
          %908 = vmatprep.subr.bf16.mxu0 0
          %909 = vmatpush1.bf16.msra.mxu0 0
          %910 = vmatprep.subr.bf16.mxu0 0
          %911 = vmatpush1.bf16.msra.mxu0 0
          %912 = vmatprep.subr.bf16.mxu0 0
          %913 = vmatpush1.bf16.msra.mxu0 0
          %914 = vmatprep.subr.bf16.mxu0 0
          %915 = vmatpush1.bf16.msra.mxu0 0
          %916 = vmatprep.subr.bf16.mxu0 0
          %917 = vmatpush1.bf16.msra.mxu0 0
          %918 = vmatprep.mubr.bf16.mxu0 0
          %919 = vmatmul.mubr.bf16.gmra.mrb[0].mxu0 %v790
          %v920 = vpop.f32.mrb[0].mxu0
          %v921 = vadd.f32 0.0, %v920
          %v922 = vpop.f32.mrb[0].mxu0
          %v923 = vadd.f32 0.0, %v922
          %v924 = vpop.f32.mrb[0].mxu0
          %v925 = vadd.f32 0.0, %v924
          %v926 = vpop.f32.mrb[0].mxu0
          %v927 = vadd.f32 0.0, %v926
          %928 = vmatprep.mubr.bf16.mxu0 0
          %929 = vmatmul.mubr.bf16.gmra.mrb[0].mxu0 %v791
          %v930 = vpop.f32.mrb[0].mxu0
          %v931 = vadd.f32 0.0, %v930
          %v932 = vpop.f32.mrb[0].mxu0
          %v933 = vadd.f32 0.0, %v932
          %v934 = vpop.f32.mrb[0].mxu0
          %v935 = vadd.f32 0.0, %v934
          %v936 = vpop.f32.mrb[0].mxu0
          %v937 = vadd.f32 0.0, %v936
          %938 = vmatprep.mubr.bf16.mxu0 0
          %939 = vmatmul.mubr.bf16.gmra.mrb[0].mxu0 %v792
          %v940 = vpop.f32.mrb[0].mxu0
          %v941 = vadd.f32 0.0, %v940
          %v942 = vpop.f32.mrb[0].mxu0
          %v943 = vadd.f32 0.0, %v942
          %v944 = vpop.f32.mrb[0].mxu0
          %v945 = vadd.f32 0.0, %v944
          %v946 = vpop.f32.mrb[0].mxu0
          %v947 = vadd.f32 0.0, %v946
          %948 = vmatprep.mubr.bf16.mxu0 0
          %949 = vmatmul.mubr.bf16.gmra.mrb[0].mxu0 %v793
          %v950 = vpop.f32.mrb[0].mxu0
          %v951 = vadd.f32 0.0, %v950
          %v952 = vpop.f32.mrb[0].mxu0
          %v953 = vadd.f32 0.0, %v952
          %v954 = vpop.f32.mrb[0].mxu0
          %v955 = vadd.f32 0.0, %v954
          %v956 = vpop.f32.mrb[0].mxu0
          %v957 = vadd.f32 0.0, %v956
          %958 = vmatprep.mubr.bf16.mxu0 0
          %959 = vmatmul.mubr.bf16.gmra.mrb[0].mxu0 %v794
          %v960 = vpop.f32.mrb[0].mxu0
          %v961 = vadd.f32 0.0, %v960
          %v962 = vpop.f32.mrb[0].mxu0
          %v963 = vadd.f32 0.0, %v962
          %v964 = vpop.f32.mrb[0].mxu0
          %v965 = vadd.f32 0.0, %v964
          %v966 = vpop.f32.mrb[0].mxu0
          %v967 = vadd.f32 0.0, %v966
          %968 = vmatprep.mubr.bf16.mxu0 0
          %969 = vmatmul.mubr.bf16.gmra.mrb[0].mxu0 %v795
          %v970 = vpop.f32.mrb[0].mxu0
          %v971 = vadd.f32 0.0, %v970
          %v972 = vpop.f32.mrb[0].mxu0
          %v973 = vadd.f32 0.0, %v972
          %v974 = vpop.f32.mrb[0].mxu0
          %v975 = vadd.f32 0.0, %v974
          %v976 = vpop.f32.mrb[0].mxu0
          %v977 = vadd.f32 0.0, %v976
          %978 = vmatprep.mubr.bf16.mxu0 0
          %979 = vmatmul.mubr.bf16.gmra.mrb[0].mxu0 %v796
          %v980 = vpop.f32.mrb[0].mxu0
          %v981 = vadd.f32 0.0, %v980
          %v982 = vpop.f32.mrb[0].mxu0
          %v983 = vadd.f32 0.0, %v982
          %v984 = vpop.f32.mrb[0].mxu0
          %v985 = vadd.f32 0.0, %v984
          %v986 = vpop.f32.mrb[0].mxu0
          %v987 = vadd.f32 0.0, %v986
          %988 = vmatprep.mubr.bf16.mxu0 0
          %989 = vmatmul.mubr.bf16.gmra.mrb[0].mxu0 %v797
          %v990 = vpop.f32.mrb[0].mxu0
          %v991 = vadd.f32 0.0, %v990
          %v992 = vpop.f32.mrb[0].mxu0
          %v993 = vadd.f32 0.0, %v992
          %v994 = vpop.f32.mrb[0].mxu0
          %v995 = vadd.f32 0.0, %v994
          %v996 = vpop.f32.mrb[0].mxu0
          %v997 = vadd.f32 0.0, %v996
          %998 = vdwg.mxu0
          %v999 = vpack.c.bf16 %v925, %v921
          %v1000 = vpack.c.bf16 %v935, %v931
          %v1001 = vpack.c.bf16 %v945, %v941
          %v1002 = vpack.c.bf16 %v955, %v951
          %v1003 = vpack.c.bf16 %v965, %v961
          %v1004 = vpack.c.bf16 %v975, %v971
          %v1005 = vpack.c.bf16 %v985, %v981
          %v1006 = vpack.c.bf16 %v995, %v991
          %1007 = vst [vmem:[#allocation2] sm:$0xff] %v999
          %1008 = vst [vmem:[#allocation2 + $0x8] sm:$0xff] %v1000
          %1009 = vst [vmem:[#allocation2 + $0x10] sm:$0xff] %v1001
          %1010 = vst [vmem:[#allocation2 + $0x18] sm:$0xff] %v1002
          %1011 = vst [vmem:[#allocation2 + $0x20] sm:$0xff] %v1003
          %1012 = vst [vmem:[#allocation2 + $0x28] sm:$0xff] %v1004
          %1013 = vst [vmem:[#allocation2 + $0x30] sm:$0xff] %v1005
          %1014 = vst [vmem:[#allocation2 + $0x38] sm:$0xff] %v1006
          %v1015 = vpack.c.bf16 %v927, %v923
          %v1016 = vpack.c.bf16 %v937, %v933
          %v1017 = vpack.c.bf16 %v947, %v943
          %v1018 = vpack.c.bf16 %v957, %v953
          %v1019 = vpack.c.bf16 %v967, %v963
          %v1020 = vpack.c.bf16 %v977, %v973
          %v1021 = vpack.c.bf16 %v987, %v983
          %v1022 = vpack.c.bf16 %v997, %v993
          %1023 = vst [vmem:[#allocation2 + $0x40] sm:$0xff] %v1015
          %1024 = vst [vmem:[#allocation2 + $0x48] sm:$0xff] %v1016
          %1025 = vst [vmem:[#allocation2 + $0x50] sm:$0xff] %v1017
          %1026 = vst [vmem:[#allocation2 + $0x58] sm:$0xff] %v1018
          %1027 = vst [vmem:[#allocation2 + $0x60] sm:$0xff] %v1019
          %1028 = vst [vmem:[#allocation2 + $0x68] sm:$0xff] %v1020
          %1029 = vst [vmem:[#allocation2 + $0x70] sm:$0xff] %v1021
          %1030 = vst [vmem:[#allocation2 + $0x78] sm:$0xff] %v1022
          %1031 = vst [vmem:[#allocation3] sm:$0xff] 0.0
          %1032 = vst [vmem:[#allocation3 + $0x8] sm:$0xff] 0.0
          %1033 = vst [vmem:[#allocation3 + $0x10] sm:$0xff] 0.0
          %1034 = vst [vmem:[#allocation3 + $0x18] sm:$0xff] 0.0
          %1035 = vst [vmem:[#allocation3 + $0x20] sm:$0xff] 0.0
          %1036 = vst [vmem:[#allocation3 + $0x28] sm:$0xff] 0.0
          %1037 = vst [vmem:[#allocation3 + $0x30] sm:$0xff] 0.0
          %1038 = vst [vmem:[#allocation3 + $0x38] sm:$0xff] 0.0
          %1039 = vst [vmem:[#allocation3 + $0x40] sm:$0xff] 0.0
          %1040 = vst [vmem:[#allocation3 + $0x48] sm:$0xff] 0.0
          %1041 = vst [vmem:[#allocation3 + $0x50] sm:$0xff] 0.0
          %1042 = vst [vmem:[#allocation3 + $0x58] sm:$0xff] 0.0
          %1043 = vst [vmem:[#allocation3 + $0x60] sm:$0xff] 0.0
          %1044 = vst [vmem:[#allocation3 + $0x68] sm:$0xff] 0.0
          %1045 = vst [vmem:[#allocation3 + $0x70] sm:$0xff] 0.0
          %1046 = vst [vmem:[#allocation3 + $0x78] sm:$0xff] 0.0
          %vm1047 = vcmask 7168
          %1048 = vst.msk [vmem:[#allocation4] sm:$0xff] %vm1047, 0.0
          %1049 = vst.msk [vmem:[#allocation4 + $0x8] sm:$0xff] %vm1047, 0.0
          %1050 = vst.msk [vmem:[#allocation4 + $0x10] sm:$0xff] %vm1047, 0.0
          %1051 = vst.msk [vmem:[#allocation4 + $0x18] sm:$0xff] %vm1047, 0.0
          %1052 = vst.msk [vmem:[#allocation4 + $0x20] sm:$0xff] %vm1047, 0.0
          %1053 = vst.msk [vmem:[#allocation4 + $0x28] sm:$0xff] %vm1047, 0.0
          %1054 = vst.msk [vmem:[#allocation4 + $0x30] sm:$0xff] %vm1047, 0.0
          %1055 = vst.msk [vmem:[#allocation4 + $0x38] sm:$0xff] %vm1047, 0.0
          %1056 = vst.msk [vmem:[#allocation4 + $0x40] sm:$0xff] %vm1047, 0.0
          %1057 = vst.msk [vmem:[#allocation4 + $0x48] sm:$0xff] %vm1047, 0.0
          %1058 = vst.msk [vmem:[#allocation4 + $0x50] sm:$0xff] %vm1047, 0.0
          %1059 = vst.msk [vmem:[#allocation4 + $0x58] sm:$0xff] %vm1047, 0.0
          %1060 = vst.msk [vmem:[#allocation4 + $0x60] sm:$0xff] %vm1047, 0.0
          %1061 = vst.msk [vmem:[#allocation4 + $0x68] sm:$0xff] %vm1047, 0.0
          %1062 = vst.msk [vmem:[#allocation4 + $0x70] sm:$0xff] %vm1047, 0.0
          %1063 = vst.msk [vmem:[#allocation4 + $0x78] sm:$0xff] %vm1047, 0.0
        $region120: #{tpu_custom_call.1} parent=87 // pred_fallthru
          _
        %v1064 = vld [vmem:[%s713] sm:$0xff]
        %v1065 = vld [vmem:[%s713 + $0x8] sm:$0xff]
        %v1066 = vld [vmem:[%s713 + $0x10] sm:$0xff]
        %v1067 = vld [vmem:[%s713 + $0x18] sm:$0xff]
        %v1068 = vld [vmem:[%s713 + $0x20] sm:$0xff]
        %v1069 = vld [vmem:[%s713 + $0x28] sm:$0xff]
        %v1070 = vld [vmem:[%s713 + $0x30] sm:$0xff]
        %v1071 = vld [vmem:[%s713 + $0x38] sm:$0xff]
        %v1072 = vld [vmem:[%s713 + $0x40] sm:$0xff]
        %v1073 = vld [vmem:[%s713 + $0x48] sm:$0xff]
        %v1074 = vld [vmem:[%s713 + $0x50] sm:$0xff]
        %v1075 = vld [vmem:[%s713 + $0x58] sm:$0xff]
        %v1076 = vld [vmem:[%s713 + $0x60] sm:$0xff]
        %v1077 = vld [vmem:[%s713 + $0x68] sm:$0xff]
        %v1078 = vld [vmem:[%s713 + $0x70] sm:$0xff]
        %v1079 = vld [vmem:[%s713 + $0x78] sm:$0xff]
        %v1080 = vlaneseq
        %v1081 = vand.u32 %v1080, 127
        %v1082 = vadd.s32 %v1081, 128
        %1083 = vset.pattern.permute.xlu0 0
        %1084 = vperm.xlu0 %1083, %v1064
        %v1085 = vpop.permute.xlu0 %1084
        %1086 = vset.pattern.permute.xlu0 0
        %1087 = vperm.xlu0 %1086, %v1065
        %v1088 = vpop.permute.xlu0 %1087
        %1089 = vset.pattern.permute.xlu0 0
        %1090 = vperm.xlu0 %1089, %v1066
        %v1091 = vpop.permute.xlu0 %1090
        %1092 = vset.pattern.permute.xlu0 0
        %1093 = vperm.xlu0 %1092, %v1067
        %v1094 = vpop.permute.xlu0 %1093
        %1095 = vset.pattern.permute.xlu0 0
        %1096 = vperm.xlu0 %1095, %v1068
        %v1097 = vpop.permute.xlu0 %1096
        %1098 = vset.pattern.permute.xlu0 0
        %1099 = vperm.xlu0 %1098, %v1069
        %v1100 = vpop.permute.xlu0 %1099
        %1101 = vset.pattern.permute.xlu0 0
        %1102 = vperm.xlu0 %1101, %v1070
        %v1103 = vpop.permute.xlu0 %1102
        %1104 = vset.pattern.permute.xlu0 0
        %1105 = vperm.xlu0 %1104, %v1071
        %v1106 = vpop.permute.xlu0 %1105
        %1107 = vset.pattern.permute.xlu0 0
        %1108 = vperm.xlu0 %1107, %v1072
        %v1109 = vpop.permute.xlu0 %1108
        %1110 = vset.pattern.permute.xlu0 0
        %1111 = vperm.xlu0 %1110, %v1073
        %v1112 = vpop.permute.xlu0 %1111
        %1113 = vset.pattern.permute.xlu0 0
        %1114 = vperm.xlu0 %1113, %v1074
        %v1115 = vpop.permute.xlu0 %1114
        %1116 = vset.pattern.permute.xlu0 0
        %1117 = vperm.xlu0 %1116, %v1075
        %v1118 = vpop.permute.xlu0 %1117
        %1119 = vset.pattern.permute.xlu0 0
        %1120 = vperm.xlu0 %1119, %v1076
        %v1121 = vpop.permute.xlu0 %1120
        %1122 = vset.pattern.permute.xlu0 0
        %1123 = vperm.xlu0 %1122, %v1077
        %v1124 = vpop.permute.xlu0 %1123
        %1125 = vset.pattern.permute.xlu0 0
        %1126 = vperm.xlu0 %1125, %v1078
        %v1127 = vpop.permute.xlu0 %1126
        %1128 = vset.pattern.permute.xlu0 0
        %1129 = vperm.xlu0 %1128, %v1079
        %v1130 = vpop.permute.xlu0 %1129
        %vm1131 = vcmp.eq.s32.totalorder %v1081, %v1085
        %vm1132 = vcmp.eq.s32.totalorder %v1082, %v1085
        %vm1133 = vcmp.eq.s32.totalorder %v1081, %v1088
        %vm1134 = vcmp.eq.s32.totalorder %v1082, %v1088
        %vm1135 = vcmp.eq.s32.totalorder %v1081, %v1091
        %vm1136 = vcmp.eq.s32.totalorder %v1082, %v1091
        %vm1137 = vcmp.eq.s32.totalorder %v1081, %v1094
        %vm1138 = vcmp.eq.s32.totalorder %v1082, %v1094
        %vm1139 = vcmp.eq.s32.totalorder %v1081, %v1097
        %vm1140 = vcmp.eq.s32.totalorder %v1082, %v1097
        %vm1141 = vcmp.eq.s32.totalorder %v1081, %v1100
        %vm1142 = vcmp.eq.s32.totalorder %v1082, %v1100
        %vm1143 = vcmp.eq.s32.totalorder %v1081, %v1103
        %vm1144 = vcmp.eq.s32.totalorder %v1082, %v1103
        %vm1145 = vcmp.eq.s32.totalorder %v1081, %v1106
        %vm1146 = vcmp.eq.s32.totalorder %v1082, %v1106
        %vm1147 = vcmp.eq.s32.totalorder %v1081, %v1109
        %vm1148 = vcmp.eq.s32.totalorder %v1082, %v1109
        %vm1149 = vcmp.eq.s32.totalorder %v1081, %v1112
        %vm1150 = vcmp.eq.s32.totalorder %v1082, %v1112
        %vm1151 = vcmp.eq.s32.totalorder %v1081, %v1115
        %vm1152 = vcmp.eq.s32.totalorder %v1082, %v1115
        %vm1153 = vcmp.eq.s32.totalorder %v1081, %v1118
        %vm1154 = vcmp.eq.s32.totalorder %v1082, %v1118
        %vm1155 = vcmp.eq.s32.totalorder %v1081, %v1121
        %vm1156 = vcmp.eq.s32.totalorder %v1082, %v1121
        %vm1157 = vcmp.eq.s32.totalorder %v1081, %v1124
        %vm1158 = vcmp.eq.s32.totalorder %v1082, %v1124
        %vm1159 = vcmp.eq.s32.totalorder %v1081, %v1127
        %vm1160 = vcmp.eq.s32.totalorder %v1082, %v1127
        %vm1161 = vcmp.eq.s32.totalorder %v1081, %v1130
        %vm1162 = vcmp.eq.s32.totalorder %v1082, %v1130
        %v1163 = vadd.s32 %v1064, 128
        %v1164 = vadd.s32 %v1065, 128
        %v1165 = vadd.s32 %v1066, 128
        %v1166 = vadd.s32 %v1067, 128
        %v1167 = vadd.s32 %v1068, 128
        %v1168 = vadd.s32 %v1069, 128
        %v1169 = vadd.s32 %v1070, 128
        %v1170 = vadd.s32 %v1071, 128
        %v1171 = vadd.s32 %v1072, 128
        %v1172 = vadd.s32 %v1073, 128
        %v1173 = vadd.s32 %v1074, 128
        %v1174 = vadd.s32 %v1075, 128
        %v1175 = vadd.s32 %v1076, 128
        %v1176 = vadd.s32 %v1077, 128
        %v1177 = vadd.s32 %v1078, 128
        %v1178 = vadd.s32 %v1079, 128
        %1179 = vset.pattern.permute.xlu0 1
        %1180 = vperm.xlu0 %1179, %v1163
        %v1181 = vpop.permute.xlu0 %1180
        %1182 = vset.pattern.permute.xlu0 1
        %1183 = vperm.xlu0 %1182, %v1164
        %v1184 = vpop.permute.xlu0 %1183
        %1185 = vset.pattern.permute.xlu0 1
        %1186 = vperm.xlu0 %1185, %v1165
        %v1187 = vpop.permute.xlu0 %1186
        %1188 = vset.pattern.permute.xlu0 1
        %1189 = vperm.xlu0 %1188, %v1166
        %v1190 = vpop.permute.xlu0 %1189
        %1191 = vset.pattern.permute.xlu0 1
        %1192 = vperm.xlu0 %1191, %v1167
        %v1193 = vpop.permute.xlu0 %1192
        %1194 = vset.pattern.permute.xlu0 1
        %1195 = vperm.xlu0 %1194, %v1168
        %v1196 = vpop.permute.xlu0 %1195
        %1197 = vset.pattern.permute.xlu0 1
        %1198 = vperm.xlu0 %1197, %v1169
        %v1199 = vpop.permute.xlu0 %1198
        %1200 = vset.pattern.permute.xlu0 1
        %1201 = vperm.xlu0 %1200, %v1170
        %v1202 = vpop.permute.xlu0 %1201
        %1203 = vset.pattern.permute.xlu0 1
        %1204 = vperm.xlu0 %1203, %v1171
        %v1205 = vpop.permute.xlu0 %1204
        %1206 = vset.pattern.permute.xlu0 1
        %1207 = vperm.xlu0 %1206, %v1172
        %v1208 = vpop.permute.xlu0 %1207
        %1209 = vset.pattern.permute.xlu0 1
        %1210 = vperm.xlu0 %1209, %v1173
        %v1211 = vpop.permute.xlu0 %1210
        %1212 = vset.pattern.permute.xlu0 1
        %1213 = vperm.xlu0 %1212, %v1174
        %v1214 = vpop.permute.xlu0 %1213
        %1215 = vset.pattern.permute.xlu0 1
        %1216 = vperm.xlu0 %1215, %v1175
        %v1217 = vpop.permute.xlu0 %1216
        %1218 = vset.pattern.permute.xlu0 1
        %1219 = vperm.xlu0 %1218, %v1176
        %v1220 = vpop.permute.xlu0 %1219
        %1221 = vset.pattern.permute.xlu0 1
        %1222 = vperm.xlu0 %1221, %v1177
        %v1223 = vpop.permute.xlu0 %1222
        %1224 = vset.pattern.permute.xlu0 1
        %1225 = vperm.xlu0 %1224, %v1178
        %v1226 = vpop.permute.xlu0 %1225
        %vm1227 = vcmp.eq.s32.totalorder %v1081, %v1181
        %vm1228 = vcmp.eq.s32.totalorder %v1082, %v1181
        %vm1229 = vcmp.eq.s32.totalorder %v1081, %v1184
        %vm1230 = vcmp.eq.s32.totalorder %v1082, %v1184
        %vm1231 = vcmp.eq.s32.totalorder %v1081, %v1187
        %vm1232 = vcmp.eq.s32.totalorder %v1082, %v1187
        %vm1233 = vcmp.eq.s32.totalorder %v1081, %v1190
        %vm1234 = vcmp.eq.s32.totalorder %v1082, %v1190
        %vm1235 = vcmp.eq.s32.totalorder %v1081, %v1193
        %vm1236 = vcmp.eq.s32.totalorder %v1082, %v1193
        %vm1237 = vcmp.eq.s32.totalorder %v1081, %v1196
        %vm1238 = vcmp.eq.s32.totalorder %v1082, %v1196
        %vm1239 = vcmp.eq.s32.totalorder %v1081, %v1199
        %vm1240 = vcmp.eq.s32.totalorder %v1082, %v1199
        %vm1241 = vcmp.eq.s32.totalorder %v1081, %v1202
        %vm1242 = vcmp.eq.s32.totalorder %v1082, %v1202
        %vm1243 = vcmp.eq.s32.totalorder %v1081, %v1205
        %vm1244 = vcmp.eq.s32.totalorder %v1082, %v1205
        %vm1245 = vcmp.eq.s32.totalorder %v1081, %v1208
        %vm1246 = vcmp.eq.s32.totalorder %v1082, %v1208
        %vm1247 = vcmp.eq.s32.totalorder %v1081, %v1211
        %vm1248 = vcmp.eq.s32.totalorder %v1082, %v1211
        %vm1249 = vcmp.eq.s32.totalorder %v1081, %v1214
        %vm1250 = vcmp.eq.s32.totalorder %v1082, %v1214
        %vm1251 = vcmp.eq.s32.totalorder %v1081, %v1217
        %vm1252 = vcmp.eq.s32.totalorder %v1082, %v1217
        %vm1253 = vcmp.eq.s32.totalorder %v1081, %v1220
        %vm1254 = vcmp.eq.s32.totalorder %v1082, %v1220
        %vm1255 = vcmp.eq.s32.totalorder %v1081, %v1223
        %vm1256 = vcmp.eq.s32.totalorder %v1082, %v1223
        %vm1257 = vcmp.eq.s32.totalorder %v1081, %v1226
        %vm1258 = vcmp.eq.s32.totalorder %v1082, %v1226
        %vm1259 = vmor %vm1131, %vm1227
        %vm1260 = vmor %vm1132, %vm1228
        %vm1261 = vmor %vm1133, %vm1229
        %vm1262 = vmor %vm1134, %vm1230
        %vm1263 = vmor %vm1135, %vm1231
        %vm1264 = vmor %vm1136, %vm1232
        %vm1265 = vmor %vm1137, %vm1233
        %vm1266 = vmor %vm1138, %vm1234
        %vm1267 = vmor %vm1139, %vm1235
        %vm1268 = vmor %vm1140, %vm1236
        %vm1269 = vmor %vm1141, %vm1237
        %vm1270 = vmor %vm1142, %vm1238
        %vm1271 = vmor %vm1143, %vm1239
        %vm1272 = vmor %vm1144, %vm1240
        %vm1273 = vmor %vm1145, %vm1241
        %vm1274 = vmor %vm1146, %vm1242
        %vm1275 = vmor %vm1147, %vm1243
        %vm1276 = vmor %vm1148, %vm1244
        %vm1277 = vmor %vm1149, %vm1245
        %vm1278 = vmor %vm1150, %vm1246
        %vm1279 = vmor %vm1151, %vm1247
        %vm1280 = vmor %vm1152, %vm1248
        %vm1281 = vmor %vm1153, %vm1249
        %vm1282 = vmor %vm1154, %vm1250
        %vm1283 = vmor %vm1155, %vm1251
        %vm1284 = vmor %vm1156, %vm1252
        %vm1285 = vmor %vm1157, %vm1253
        %vm1286 = vmor %vm1158, %vm1254
        %vm1287 = vmor %vm1159, %vm1255
        %vm1288 = vmor %vm1160, %vm1256
        %vm1289 = vmor %vm1161, %vm1257
        %vm1290 = vmor %vm1162, %vm1258
        %v1291 = vsel %vm1259, 1, 0
        %v1292 = vsel %vm1260, 1, 0
        %v1293 = vsel %vm1261, 1, 0
        %v1294 = vsel %vm1262, 1, 0
        %v1295 = vsel %vm1263, 1, 0
        %v1296 = vsel %vm1264, 1, 0
        %v1297 = vsel %vm1265, 1, 0
        %v1298 = vsel %vm1266, 1, 0
        %v1299 = vsel %vm1267, 1, 0
        %v1300 = vsel %vm1268, 1, 0
        %v1301 = vsel %vm1269, 1, 0
        %v1302 = vsel %vm1270, 1, 0
        %v1303 = vsel %vm1271, 1, 0
        %v1304 = vsel %vm1272, 1, 0
        %v1305 = vsel %vm1273, 1, 0
        %v1306 = vsel %vm1274, 1, 0
        %v1307 = vsel %vm1275, 1, 0
        %v1308 = vsel %vm1276, 1, 0
        %v1309 = vsel %vm1277, 1, 0
        %v1310 = vsel %vm1278, 1, 0
        %v1311 = vsel %vm1279, 1, 0
        %v1312 = vsel %vm1280, 1, 0
        %v1313 = vsel %vm1281, 1, 0
        %v1314 = vsel %vm1282, 1, 0
        %v1315 = vsel %vm1283, 1, 0
        %v1316 = vsel %vm1284, 1, 0
        %v1317 = vsel %vm1285, 1, 0
        %v1318 = vsel %vm1286, 1, 0
        %v1319 = vsel %vm1287, 1, 0
        %v1320 = vsel %vm1288, 1, 0
        %v1321 = vsel %vm1289, 1, 0
        %v1322 = vsel %vm1290, 1, 0
        %v1323 = vcvt.s32.f32 %v1291
        %v1324 = vcvt.s32.f32 %v1292
        %v1325 = vcvt.s32.f32 %v1293
        %v1326 = vcvt.s32.f32 %v1294
        %v1327 = vcvt.s32.f32 %v1295
        %v1328 = vcvt.s32.f32 %v1296
        %v1329 = vcvt.s32.f32 %v1297
        %v1330 = vcvt.s32.f32 %v1298
        %v1331 = vcvt.s32.f32 %v1299
        %v1332 = vcvt.s32.f32 %v1300
        %v1333 = vcvt.s32.f32 %v1301
        %v1334 = vcvt.s32.f32 %v1302
        %v1335 = vcvt.s32.f32 %v1303
        %v1336 = vcvt.s32.f32 %v1304
        %v1337 = vcvt.s32.f32 %v1305
        %v1338 = vcvt.s32.f32 %v1306
        %v1339 = vcvt.s32.f32 %v1307
        %v1340 = vcvt.s32.f32 %v1308
        %v1341 = vcvt.s32.f32 %v1309
        %v1342 = vcvt.s32.f32 %v1310
        %v1343 = vcvt.s32.f32 %v1311
        %v1344 = vcvt.s32.f32 %v1312
        %v1345 = vcvt.s32.f32 %v1313
        %v1346 = vcvt.s32.f32 %v1314
        %v1347 = vcvt.s32.f32 %v1315
        %v1348 = vcvt.s32.f32 %v1316
        %v1349 = vcvt.s32.f32 %v1317
        %v1350 = vcvt.s32.f32 %v1318
        %v1351 = vcvt.s32.f32 %v1319
        %v1352 = vcvt.s32.f32 %v1320
        %v1353 = vcvt.s32.f32 %v1321
        %v1354 = vcvt.s32.f32 %v1322
        %v1355 = vpack.c.bf16 %v1325, %v1323
        %v1356 = vpack.c.bf16 %v1326, %v1324
        %v1357 = vpack.c.bf16 %v1329, %v1327
        %v1358 = vpack.c.bf16 %v1330, %v1328
        %v1359 = vpack.c.bf16 %v1333, %v1331
        %v1360 = vpack.c.bf16 %v1334, %v1332
        %v1361 = vpack.c.bf16 %v1337, %v1335
        %v1362 = vpack.c.bf16 %v1338, %v1336
        %v1363 = vpack.c.bf16 %v1341, %v1339
        %v1364 = vpack.c.bf16 %v1342, %v1340
        %v1365 = vpack.c.bf16 %v1345, %v1343
        %v1366 = vpack.c.bf16 %v1346, %v1344
        %v1367 = vpack.c.bf16 %v1349, %v1347
        %v1368 = vpack.c.bf16 %v1350, %v1348
        %v1369 = vpack.c.bf16 %v1353, %v1351
        %v1370 = vpack.c.bf16 %v1354, %v1352
        %v1371 = vld [vmem:[%s623] sm:$0xf]
        %v1372 = vld [vmem:[%s623 + $0x4] sm:$0xf]
        %v1373 = vld [vmem:[%s623 + $0x8] sm:$0xf]
        %v1374 = vld [vmem:[%s623 + $0xc] sm:$0xf]
        %v1375 = vld [vmem:[%s623 + $0x10] sm:$0xf]
        %v1376 = vld [vmem:[%s623 + $0x14] sm:$0xf]
        %v1377 = vld [vmem:[%s623 + $0x18] sm:$0xf]
        %v1378 = vld [vmem:[%s623 + $0x1c] sm:$0xf]
        %v1379 = vld [vmem:[%s623 + $0x20] sm:$0xf]
        %v1380 = vld [vmem:[%s623 + $0x24] sm:$0xf]
        %v1381 = vld [vmem:[%s623 + $0x28] sm:$0xf]
        %v1382 = vld [vmem:[%s623 + $0x2c] sm:$0xf]
        %v1383 = vld [vmem:[%s623 + $0x30] sm:$0xf]
        %v1384 = vld [vmem:[%s623 + $0x34] sm:$0xf]
        %v1385 = vld [vmem:[%s623 + $0x38] sm:$0xf]
        %v1386 = vld [vmem:[%s623 + $0x3c] sm:$0xf]
        %v1387 = vld [vmem:[#allocation2] sm:$0xff]
        %v1388 = vld [vmem:[#allocation2 + $0x8] sm:$0xff]
        %v1389 = vld [vmem:[#allocation2 + $0x10] sm:$0xff]
        %v1390 = vld [vmem:[#allocation2 + $0x18] sm:$0xff]
        %v1391 = vld [vmem:[#allocation2 + $0x20] sm:$0xff]
        %v1392 = vld [vmem:[#allocation2 + $0x28] sm:$0xff]
        %v1393 = vld [vmem:[#allocation2 + $0x30] sm:$0xff]
        %v1394 = vld [vmem:[#allocation2 + $0x38] sm:$0xff]
        %v1395 = vld [vmem:[#allocation2 + $0x40] sm:$0xff]
        %v1396 = vld [vmem:[#allocation2 + $0x48] sm:$0xff]
        %v1397 = vld [vmem:[#allocation2 + $0x50] sm:$0xff]
        %v1398 = vld [vmem:[#allocation2 + $0x58] sm:$0xff]
        %v1399 = vld [vmem:[#allocation2 + $0x60] sm:$0xff]
        %v1400 = vld [vmem:[#allocation2 + $0x68] sm:$0xff]
        %v1401 = vld [vmem:[#allocation2 + $0x70] sm:$0xff]
        %v1402 = vld [vmem:[#allocation2 + $0x78] sm:$0xff]
        %v1403 = vld [vmem:[#allocation10] sm:$0xf]
        %v1404 = vld [vmem:[#allocation10 + $0x4] sm:$0xf]
        %v1405 = vld [vmem:[#allocation10 + $0x8] sm:$0xf]
        %v1406 = vld [vmem:[#allocation10 + $0xc] sm:$0xf]
        %v1407 = vld [vmem:[#allocation10 + $0x10] sm:$0xf]
        %v1408 = vld [vmem:[#allocation10 + $0x14] sm:$0xf]
        %v1409 = vld [vmem:[#allocation10 + $0x18] sm:$0xf]
        %v1410 = vld [vmem:[#allocation10 + $0x1c] sm:$0xf]
        %v1411 = vld [vmem:[#allocation10 + $0x20] sm:$0xf]
        %v1412 = vld [vmem:[#allocation10 + $0x24] sm:$0xf]
        %v1413 = vld [vmem:[#allocation10 + $0x28] sm:$0xf]
        %v1414 = vld [vmem:[#allocation10 + $0x2c] sm:$0xf]
        %v1415 = vld [vmem:[#allocation10 + $0x30] sm:$0xf]
        %v1416 = vld [vmem:[#allocation10 + $0x34] sm:$0xf]
        %v1417 = vld [vmem:[#allocation10 + $0x38] sm:$0xf]
        %v1418 = vld [vmem:[#allocation10 + $0x3c] sm:$0xf]
        %v1435 = vunpack.c.l.b16 %v1371
        %v1436 = vunpack.c.l.b16 %v1372
        %v1437 = vunpack.c.l.b16 %v1373
        %v1438 = vunpack.c.l.b16 %v1374
        %v1439 = vunpack.c.l.b16 %v1375
        %v1440 = vunpack.c.l.b16 %v1376
        %v1441 = vunpack.c.l.b16 %v1377
        %v1442 = vunpack.c.l.b16 %v1378
        %v1443 = vunpack.c.l.b16 %v1379
        %v1444 = vunpack.c.l.b16 %v1380
        %v1445 = vunpack.c.l.b16 %v1381
        %v1446 = vunpack.c.l.b16 %v1382
        %v1447 = vunpack.c.l.b16 %v1383
        %v1448 = vunpack.c.l.b16 %v1384
        %v1449 = vunpack.c.l.b16 %v1385
        %v1450 = vunpack.c.l.b16 %v1386
        %v1451 = vpack.c.b16 %v1436, %v1435
        %v1452 = vpack.c.b16 %v1438, %v1437
        %v1453 = vpack.c.b16 %v1440, %v1439
        %v1454 = vpack.c.b16 %v1442, %v1441
        %v1455 = vpack.c.b16 %v1444, %v1443
        %v1456 = vpack.c.b16 %v1446, %v1445
        %v1457 = vpack.c.b16 %v1448, %v1447
        %v1458 = vpack.c.b16 %v1450, %v1449
        %v1483 = vunpack.c.l.b16 %v1403
        %v1484 = vunpack.c.l.b16 %v1404
        %v1485 = vunpack.c.l.b16 %v1405
        %v1486 = vunpack.c.l.b16 %v1406
        %v1487 = vunpack.c.l.b16 %v1407
        %v1488 = vunpack.c.l.b16 %v1408
        %v1489 = vunpack.c.l.b16 %v1409
        %v1490 = vunpack.c.l.b16 %v1410
        %v1491 = vunpack.c.l.b16 %v1411
        %v1492 = vunpack.c.l.b16 %v1412
        %v1493 = vunpack.c.l.b16 %v1413
        %v1494 = vunpack.c.l.b16 %v1414
        %v1495 = vunpack.c.l.b16 %v1415
        %v1496 = vunpack.c.l.b16 %v1416
        %v1497 = vunpack.c.l.b16 %v1417
        %v1498 = vunpack.c.l.b16 %v1418
        %v1499 = vpack.c.b16 %v1484, %v1483
        %v1500 = vpack.c.b16 %v1486, %v1485
        %v1501 = vpack.c.b16 %v1488, %v1487
        %v1502 = vpack.c.b16 %v1490, %v1489
        %v1503 = vpack.c.b16 %v1492, %v1491
        %v1504 = vpack.c.b16 %v1494, %v1493
        %v1505 = vpack.c.b16 %v1496, %v1495
        %v1506 = vpack.c.b16 %v1498, %v1497
        %1515 = vmatprep.subr.bf16.mxu0 0
        %1516 = vmatpush1.bf16.msra.mxu0 %v1499
        %1517 = vmatprep.subr.bf16.mxu0 0
        %1518 = vmatpush1.bf16.msra.mxu0 %v1500
        %1519 = vmatprep.subr.bf16.mxu0 0
        %1520 = vmatpush1.bf16.msra.mxu0 %v1501
        %1521 = vmatprep.subr.bf16.mxu0 0
        %1522 = vmatpush1.bf16.msra.mxu0 %v1502
        %1523 = vmatprep.subr.bf16.mxu0 0
        %1524 = vmatpush1.bf16.msra.mxu0 %v1503
        %1525 = vmatprep.subr.bf16.mxu0 0
        %1526 = vmatpush1.bf16.msra.mxu0 %v1504
        %1527 = vmatprep.subr.bf16.mxu0 0
        %1528 = vmatpush1.bf16.msra.mxu0 %v1505
        %1529 = vmatprep.subr.bf16.mxu0 0
        %1530 = vmatpush1.bf16.msra.mxu0 %v1506
        %1531 = vmatprep.subr.bf16.mxu0 0
        %1532 = vmatpush1.bf16.msra.mxu0 0
        %1533 = vmatprep.subr.bf16.mxu0 0
        %1534 = vmatpush1.bf16.msra.mxu0 0
        %1535 = vmatprep.subr.bf16.mxu0 0
        %1536 = vmatpush1.bf16.msra.mxu0 0
        %1537 = vmatprep.subr.bf16.mxu0 0
        %1538 = vmatpush1.bf16.msra.mxu0 0
        %1539 = vmatprep.subr.bf16.mxu0 0
        %1540 = vmatpush1.bf16.msra.mxu0 0
        %1541 = vmatprep.subr.bf16.mxu0 0
        %1542 = vmatpush1.bf16.msra.mxu0 0
        %1543 = vmatprep.subr.bf16.mxu0 0
        %1544 = vmatpush1.bf16.msra.mxu0 0
        %1545 = vmatprep.subr.bf16.mxu0 0
        %1546 = vmatpush1.bf16.msra.mxu0 0
        %1547 = vmatprep.mubr.bf16.mxu0 0
        %1548 = vmatmul.mubr.bf16.gmra.mrb[0].mxu0 %v1451
        %v1549 = vpop.f32.mrb[0].mxu0
        %v1550 = vadd.f32 0.0, %v1549
        %v1551 = vpop.f32.mrb[0].mxu0
        %v1552 = vpop.f32.mrb[0].mxu0
        %v1553 = vadd.f32 0.0, %v1552
        %v1554 = vpop.f32.mrb[0].mxu0
        %1555 = vmatprep.mubr.bf16.mxu0 0
        %1556 = vmatmul.mubr.bf16.gmra.mrb[0].mxu0 %v1452
        %v1557 = vpop.f32.mrb[0].mxu0
        %v1558 = vadd.f32 0.0, %v1557
        %v1559 = vpop.f32.mrb[0].mxu0
        %v1560 = vpop.f32.mrb[0].mxu0
        %v1561 = vadd.f32 0.0, %v1560
        %v1562 = vpop.f32.mrb[0].mxu0
        %1563 = vmatprep.mubr.bf16.mxu0 0
        %1564 = vmatmul.mubr.bf16.gmra.mrb[0].mxu0 %v1453
        %v1565 = vpop.f32.mrb[0].mxu0
        %v1566 = vadd.f32 0.0, %v1565
        %v1567 = vpop.f32.mrb[0].mxu0
        %v1568 = vpop.f32.mrb[0].mxu0
        %v1569 = vadd.f32 0.0, %v1568
        %v1570 = vpop.f32.mrb[0].mxu0
        %1571 = vmatprep.mubr.bf16.mxu0 0
        %1572 = vmatmul.mubr.bf16.gmra.mrb[0].mxu0 %v1454
        %v1573 = vpop.f32.mrb[0].mxu0
        %v1574 = vadd.f32 0.0, %v1573
        %v1575 = vpop.f32.mrb[0].mxu0
        %v1576 = vpop.f32.mrb[0].mxu0
        %v1577 = vadd.f32 0.0, %v1576
        %v1578 = vpop.f32.mrb[0].mxu0
        %1579 = vmatprep.mubr.bf16.mxu0 0
        %1580 = vmatmul.mubr.bf16.gmra.mrb[0].mxu0 %v1455
        %v1581 = vpop.f32.mrb[0].mxu0
        %v1582 = vadd.f32 0.0, %v1581
        %v1583 = vpop.f32.mrb[0].mxu0
        %v1584 = vpop.f32.mrb[0].mxu0
        %v1585 = vadd.f32 0.0, %v1584
        %v1586 = vpop.f32.mrb[0].mxu0
        %1587 = vmatprep.mubr.bf16.mxu0 0
        %1588 = vmatmul.mubr.bf16.gmra.mrb[0].mxu0 %v1456
        %v1589 = vpop.f32.mrb[0].mxu0
        %v1590 = vadd.f32 0.0, %v1589
        %v1591 = vpop.f32.mrb[0].mxu0
        %v1592 = vpop.f32.mrb[0].mxu0
        %v1593 = vadd.f32 0.0, %v1592
        %v1594 = vpop.f32.mrb[0].mxu0
        %1595 = vmatprep.mubr.bf16.mxu0 0
        %1596 = vmatmul.mubr.bf16.gmra.mrb[0].mxu0 %v1457
        %v1597 = vpop.f32.mrb[0].mxu0
        %v1598 = vadd.f32 0.0, %v1597
        %v1599 = vpop.f32.mrb[0].mxu0
        %v1600 = vpop.f32.mrb[0].mxu0
        %v1601 = vadd.f32 0.0, %v1600
        %v1602 = vpop.f32.mrb[0].mxu0
        %1603 = vmatprep.mubr.bf16.mxu0 0
        %1604 = vmatmul.mubr.bf16.gmra.mrb[0].mxu0 %v1458
        %v1605 = vpop.f32.mrb[0].mxu0
        %v1606 = vadd.f32 0.0, %v1605
        %v1607 = vpop.f32.mrb[0].mxu0
        %v1608 = vpop.f32.mrb[0].mxu0
        %v1609 = vadd.f32 0.0, %v1608
        %v1610 = vpop.f32.mrb[0].mxu0
        %1611 = vdwg.mxu0
        %1612 = vmatprep.subr.bf16.mxu0 0
        %1613 = vmatpush1.bf16.msra.mxu0 %v1387
        %1614 = vmatprep.subr.bf16.mxu0 0
        %1615 = vmatpush1.bf16.msra.mxu0 %v1388
        %1616 = vmatprep.subr.bf16.mxu0 0
        %1617 = vmatpush1.bf16.msra.mxu0 %v1389
        %1618 = vmatprep.subr.bf16.mxu0 0
        %1619 = vmatpush1.bf16.msra.mxu0 %v1390
        %1620 = vmatprep.subr.bf16.mxu0 0
        %1621 = vmatpush1.bf16.msra.mxu0 %v1391
        %1622 = vmatprep.subr.bf16.mxu0 0
        %1623 = vmatpush1.bf16.msra.mxu0 %v1392
        %1624 = vmatprep.subr.bf16.mxu0 0
        %1625 = vmatpush1.bf16.msra.mxu0 %v1393
        %1626 = vmatprep.subr.bf16.mxu0 0
        %1627 = vmatpush1.bf16.msra.mxu0 %v1394
        %1628 = vmatprep.subr.bf16.mxu0 0
        %1629 = vmatpush1.bf16.msra.mxu0 %v1395
        %1630 = vmatprep.subr.bf16.mxu0 0
        %1631 = vmatpush1.bf16.msra.mxu0 %v1396
        %1632 = vmatprep.subr.bf16.mxu0 0
        %1633 = vmatpush1.bf16.msra.mxu0 %v1397
        %1634 = vmatprep.subr.bf16.mxu0 0
        %1635 = vmatpush1.bf16.msra.mxu0 %v1398
        %1636 = vmatprep.subr.bf16.mxu0 0
        %1637 = vmatpush1.bf16.msra.mxu0 %v1399
        %1638 = vmatprep.subr.bf16.mxu0 0
        %1639 = vmatpush1.bf16.msra.mxu0 %v1400
        %1640 = vmatprep.subr.bf16.mxu0 0
        %1641 = vmatpush1.bf16.msra.mxu0 %v1401
        %1642 = vmatprep.subr.bf16.mxu0 0
        %1643 = vmatpush1.bf16.msra.mxu0 %v1402
        %1644 = vmatprep.mubr.bf16.mxu0 %v1356
        %1645 = vmatmul.mubr.bf16.gmra.mrb[0].mxu0 %v1355
        %v1646 = vpop.f32.mrb[0].mxu0
        %v1647 = vadd.f32 %v1550, %v1646
        %v1648 = vpop.f32.mrb[0].mxu0
        %v1649 = vpop.f32.mrb[0].mxu0
        %v1650 = vadd.f32 %v1553, %v1649
        %v1651 = vpop.f32.mrb[0].mxu0
        %1652 = vmatprep.mubr.bf16.mxu0 %v1358
        %1653 = vmatmul.mubr.bf16.gmra.mrb[0].mxu0 %v1357
        %v1654 = vpop.f32.mrb[0].mxu0
        %v1655 = vadd.f32 %v1558, %v1654
        %v1656 = vpop.f32.mrb[0].mxu0
        %v1657 = vpop.f32.mrb[0].mxu0
        %v1658 = vadd.f32 %v1561, %v1657
        %v1659 = vpop.f32.mrb[0].mxu0
        %1660 = vmatprep.mubr.bf16.mxu0 %v1360
        %1661 = vmatmul.mubr.bf16.gmra.mrb[0].mxu0 %v1359
        %v1662 = vpop.f32.mrb[0].mxu0
        %v1663 = vadd.f32 %v1566, %v1662
        %v1664 = vpop.f32.mrb[0].mxu0
        %v1665 = vpop.f32.mrb[0].mxu0
        %v1666 = vadd.f32 %v1569, %v1665
        %v1667 = vpop.f32.mrb[0].mxu0
        %1668 = vmatprep.mubr.bf16.mxu0 %v1362
        %1669 = vmatmul.mubr.bf16.gmra.mrb[0].mxu0 %v1361
        %v1670 = vpop.f32.mrb[0].mxu0
        %v1671 = vadd.f32 %v1574, %v1670
        %v1672 = vpop.f32.mrb[0].mxu0
        %v1673 = vpop.f32.mrb[0].mxu0
        %v1674 = vadd.f32 %v1577, %v1673
        %v1675 = vpop.f32.mrb[0].mxu0
        %1676 = vmatprep.mubr.bf16.mxu0 %v1364
        %1677 = vmatmul.mubr.bf16.gmra.mrb[0].mxu0 %v1363
        %v1678 = vpop.f32.mrb[0].mxu0
        %v1679 = vadd.f32 %v1582, %v1678
        %v1680 = vpop.f32.mrb[0].mxu0
        %v1681 = vpop.f32.mrb[0].mxu0
        %v1682 = vadd.f32 %v1585, %v1681
        %v1683 = vpop.f32.mrb[0].mxu0
        %1684 = vmatprep.mubr.bf16.mxu0 %v1366
        %1685 = vmatmul.mubr.bf16.gmra.mrb[0].mxu0 %v1365
        %v1686 = vpop.f32.mrb[0].mxu0
        %v1687 = vadd.f32 %v1590, %v1686
        %v1688 = vpop.f32.mrb[0].mxu0
        %v1689 = vpop.f32.mrb[0].mxu0
        %v1690 = vadd.f32 %v1593, %v1689
        %v1691 = vpop.f32.mrb[0].mxu0
        %1692 = vmatprep.mubr.bf16.mxu0 %v1368
        %1693 = vmatmul.mubr.bf16.gmra.mrb[0].mxu0 %v1367
        %v1694 = vpop.f32.mrb[0].mxu0
        %v1695 = vadd.f32 %v1598, %v1694
        %v1696 = vpop.f32.mrb[0].mxu0
        %v1697 = vpop.f32.mrb[0].mxu0
        %v1698 = vadd.f32 %v1601, %v1697
        %v1699 = vpop.f32.mrb[0].mxu0
        %1700 = vmatprep.mubr.bf16.mxu0 %v1370
        %1701 = vmatmul.mubr.bf16.gmra.mrb[0].mxu0 %v1369
        %v1702 = vpop.f32.mrb[0].mxu0
        %v1703 = vadd.f32 %v1606, %v1702
        %v1704 = vpop.f32.mrb[0].mxu0
        %v1705 = vpop.f32.mrb[0].mxu0
        %v1706 = vadd.f32 %v1609, %v1705
        %v1707 = vpop.f32.mrb[0].mxu0
        %1708 = vdwg.mxu0
        %v1709 = vld [vmem:[%s6] sm:$0x1]
        %v1711 = vlaneseq
        %v1712 = vshrl.u32 %v1711, 7
        %v1713 = vsub.s32 0, %v1712
        %v1714 = vrot.slane %v1709, %v1713
        %v1716 = vadd.f32 %v1647, %v1714
        %v1717 = vadd.f32 %v1650, %v1714
        %v1718 = vadd.f32 %v1655, %v1714
        %v1719 = vadd.f32 %v1658, %v1714
        %v1720 = vadd.f32 %v1663, %v1714
        %v1721 = vadd.f32 %v1666, %v1714
        %v1722 = vadd.f32 %v1671, %v1714
        %v1723 = vadd.f32 %v1674, %v1714
        %v1724 = vadd.f32 %v1679, %v1714
        %v1725 = vadd.f32 %v1682, %v1714
        %v1726 = vadd.f32 %v1687, %v1714
        %v1727 = vadd.f32 %v1690, %v1714
        %v1728 = vadd.f32 %v1695, %v1714
        %v1729 = vadd.f32 %v1698, %v1714
        %v1730 = vadd.f32 %v1703, %v1714
        %v1731 = vadd.f32 %v1706, %v1714
        %v1732 = vmax.f32 %v1716, 0.0
        %v1733 = vmax.f32 %v1717, 0.0
        %v1734 = vmax.f32 %v1718, 0.0
        %v1735 = vmax.f32 %v1719, 0.0
        %v1736 = vmax.f32 %v1720, 0.0
        %v1737 = vmax.f32 %v1721, 0.0
        %v1738 = vmax.f32 %v1722, 0.0
        %v1739 = vmax.f32 %v1723, 0.0
        %v1740 = vmax.f32 %v1724, 0.0
        %v1741 = vmax.f32 %v1725, 0.0
        %v1742 = vmax.f32 %v1726, 0.0
        %v1743 = vmax.f32 %v1727, 0.0
        %v1744 = vmax.f32 %v1728, 0.0
        %v1745 = vmax.f32 %v1729, 0.0
        %v1746 = vmax.f32 %v1730, 0.0
        %v1747 = vmax.f32 %v1731, 0.0
        %v1748 = vpack.c.bf16 %v1733, %v1732
        %v1749 = vpack.c.bf16 %v1735, %v1734
        %v1750 = vpack.c.bf16 %v1737, %v1736
        %v1751 = vpack.c.bf16 %v1739, %v1738
        %v1752 = vpack.c.bf16 %v1741, %v1740
        %v1753 = vpack.c.bf16 %v1743, %v1742
        %v1754 = vpack.c.bf16 %v1745, %v1744
        %v1755 = vpack.c.bf16 %v1747, %v1746
        %v1756 = vld [vmem:[%s7] sm:$0xff]
        %v1757 = vld [vmem:[%s7 + $0x8] sm:$0xf]
        %v1758 = vld [vmem:[%s7 + $0xc] sm:$0xff]
        %v1759 = vld [vmem:[%s7 + $0x14] sm:$0xf]
        %v1760 = vld [vmem:[%s7 + $0x18] sm:$0xff]
        %v1761 = vld [vmem:[%s7 + $0x20] sm:$0xf]
        %v1762 = vld [vmem:[%s7 + $0x24] sm:$0xff]
        %v1763 = vld [vmem:[%s7 + $0x2c] sm:$0xf]
        %v1764 = vld [vmem:[%s7 + $0x30] sm:$0xff]
        %v1765 = vld [vmem:[%s7 + $0x38] sm:$0xf]
        %v1766 = vld [vmem:[%s7 + $0x3c] sm:$0xff]
        %v1767 = vld [vmem:[%s7 + $0x44] sm:$0xf]
        %v1768 = vld [vmem:[%s7 + $0x48] sm:$0xff]
        %v1769 = vld [vmem:[%s7 + $0x50] sm:$0xf]
        %v1770 = vld [vmem:[%s7 + $0x54] sm:$0xff]
        %v1771 = vld [vmem:[%s7 + $0x5c] sm:$0xf]
        %v1772 = vld [vmem:[%s7 + $0x60] sm:$0xff]
        %v1773 = vld [vmem:[%s7 + $0x68] sm:$0xf]
        %v1774 = vld [vmem:[%s7 + $0x6c] sm:$0xff]
        %v1775 = vld [vmem:[%s7 + $0x74] sm:$0xf]
        %v1776 = vld [vmem:[%s7 + $0x78] sm:$0xff]
        %v1777 = vld [vmem:[%s7 + $0x80] sm:$0xf]
        %v1778 = vld [vmem:[%s7 + $0x84] sm:$0xff]
        %v1779 = vld [vmem:[%s7 + $0x8c] sm:$0xf]
        %v1780 = vld [vmem:[%s7 + $0x90] sm:$0xff]
        %v1781 = vld [vmem:[%s7 + $0x98] sm:$0xf]
        %v1782 = vld [vmem:[%s7 + $0x9c] sm:$0xff]
        %v1783 = vld [vmem:[%s7 + $0xa4] sm:$0xf]
        %v1784 = vld [vmem:[%s7 + $0xa8] sm:$0xff]
        %v1785 = vld [vmem:[%s7 + $0xb0] sm:$0xf]
        %v1786 = vld [vmem:[%s7 + $0xb4] sm:$0xff]
        %v1787 = vld [vmem:[%s7 + $0xbc] sm:$0xf]
        %v1788 = vld [vmem:[%s8] sm:$0x7]
        %v1790 = vlaneseq
        %v1791 = vshrl.u32 %v1790, 7
        %v1792 = vsub.s32 0, %v1791
        %v1793 = vrot.slane %v1788, %v1792
        %v1794 = vlaneseq
        %v1795 = vshrl.u32 %v1794, 7
        %v1796 = vsub.s32 1, %v1795
        %v1797 = vrot.slane %v1788, %v1796
        %v1798 = vlaneseq
        %v1799 = vshrl.u32 %v1798, 7
        %v1800 = vsub.s32 2, %v1799
        %v1801 = vrot.slane %v1788, %v1800
        %v1837 = vunpack.c.l.b16 %v1756
        %v1838 = vunpack.c.h.b16 %v1756
        %v1839 = vunpack.c.l.b16 %v1757
        %v1840 = vunpack.c.l.b16 %v1758
        %v1841 = vunpack.c.h.b16 %v1758
        %v1842 = vunpack.c.l.b16 %v1759
        %v1843 = vunpack.c.l.b16 %v1760
        %v1844 = vunpack.c.h.b16 %v1760
        %v1845 = vunpack.c.l.b16 %v1761
        %v1846 = vunpack.c.l.b16 %v1762
        %v1847 = vunpack.c.h.b16 %v1762
        %v1848 = vunpack.c.l.b16 %v1763
        %v1849 = vunpack.c.l.b16 %v1764
        %v1850 = vunpack.c.h.b16 %v1764
        %v1851 = vunpack.c.l.b16 %v1765
        %v1852 = vunpack.c.l.b16 %v1766
        %v1853 = vunpack.c.h.b16 %v1766
        %v1854 = vunpack.c.l.b16 %v1767
        %v1855 = vunpack.c.l.b16 %v1768
        %v1856 = vunpack.c.h.b16 %v1768
        %v1857 = vunpack.c.l.b16 %v1769
        %v1858 = vunpack.c.l.b16 %v1770
        %v1859 = vunpack.c.h.b16 %v1770
        %v1860 = vunpack.c.l.b16 %v1771
        %v1861 = vunpack.c.l.b16 %v1772
        %v1862 = vunpack.c.h.b16 %v1772
        %v1863 = vunpack.c.l.b16 %v1773
        %v1864 = vunpack.c.l.b16 %v1774
        %v1865 = vunpack.c.h.b16 %v1774
        %v1866 = vunpack.c.l.b16 %v1775
        %v1867 = vunpack.c.l.b16 %v1776
        %v1868 = vunpack.c.h.b16 %v1776
        %v1869 = vunpack.c.l.b16 %v1777
        %v1870 = vunpack.c.l.b16 %v1778
        %v1871 = vunpack.c.h.b16 %v1778
        %v1872 = vunpack.c.l.b16 %v1779
        %v1873 = vunpack.c.l.b16 %v1780
        %v1874 = vunpack.c.h.b16 %v1780
        %v1875 = vunpack.c.l.b16 %v1781
        %v1876 = vunpack.c.l.b16 %v1782
        %v1877 = vunpack.c.h.b16 %v1782
        %v1878 = vunpack.c.l.b16 %v1783
        %v1879 = vunpack.c.l.b16 %v1784
        %v1880 = vunpack.c.h.b16 %v1784
        %v1881 = vunpack.c.l.b16 %v1785
        %v1882 = vunpack.c.l.b16 %v1786
        %v1883 = vunpack.c.h.b16 %v1786
        %v1884 = vunpack.c.l.b16 %v1787
        %v1885 = vpack.c.b16 %v1840, %v1837
        %v1886 = vpack.c.b16 %v1841, %v1838
        %v1887 = vpack.c.b16 %v1842, %v1839
        %v1888 = vpack.c.b16 %v1846, %v1843
        %v1889 = vpack.c.b16 %v1847, %v1844
        %v1890 = vpack.c.b16 %v1848, %v1845
        %v1891 = vpack.c.b16 %v1852, %v1849
        %v1892 = vpack.c.b16 %v1853, %v1850
        %v1893 = vpack.c.b16 %v1854, %v1851
        %v1894 = vpack.c.b16 %v1858, %v1855
        %v1895 = vpack.c.b16 %v1859, %v1856
        %v1896 = vpack.c.b16 %v1860, %v1857
        %v1897 = vpack.c.b16 %v1864, %v1861
        %v1898 = vpack.c.b16 %v1865, %v1862
        %v1899 = vpack.c.b16 %v1866, %v1863
        %v1900 = vpack.c.b16 %v1870, %v1867
        %v1901 = vpack.c.b16 %v1871, %v1868
        %v1902 = vpack.c.b16 %v1872, %v1869
        %v1903 = vpack.c.b16 %v1876, %v1873
        %v1904 = vpack.c.b16 %v1877, %v1874
        %v1905 = vpack.c.b16 %v1878, %v1875
        %v1906 = vpack.c.b16 %v1882, %v1879
        %v1907 = vpack.c.b16 %v1883, %v1880
        %v1908 = vpack.c.b16 %v1884, %v1881
        %1933 = vmatprep.subr.bf16.mxu0 %v1886
        %1934 = vmatpush1.bf16.msra.mxu0 %v1885
        %1935 = vmatprep.subr.bf16.mxu0 %v1889
        %1936 = vmatpush1.bf16.msra.mxu0 %v1888
        %1937 = vmatprep.subr.bf16.mxu0 %v1892
        %1938 = vmatpush1.bf16.msra.mxu0 %v1891
        %1939 = vmatprep.subr.bf16.mxu0 %v1895
        %1940 = vmatpush1.bf16.msra.mxu0 %v1894
        %1941 = vmatprep.subr.bf16.mxu0 %v1898
        %1942 = vmatpush1.bf16.msra.mxu0 %v1897
        %1943 = vmatprep.subr.bf16.mxu0 %v1901
        %1944 = vmatpush1.bf16.msra.mxu0 %v1900
        %1945 = vmatprep.subr.bf16.mxu0 %v1904
        %1946 = vmatpush1.bf16.msra.mxu0 %v1903
        %1947 = vmatprep.subr.bf16.mxu0 %v1907
        %1948 = vmatpush1.bf16.msra.mxu0 %v1906
        %1949 = vmatprep.subr.bf16.mxu0 0
        %1950 = vmatpush1.bf16.msra.mxu0 0
        %1951 = vmatprep.subr.bf16.mxu0 0
        %1952 = vmatpush1.bf16.msra.mxu0 0
        %1953 = vmatprep.subr.bf16.mxu0 0
        %1954 = vmatpush1.bf16.msra.mxu0 0
        %1955 = vmatprep.subr.bf16.mxu0 0
        %1956 = vmatpush1.bf16.msra.mxu0 0
        %1957 = vmatprep.subr.bf16.mxu0 0
        %1958 = vmatpush1.bf16.msra.mxu0 0
        %1959 = vmatprep.subr.bf16.mxu0 0
        %1960 = vmatpush1.bf16.msra.mxu0 0
        %1961 = vmatprep.subr.bf16.mxu0 0
        %1962 = vmatpush1.bf16.msra.mxu0 0
        %1963 = vmatprep.subr.bf16.mxu0 0
        %1964 = vmatpush1.bf16.msra.mxu0 0
        %1965 = vmatprep.mubr.bf16.mxu0 0
        %1966 = vmatmul.mubr.bf16.gmra.mrb[0].mxu0 %v1748
        %v1967 = vpop.f32.mrb[0].mxu0
        %v1968 = vadd.f32 %v1793, %v1967
        %v1969 = vpop.f32.mrb[0].mxu0
        %v1970 = vadd.f32 %v1797, %v1969
        %v1971 = vpop.f32.mrb[0].mxu0
        %v1972 = vadd.f32 %v1793, %v1971
        %v1973 = vpop.f32.mrb[0].mxu0
        %v1974 = vadd.f32 %v1797, %v1973
        %1975 = vmatprep.mubr.bf16.mxu0 0
        %1976 = vmatmul.mubr.bf16.gmra.mrb[0].mxu0 %v1749
        %v1977 = vpop.f32.mrb[0].mxu0
        %v1978 = vadd.f32 %v1793, %v1977
        %v1979 = vpop.f32.mrb[0].mxu0
        %v1980 = vadd.f32 %v1797, %v1979
        %v1981 = vpop.f32.mrb[0].mxu0
        %v1982 = vadd.f32 %v1793, %v1981
        %v1983 = vpop.f32.mrb[0].mxu0
        %v1984 = vadd.f32 %v1797, %v1983
        %1985 = vmatprep.mubr.bf16.mxu0 0
        %1986 = vmatmul.mubr.bf16.gmra.mrb[0].mxu0 %v1750
        %v1987 = vpop.f32.mrb[0].mxu0
        %v1988 = vadd.f32 %v1793, %v1987
        %v1989 = vpop.f32.mrb[0].mxu0
        %v1990 = vadd.f32 %v1797, %v1989
        %v1991 = vpop.f32.mrb[0].mxu0
        %v1992 = vadd.f32 %v1793, %v1991
        %v1993 = vpop.f32.mrb[0].mxu0
        %v1994 = vadd.f32 %v1797, %v1993
        %1995 = vmatprep.mubr.bf16.mxu0 0
        %1996 = vmatmul.mubr.bf16.gmra.mrb[0].mxu0 %v1751
        %v1997 = vpop.f32.mrb[0].mxu0
        %v1998 = vadd.f32 %v1793, %v1997
        %v1999 = vpop.f32.mrb[0].mxu0
        %v2000 = vadd.f32 %v1797, %v1999
        %v2001 = vpop.f32.mrb[0].mxu0
        %v2002 = vadd.f32 %v1793, %v2001
        %v2003 = vpop.f32.mrb[0].mxu0
        %v2004 = vadd.f32 %v1797, %v2003
        %2005 = vmatprep.mubr.bf16.mxu0 0
        %2006 = vmatmul.mubr.bf16.gmra.mrb[0].mxu0 %v1752
        %v2007 = vpop.f32.mrb[0].mxu0
        %v2008 = vadd.f32 %v1793, %v2007
        %v2009 = vpop.f32.mrb[0].mxu0
        %v2010 = vadd.f32 %v1797, %v2009
        %v2011 = vpop.f32.mrb[0].mxu0
        %v2012 = vadd.f32 %v1793, %v2011
        %v2013 = vpop.f32.mrb[0].mxu0
        %v2014 = vadd.f32 %v1797, %v2013
        %2015 = vmatprep.mubr.bf16.mxu0 0
        %2016 = vmatmul.mubr.bf16.gmra.mrb[0].mxu0 %v1753
        %v2017 = vpop.f32.mrb[0].mxu0
        %v2018 = vadd.f32 %v1793, %v2017
        %v2019 = vpop.f32.mrb[0].mxu0
        %v2020 = vadd.f32 %v1797, %v2019
        %v2021 = vpop.f32.mrb[0].mxu0
        %v2022 = vadd.f32 %v1793, %v2021
        %v2023 = vpop.f32.mrb[0].mxu0
        %v2024 = vadd.f32 %v1797, %v2023
        %2025 = vmatprep.mubr.bf16.mxu0 0
        %2026 = vmatmul.mubr.bf16.gmra.mrb[0].mxu0 %v1754
        %v2027 = vpop.f32.mrb[0].mxu0
        %v2028 = vadd.f32 %v1793, %v2027
        %v2029 = vpop.f32.mrb[0].mxu0
        %v2030 = vadd.f32 %v1797, %v2029
        %v2031 = vpop.f32.mrb[0].mxu0
        %v2032 = vadd.f32 %v1793, %v2031
        %v2033 = vpop.f32.mrb[0].mxu0
        %v2034 = vadd.f32 %v1797, %v2033
        %2035 = vmatprep.mubr.bf16.mxu0 0
        %2036 = vmatmul.mubr.bf16.gmra.mrb[0].mxu0 %v1755
        %v2037 = vpop.f32.mrb[0].mxu0
        %v2038 = vadd.f32 %v1793, %v2037
        %v2039 = vpop.f32.mrb[0].mxu0
        %v2040 = vadd.f32 %v1797, %v2039
        %v2041 = vpop.f32.mrb[0].mxu0
        %v2042 = vadd.f32 %v1793, %v2041
        %v2043 = vpop.f32.mrb[0].mxu0
        %v2044 = vadd.f32 %v1797, %v2043
        %2045 = vdwg.mxu0
        %2046 = vmatprep.subr.bf16.mxu0 0
        %2047 = vmatpush1.bf16.msra.mxu0 %v1887
        %2048 = vmatprep.subr.bf16.mxu0 0
        %2049 = vmatpush1.bf16.msra.mxu0 %v1890
        %2050 = vmatprep.subr.bf16.mxu0 0
        %2051 = vmatpush1.bf16.msra.mxu0 %v1893
        %2052 = vmatprep.subr.bf16.mxu0 0
        %2053 = vmatpush1.bf16.msra.mxu0 %v1896
        %2054 = vmatprep.subr.bf16.mxu0 0
        %2055 = vmatpush1.bf16.msra.mxu0 %v1899
        %2056 = vmatprep.subr.bf16.mxu0 0
        %2057 = vmatpush1.bf16.msra.mxu0 %v1902
        %2058 = vmatprep.subr.bf16.mxu0 0
        %2059 = vmatpush1.bf16.msra.mxu0 %v1905
        %2060 = vmatprep.subr.bf16.mxu0 0
        %2061 = vmatpush1.bf16.msra.mxu0 %v1908
        %2062 = vmatprep.subr.bf16.mxu0 0
        %2063 = vmatpush1.bf16.msra.mxu0 0
        %2064 = vmatprep.subr.bf16.mxu0 0
        %2065 = vmatpush1.bf16.msra.mxu0 0
        %2066 = vmatprep.subr.bf16.mxu0 0
        %2067 = vmatpush1.bf16.msra.mxu0 0
        %2068 = vmatprep.subr.bf16.mxu0 0
        %2069 = vmatpush1.bf16.msra.mxu0 0
        %2070 = vmatprep.subr.bf16.mxu0 0
        %2071 = vmatpush1.bf16.msra.mxu0 0
        %2072 = vmatprep.subr.bf16.mxu0 0
        %2073 = vmatpush1.bf16.msra.mxu0 0
        %2074 = vmatprep.subr.bf16.mxu0 0
        %2075 = vmatpush1.bf16.msra.mxu0 0
        %2076 = vmatprep.subr.bf16.mxu0 0
        %2077 = vmatpush1.bf16.msra.mxu0 0
        %2078 = vmatprep.mubr.bf16.mxu0 0
        %2079 = vmatmul.mubr.bf16.gmra.mrb[0].mxu0 %v1748
        %v2080 = vpop.f32.mrb[0].mxu0
        %v2081 = vadd.f32 %v1801, %v2080
        %v2082 = vpop.f32.mrb[0].mxu0
        %v2083 = vpop.f32.mrb[0].mxu0
        %v2084 = vadd.f32 %v1801, %v2083
        %v2085 = vpop.f32.mrb[0].mxu0
        %2086 = vmatprep.mubr.bf16.mxu0 0
        %2087 = vmatmul.mubr.bf16.gmra.mrb[0].mxu0 %v1749
        %v2088 = vpop.f32.mrb[0].mxu0
        %v2089 = vadd.f32 %v1801, %v2088
        %v2090 = vpop.f32.mrb[0].mxu0
        %v2091 = vpop.f32.mrb[0].mxu0
        %v2092 = vadd.f32 %v1801, %v2091
        %v2093 = vpop.f32.mrb[0].mxu0
        %2094 = vmatprep.mubr.bf16.mxu0 0
        %2095 = vmatmul.mubr.bf16.gmra.mrb[0].mxu0 %v1750
        %v2096 = vpop.f32.mrb[0].mxu0
        %v2097 = vadd.f32 %v1801, %v2096
        %v2098 = vpop.f32.mrb[0].mxu0
        %v2099 = vpop.f32.mrb[0].mxu0
        %v2100 = vadd.f32 %v1801, %v2099
        %v2101 = vpop.f32.mrb[0].mxu0
        %2102 = vmatprep.mubr.bf16.mxu0 0
        %2103 = vmatmul.mubr.bf16.gmra.mrb[0].mxu0 %v1751
        %v2104 = vpop.f32.mrb[0].mxu0
        %v2105 = vadd.f32 %v1801, %v2104
        %v2106 = vpop.f32.mrb[0].mxu0
        %v2107 = vpop.f32.mrb[0].mxu0
        %v2108 = vadd.f32 %v1801, %v2107
        %v2109 = vpop.f32.mrb[0].mxu0
        %2110 = vmatprep.mubr.bf16.mxu0 0
        %2111 = vmatmul.mubr.bf16.gmra.mrb[0].mxu0 %v1752
        %v2112 = vpop.f32.mrb[0].mxu0
        %v2113 = vadd.f32 %v1801, %v2112
        %v2114 = vpop.f32.mrb[0].mxu0
        %v2115 = vpop.f32.mrb[0].mxu0
        %v2116 = vadd.f32 %v1801, %v2115
        %v2117 = vpop.f32.mrb[0].mxu0
        %2118 = vmatprep.mubr.bf16.mxu0 0
        %2119 = vmatmul.mubr.bf16.gmra.mrb[0].mxu0 %v1753
        %v2120 = vpop.f32.mrb[0].mxu0
        %v2121 = vadd.f32 %v1801, %v2120
        %v2122 = vpop.f32.mrb[0].mxu0
        %v2123 = vpop.f32.mrb[0].mxu0
        %v2124 = vadd.f32 %v1801, %v2123
        %v2125 = vpop.f32.mrb[0].mxu0
        %2126 = vmatprep.mubr.bf16.mxu0 0
        %2127 = vmatmul.mubr.bf16.gmra.mrb[0].mxu0 %v1754
        %v2128 = vpop.f32.mrb[0].mxu0
        %v2129 = vadd.f32 %v1801, %v2128
        %v2130 = vpop.f32.mrb[0].mxu0
        %v2131 = vpop.f32.mrb[0].mxu0
        %v2132 = vadd.f32 %v1801, %v2131
        %v2133 = vpop.f32.mrb[0].mxu0
        %2134 = vmatprep.mubr.bf16.mxu0 0
        %2135 = vmatmul.mubr.bf16.gmra.mrb[0].mxu0 %v1755
        %v2136 = vpop.f32.mrb[0].mxu0
        %v2137 = vadd.f32 %v1801, %v2136
        %v2138 = vpop.f32.mrb[0].mxu0
        %v2139 = vpop.f32.mrb[0].mxu0
        %v2140 = vadd.f32 %v1801, %v2139
        %v2141 = vpop.f32.mrb[0].mxu0
        %2142 = vdwg.mxu0
        %v2143 = vmax.f32 %v1968, 0.0
        %v2144 = vmax.f32 %v1970, 0.0
        %v2145 = vmax.f32 %v2081, 0.0
        %v2146 = vmax.f32 %v1972, 0.0
        %v2147 = vmax.f32 %v1974, 0.0
        %v2148 = vmax.f32 %v2084, 0.0
        %v2149 = vmax.f32 %v1978, 0.0
        %v2150 = vmax.f32 %v1980, 0.0
        %v2151 = vmax.f32 %v2089, 0.0
        %v2152 = vmax.f32 %v1982, 0.0
        %v2153 = vmax.f32 %v1984, 0.0
        %v2154 = vmax.f32 %v2092, 0.0
        %v2155 = vmax.f32 %v1988, 0.0
        %v2156 = vmax.f32 %v1990, 0.0
        %v2157 = vmax.f32 %v2097, 0.0
        %v2158 = vmax.f32 %v1992, 0.0
        %v2159 = vmax.f32 %v1994, 0.0
        %v2160 = vmax.f32 %v2100, 0.0
        %v2161 = vmax.f32 %v1998, 0.0
        %v2162 = vmax.f32 %v2000, 0.0
        %v2163 = vmax.f32 %v2105, 0.0
        %v2164 = vmax.f32 %v2002, 0.0
        %v2165 = vmax.f32 %v2004, 0.0
        %v2166 = vmax.f32 %v2108, 0.0
        %v2167 = vmax.f32 %v2008, 0.0
        %v2168 = vmax.f32 %v2010, 0.0
        %v2169 = vmax.f32 %v2113, 0.0
        %v2170 = vmax.f32 %v2012, 0.0
        %v2171 = vmax.f32 %v2014, 0.0
        %v2172 = vmax.f32 %v2116, 0.0
        %v2173 = vmax.f32 %v2018, 0.0
        %v2174 = vmax.f32 %v2020, 0.0
        %v2175 = vmax.f32 %v2121, 0.0
        %v2176 = vmax.f32 %v2022, 0.0
        %v2177 = vmax.f32 %v2024, 0.0
        %v2178 = vmax.f32 %v2124, 0.0
        %v2179 = vmax.f32 %v2028, 0.0
        %v2180 = vmax.f32 %v2030, 0.0
        %v2181 = vmax.f32 %v2129, 0.0
        %v2182 = vmax.f32 %v2032, 0.0
        %v2183 = vmax.f32 %v2034, 0.0
        %v2184 = vmax.f32 %v2132, 0.0
        %v2185 = vmax.f32 %v2038, 0.0
        %v2186 = vmax.f32 %v2040, 0.0
        %v2187 = vmax.f32 %v2137, 0.0
        %v2188 = vmax.f32 %v2042, 0.0
        %v2189 = vmax.f32 %v2044, 0.0
        %v2190 = vmax.f32 %v2140, 0.0
        %v2191 = vld [vmem:[#allocation16] sm:$0xf]
        %v2192 = vld [vmem:[#allocation16 + $0x4] sm:$0xf]
        %v2193 = vld [vmem:[#allocation16 + $0x8] sm:$0xf]
        %v2194 = vld [vmem:[#allocation16 + $0xc] sm:$0xf]
        %v2195 = vld [vmem:[#allocation16 + $0x10] sm:$0xf]
        %v2196 = vld [vmem:[#allocation16 + $0x14] sm:$0xf]
        %v2197 = vld [vmem:[#allocation16 + $0x18] sm:$0xf]
        %v2198 = vld [vmem:[#allocation16 + $0x1c] sm:$0xf]
        %v2199 = vld [vmem:[#allocation16 + $0x20] sm:$0xf]
        %v2200 = vld [vmem:[#allocation16 + $0x24] sm:$0xf]
        %v2201 = vld [vmem:[#allocation16 + $0x28] sm:$0xf]
        %v2202 = vld [vmem:[#allocation16 + $0x2c] sm:$0xf]
        %v2203 = vld [vmem:[#allocation16 + $0x30] sm:$0xf]
        %v2204 = vld [vmem:[#allocation16 + $0x34] sm:$0xf]
        %v2205 = vld [vmem:[#allocation16 + $0x38] sm:$0xf]
        %v2206 = vld [vmem:[#allocation16 + $0x3c] sm:$0xf]
        %v2207 = vld [vmem:[%s16] sm:$0x1]
        %v2209 = vlaneseq
        %v2210 = vshrl.u32 %v2209, 7
        %v2211 = vsub.s32 0, %v2210
        %v2212 = vrot.slane %v2207, %v2211
        %v2230 = vunpack.c.l.b16 %v2191
        %v2231 = vunpack.c.l.b16 %v2192
        %v2232 = vunpack.c.l.b16 %v2193
        %v2233 = vunpack.c.l.b16 %v2194
        %v2234 = vunpack.c.l.b16 %v2195
        %v2235 = vunpack.c.l.b16 %v2196
        %v2236 = vunpack.c.l.b16 %v2197
        %v2237 = vunpack.c.l.b16 %v2198
        %v2238 = vunpack.c.l.b16 %v2199
        %v2239 = vunpack.c.l.b16 %v2200
        %v2240 = vunpack.c.l.b16 %v2201
        %v2241 = vunpack.c.l.b16 %v2202
        %v2242 = vunpack.c.l.b16 %v2203
        %v2243 = vunpack.c.l.b16 %v2204
        %v2244 = vunpack.c.l.b16 %v2205
        %v2245 = vunpack.c.l.b16 %v2206
        %v2246 = vpack.c.b16 %v2231, %v2230
        %v2247 = vpack.c.b16 %v2233, %v2232
        %v2248 = vpack.c.b16 %v2235, %v2234
        %v2249 = vpack.c.b16 %v2237, %v2236
        %v2250 = vpack.c.b16 %v2239, %v2238
        %v2251 = vpack.c.b16 %v2241, %v2240
        %v2252 = vpack.c.b16 %v2243, %v2242
        %v2253 = vpack.c.b16 %v2245, %v2244
        %2262 = vmatprep.subr.bf16.mxu0 0
        %2263 = vmatpush1.bf16.msra.mxu0 %v2246
        %2264 = vmatprep.subr.bf16.mxu0 0
        %2265 = vmatpush1.bf16.msra.mxu0 %v2247
        %2266 = vmatprep.subr.bf16.mxu0 0
        %2267 = vmatpush1.bf16.msra.mxu0 %v2248
        %2268 = vmatprep.subr.bf16.mxu0 0
        %2269 = vmatpush1.bf16.msra.mxu0 %v2249
        %2270 = vmatprep.subr.bf16.mxu0 0
        %2271 = vmatpush1.bf16.msra.mxu0 %v2250
        %2272 = vmatprep.subr.bf16.mxu0 0
        %2273 = vmatpush1.bf16.msra.mxu0 %v2251
        %2274 = vmatprep.subr.bf16.mxu0 0
        %2275 = vmatpush1.bf16.msra.mxu0 %v2252
        %2276 = vmatprep.subr.bf16.mxu0 0
        %2277 = vmatpush1.bf16.msra.mxu0 %v2253
        %2278 = vmatprep.subr.bf16.mxu0 0
        %2279 = vmatpush1.bf16.msra.mxu0 0
        %2280 = vmatprep.subr.bf16.mxu0 0
        %2281 = vmatpush1.bf16.msra.mxu0 0
        %2282 = vmatprep.subr.bf16.mxu0 0
        %2283 = vmatpush1.bf16.msra.mxu0 0
        %2284 = vmatprep.subr.bf16.mxu0 0
        %2285 = vmatpush1.bf16.msra.mxu0 0
        %2286 = vmatprep.subr.bf16.mxu0 0
        %2287 = vmatpush1.bf16.msra.mxu0 0
        %2288 = vmatprep.subr.bf16.mxu0 0
        %2289 = vmatpush1.bf16.msra.mxu0 0
        %2290 = vmatprep.subr.bf16.mxu0 0
        %2291 = vmatpush1.bf16.msra.mxu0 0
        %2292 = vmatprep.subr.bf16.mxu0 0
        %2293 = vmatpush1.bf16.msra.mxu0 0
        %2294 = vmatprep.mubr.bf16.mxu0 0
        %2295 = vmatmul.mubr.bf16.gmra.mrb[0].mxu0 %v1451
        %v2296 = vpop.f32.mrb[0].mxu0
        %v2297 = vadd.f32 %v2212, %v2296
        %v2298 = vpop.f32.mrb[0].mxu0
        %v2299 = vpop.f32.mrb[0].mxu0
        %v2300 = vadd.f32 %v2212, %v2299
        %v2301 = vpop.f32.mrb[0].mxu0
        %2302 = vmatprep.mubr.bf16.mxu0 0
        %2303 = vmatmul.mubr.bf16.gmra.mrb[0].mxu0 %v1452
        %v2304 = vpop.f32.mrb[0].mxu0
        %v2305 = vadd.f32 %v2212, %v2304
        %v2306 = vpop.f32.mrb[0].mxu0
        %v2307 = vpop.f32.mrb[0].mxu0
        %v2308 = vadd.f32 %v2212, %v2307
        %v2309 = vpop.f32.mrb[0].mxu0
        %2310 = vmatprep.mubr.bf16.mxu0 0
        %2311 = vmatmul.mubr.bf16.gmra.mrb[0].mxu0 %v1453
        %v2312 = vpop.f32.mrb[0].mxu0
        %v2313 = vadd.f32 %v2212, %v2312
        %v2314 = vpop.f32.mrb[0].mxu0
        %v2315 = vpop.f32.mrb[0].mxu0
        %v2316 = vadd.f32 %v2212, %v2315
        %v2317 = vpop.f32.mrb[0].mxu0
        %2318 = vmatprep.mubr.bf16.mxu0 0
        %2319 = vmatmul.mubr.bf16.gmra.mrb[0].mxu0 %v1454
        %v2320 = vpop.f32.mrb[0].mxu0
        %v2321 = vadd.f32 %v2212, %v2320
        %v2322 = vpop.f32.mrb[0].mxu0
        %v2323 = vpop.f32.mrb[0].mxu0
        %v2324 = vadd.f32 %v2212, %v2323
        %v2325 = vpop.f32.mrb[0].mxu0
        %2326 = vmatprep.mubr.bf16.mxu0 0
        %2327 = vmatmul.mubr.bf16.gmra.mrb[0].mxu0 %v1455
        %v2328 = vpop.f32.mrb[0].mxu0
        %v2329 = vadd.f32 %v2212, %v2328
        %v2330 = vpop.f32.mrb[0].mxu0
        %v2331 = vpop.f32.mrb[0].mxu0
        %v2332 = vadd.f32 %v2212, %v2331
        %v2333 = vpop.f32.mrb[0].mxu0
        %2334 = vmatprep.mubr.bf16.mxu0 0
        %2335 = vmatmul.mubr.bf16.gmra.mrb[0].mxu0 %v1456
        %v2336 = vpop.f32.mrb[0].mxu0
        %v2337 = vadd.f32 %v2212, %v2336
        %v2338 = vpop.f32.mrb[0].mxu0
        %v2339 = vpop.f32.mrb[0].mxu0
        %v2340 = vadd.f32 %v2212, %v2339
        %v2341 = vpop.f32.mrb[0].mxu0
        %2342 = vmatprep.mubr.bf16.mxu0 0
        %2343 = vmatmul.mubr.bf16.gmra.mrb[0].mxu0 %v1457
        %v2344 = vpop.f32.mrb[0].mxu0
        %v2345 = vadd.f32 %v2212, %v2344
        %v2346 = vpop.f32.mrb[0].mxu0
        %v2347 = vpop.f32.mrb[0].mxu0
        %v2348 = vadd.f32 %v2212, %v2347
        %v2349 = vpop.f32.mrb[0].mxu0
        %2350 = vmatprep.mubr.bf16.mxu0 0
        %2351 = vmatmul.mubr.bf16.gmra.mrb[0].mxu0 %v1458
        %v2352 = vpop.f32.mrb[0].mxu0
        %v2353 = vadd.f32 %v2212, %v2352
        %v2354 = vpop.f32.mrb[0].mxu0
        %v2355 = vpop.f32.mrb[0].mxu0
        %v2356 = vadd.f32 %v2212, %v2355
        %v2357 = vpop.f32.mrb[0].mxu0
        %2358 = vdwg.mxu0
        %v2359 = vadd.f32 %v2144, %v2297
        %v2360 = vadd.f32 %v2147, %v2300
        %v2361 = vadd.f32 %v2150, %v2305
        %v2362 = vadd.f32 %v2153, %v2308
        %v2363 = vadd.f32 %v2156, %v2313
        %v2364 = vadd.f32 %v2159, %v2316
        %v2365 = vadd.f32 %v2162, %v2321
        %v2366 = vadd.f32 %v2165, %v2324
        %v2367 = vadd.f32 %v2168, %v2329
        %v2368 = vadd.f32 %v2171, %v2332
        %v2369 = vadd.f32 %v2174, %v2337
        %v2370 = vadd.f32 %v2177, %v2340
        %v2371 = vadd.f32 %v2180, %v2345
        %v2372 = vadd.f32 %v2183, %v2348
        %v2373 = vadd.f32 %v2186, %v2353
        %v2374 = vadd.f32 %v2189, %v2356
        %2375 = vst [vmem:[%s706] sm:$0xff] %v2359
        %2376 = vst [vmem:[%s706 + $0x8] sm:$0xff] %v2360
        %2377 = vst [vmem:[%s706 + $0x10] sm:$0xff] %v2361
        %2378 = vst [vmem:[%s706 + $0x18] sm:$0xff] %v2362
        %2379 = vst [vmem:[%s706 + $0x20] sm:$0xff] %v2363
        %2380 = vst [vmem:[%s706 + $0x28] sm:$0xff] %v2364
        %2381 = vst [vmem:[%s706 + $0x30] sm:$0xff] %v2365
        %2382 = vst [vmem:[%s706 + $0x38] sm:$0xff] %v2366
        %2383 = vst [vmem:[%s706 + $0x40] sm:$0xff] %v2367
        %2384 = vst [vmem:[%s706 + $0x48] sm:$0xff] %v2368
        %2385 = vst [vmem:[%s706 + $0x50] sm:$0xff] %v2369
        %2386 = vst [vmem:[%s706 + $0x58] sm:$0xff] %v2370
        %2387 = vst [vmem:[%s706 + $0x60] sm:$0xff] %v2371
        %2388 = vst [vmem:[%s706 + $0x68] sm:$0xff] %v2372
        %2389 = vst [vmem:[%s706 + $0x70] sm:$0xff] %v2373
        %2390 = vst [vmem:[%s706 + $0x78] sm:$0xff] %v2374
        %v2391 = vld [vmem:[%s718] sm:$0x3]
        %v2392 = vlaneseq
        %v2393 = vshrl.u32 %v2392, 7
        %v2394 = vadd.s32 %v2393, 8
        %v2395 = vadd.s32 %v2393, 16
        %v2396 = vadd.s32 %v2393, 24
        %v2397 = vadd.s32 %v2393, 32
        %v2398 = vadd.s32 %v2393, 40
        %v2399 = vadd.s32 %v2393, 48
        %v2400 = vadd.s32 %v2393, 56
        %v2401 = vadd.s32 %v2393, 64
        %v2402 = vadd.s32 %v2393, 72
        %v2403 = vadd.s32 %v2393, 80
        %v2404 = vadd.s32 %v2393, 88
        %v2405 = vadd.s32 %v2393, 96
        %v2406 = vadd.s32 %v2393, 104
        %v2407 = vadd.s32 %v2393, 112
        %v2408 = vadd.s32 %v2393, 120
        %v2409 = vlaneseq
        %v2410 = vshrl.u32 %v2409, 7
        %v2411 = vsub.s32 0, %v2410
        %v2412 = vrot.slane %v2391, %v2411
        %vm2413 = vcmp.eq.s32.totalorder %v2393, %v2412
        %vm2414 = vcmp.eq.s32.totalorder %v2394, %v2412
        %vm2415 = vcmp.eq.s32.totalorder %v2395, %v2412
        %vm2416 = vcmp.eq.s32.totalorder %v2396, %v2412
        %vm2417 = vcmp.eq.s32.totalorder %v2397, %v2412
        %vm2418 = vcmp.eq.s32.totalorder %v2398, %v2412
        %vm2419 = vcmp.eq.s32.totalorder %v2399, %v2412
        %vm2420 = vcmp.eq.s32.totalorder %v2400, %v2412
        %vm2421 = vcmp.eq.s32.totalorder %v2401, %v2412
        %vm2422 = vcmp.eq.s32.totalorder %v2402, %v2412
        %vm2423 = vcmp.eq.s32.totalorder %v2403, %v2412
        %vm2424 = vcmp.eq.s32.totalorder %v2404, %v2412
        %vm2425 = vcmp.eq.s32.totalorder %v2405, %v2412
        %vm2426 = vcmp.eq.s32.totalorder %v2406, %v2412
        %vm2427 = vcmp.eq.s32.totalorder %v2407, %v2412
        %vm2428 = vcmp.eq.s32.totalorder %v2408, %v2412
        %v2429 = vlaneseq
        %v2430 = vshrl.u32 %v2429, 7
        %v2431 = vsub.s32 1, %v2430
        %v2432 = vrot.slane %v2391, %v2431
        %vm2433 = vcmp.eq.s32.totalorder %v2393, %v2432
        %vm2434 = vcmp.eq.s32.totalorder %v2394, %v2432
        %vm2435 = vcmp.eq.s32.totalorder %v2395, %v2432
        %vm2436 = vcmp.eq.s32.totalorder %v2396, %v2432
        %vm2437 = vcmp.eq.s32.totalorder %v2397, %v2432
        %vm2438 = vcmp.eq.s32.totalorder %v2398, %v2432
        %vm2439 = vcmp.eq.s32.totalorder %v2399, %v2432
        %vm2440 = vcmp.eq.s32.totalorder %v2400, %v2432
        %vm2441 = vcmp.eq.s32.totalorder %v2401, %v2432
        %vm2442 = vcmp.eq.s32.totalorder %v2402, %v2432
        %vm2443 = vcmp.eq.s32.totalorder %v2403, %v2432
        %vm2444 = vcmp.eq.s32.totalorder %v2404, %v2432
        %vm2445 = vcmp.eq.s32.totalorder %v2405, %v2432
        %vm2446 = vcmp.eq.s32.totalorder %v2406, %v2432
        %vm2447 = vcmp.eq.s32.totalorder %v2407, %v2432
        %vm2448 = vcmp.eq.s32.totalorder %v2408, %v2432
        %v2449 = vld [vmem:[#allocation4] sm:$0xff]
        %v2450 = vld [vmem:[#allocation4 + $0x8] sm:$0xff]
        %v2451 = vld [vmem:[#allocation4 + $0x10] sm:$0xff]
        %v2452 = vld [vmem:[#allocation4 + $0x18] sm:$0xff]
        %v2453 = vld [vmem:[#allocation4 + $0x20] sm:$0xff]
        %v2454 = vld [vmem:[#allocation4 + $0x28] sm:$0xff]
        %v2455 = vld [vmem:[#allocation4 + $0x30] sm:$0xff]
        %v2456 = vld [vmem:[#allocation4 + $0x38] sm:$0xff]
        %v2457 = vld [vmem:[#allocation4 + $0x40] sm:$0xff]
        %v2458 = vld [vmem:[#allocation4 + $0x48] sm:$0xff]
        %v2459 = vld [vmem:[#allocation4 + $0x50] sm:$0xff]
        %v2460 = vld [vmem:[#allocation4 + $0x58] sm:$0xff]
        %v2461 = vld [vmem:[#allocation4 + $0x60] sm:$0xff]
        %v2462 = vld [vmem:[#allocation4 + $0x68] sm:$0xff]
        %v2463 = vld [vmem:[#allocation4 + $0x70] sm:$0xff]
        %v2464 = vld [vmem:[#allocation4 + $0x78] sm:$0xff]
        %v2465 = vsel %vm2413, 1, 0
        %v2466 = vsel %vm2414, 1, 0
        %v2467 = vsel %vm2415, 1, 0
        %v2468 = vsel %vm2416, 1, 0
        %v2469 = vsel %vm2417, 1, 0
        %v2470 = vsel %vm2418, 1, 0
        %v2471 = vsel %vm2419, 1, 0
        %v2472 = vsel %vm2420, 1, 0
        %v2473 = vsel %vm2421, 1, 0
        %v2474 = vsel %vm2422, 1, 0
        %v2475 = vsel %vm2423, 1, 0
        %v2476 = vsel %vm2424, 1, 0
        %v2477 = vsel %vm2425, 1, 0
        %v2478 = vsel %vm2426, 1, 0
        %v2479 = vsel %vm2427, 1, 0
        %v2480 = vsel %vm2428, 1, 0
        %v2481 = vcvt.s32.f32 %v2465
        %v2482 = vcvt.s32.f32 %v2466
        %v2483 = vcvt.s32.f32 %v2467
        %v2484 = vcvt.s32.f32 %v2468
        %v2485 = vcvt.s32.f32 %v2469
        %v2486 = vcvt.s32.f32 %v2470
        %v2487 = vcvt.s32.f32 %v2471
        %v2488 = vcvt.s32.f32 %v2472
        %v2489 = vcvt.s32.f32 %v2473
        %v2490 = vcvt.s32.f32 %v2474
        %v2491 = vcvt.s32.f32 %v2475
        %v2492 = vcvt.s32.f32 %v2476
        %v2493 = vcvt.s32.f32 %v2477
        %v2494 = vcvt.s32.f32 %v2478
        %v2495 = vcvt.s32.f32 %v2479
        %v2496 = vcvt.s32.f32 %v2480
        %v2497 = vsel %vm2433, 1, 0
        %v2498 = vsel %vm2434, 1, 0
        %v2499 = vsel %vm2435, 1, 0
        %v2500 = vsel %vm2436, 1, 0
        %v2501 = vsel %vm2437, 1, 0
        %v2502 = vsel %vm2438, 1, 0
        %v2503 = vsel %vm2439, 1, 0
        %v2504 = vsel %vm2440, 1, 0
        %v2505 = vsel %vm2441, 1, 0
        %v2506 = vsel %vm2442, 1, 0
        %v2507 = vsel %vm2443, 1, 0
        %v2508 = vsel %vm2444, 1, 0
        %v2509 = vsel %vm2445, 1, 0
        %v2510 = vsel %vm2446, 1, 0
        %v2511 = vsel %vm2447, 1, 0
        %v2512 = vsel %vm2448, 1, 0
        %v2513 = vcvt.s32.f32 %v2497
        %v2514 = vcvt.s32.f32 %v2498
        %v2515 = vcvt.s32.f32 %v2499
        %v2516 = vcvt.s32.f32 %v2500
        %v2517 = vcvt.s32.f32 %v2501
        %v2518 = vcvt.s32.f32 %v2502
        %v2519 = vcvt.s32.f32 %v2503
        %v2520 = vcvt.s32.f32 %v2504
        %v2521 = vcvt.s32.f32 %v2505
        %v2522 = vcvt.s32.f32 %v2506
        %v2523 = vcvt.s32.f32 %v2507
        %v2524 = vcvt.s32.f32 %v2508
        %v2525 = vcvt.s32.f32 %v2509
        %v2526 = vcvt.s32.f32 %v2510
        %v2527 = vcvt.s32.f32 %v2511
        %v2528 = vcvt.s32.f32 %v2512
        %v2529 = vadd.f32 %v2481, %v2513
        %v2530 = vadd.f32 %v2482, %v2514
        %v2531 = vadd.f32 %v2483, %v2515
        %v2532 = vadd.f32 %v2484, %v2516
        %v2533 = vadd.f32 %v2485, %v2517
        %v2534 = vadd.f32 %v2486, %v2518
        %v2535 = vadd.f32 %v2487, %v2519
        %v2536 = vadd.f32 %v2488, %v2520
        %v2537 = vadd.f32 %v2489, %v2521
        %v2538 = vadd.f32 %v2490, %v2522
        %v2539 = vadd.f32 %v2491, %v2523
        %v2540 = vadd.f32 %v2492, %v2524
        %v2541 = vadd.f32 %v2493, %v2525
        %v2542 = vadd.f32 %v2494, %v2526
        %v2543 = vadd.f32 %v2495, %v2527
        %v2544 = vadd.f32 %v2496, %v2528
        %2545 = vadd.xlane.f32.xlu0 %v2529
        %v2546 = vpop.xlane.xlu0 %2545
        %2547 = vadd.xlane.f32.xlu0 %v2530
        %v2548 = vpop.xlane.xlu0 %2547
        %2549 = vadd.xlane.f32.xlu0 %v2531
        %v2550 = vpop.xlane.xlu0 %2549
        %2551 = vadd.xlane.f32.xlu0 %v2532
        %v2552 = vpop.xlane.xlu0 %2551
        %2553 = vadd.xlane.f32.xlu0 %v2533
        %v2554 = vpop.xlane.xlu0 %2553
        %2555 = vadd.xlane.f32.xlu0 %v2534
        %v2556 = vpop.xlane.xlu0 %2555
        %2557 = vadd.xlane.f32.xlu0 %v2535
        %v2558 = vpop.xlane.xlu0 %2557
        %2559 = vadd.xlane.f32.xlu0 %v2536
        %v2560 = vpop.xlane.xlu0 %2559
        %2561 = vadd.xlane.f32.xlu0 %v2537
        %v2562 = vpop.xlane.xlu0 %2561
        %2563 = vadd.xlane.f32.xlu0 %v2538
        %v2564 = vpop.xlane.xlu0 %2563
        %2565 = vadd.xlane.f32.xlu0 %v2539
        %v2566 = vpop.xlane.xlu0 %2565
        %2567 = vadd.xlane.f32.xlu0 %v2540
        %v2568 = vpop.xlane.xlu0 %2567
        %2569 = vadd.xlane.f32.xlu0 %v2541
        %v2570 = vpop.xlane.xlu0 %2569
        %2571 = vadd.xlane.f32.xlu0 %v2542
        %v2572 = vpop.xlane.xlu0 %2571
        %2573 = vadd.xlane.f32.xlu0 %v2543
        %v2574 = vpop.xlane.xlu0 %2573
        %2575 = vadd.xlane.f32.xlu0 %v2544
        %v2576 = vpop.xlane.xlu0 %2575
        %v2577 = vadd.f32 %v2449, %v2546
        %v2578 = vadd.f32 %v2450, %v2548
        %v2579 = vadd.f32 %v2451, %v2550
        %v2580 = vadd.f32 %v2452, %v2552
        %v2581 = vadd.f32 %v2453, %v2554
        %v2582 = vadd.f32 %v2454, %v2556
        %v2583 = vadd.f32 %v2455, %v2558
        %v2584 = vadd.f32 %v2456, %v2560
        %v2585 = vadd.f32 %v2457, %v2562
        %v2586 = vadd.f32 %v2458, %v2564
        %v2587 = vadd.f32 %v2459, %v2566
        %v2588 = vadd.f32 %v2460, %v2568
        %v2589 = vadd.f32 %v2461, %v2570
        %v2590 = vadd.f32 %v2462, %v2572
        %v2591 = vadd.f32 %v2463, %v2574
        %v2592 = vadd.f32 %v2464, %v2576
        %vm2593 = vcmask 7168
        %2594 = vst.msk [vmem:[#allocation4] sm:$0xff] %vm2593, %v2577
        %2595 = vst.msk [vmem:[#allocation4 + $0x8] sm:$0xff] %vm2593, %v2578
        %2596 = vst.msk [vmem:[#allocation4 + $0x10] sm:$0xff] %vm2593, %v2579
        %2597 = vst.msk [vmem:[#allocation4 + $0x18] sm:$0xff] %vm2593, %v2580
        %2598 = vst.msk [vmem:[#allocation4 + $0x20] sm:$0xff] %vm2593, %v2581
        %2599 = vst.msk [vmem:[#allocation4 + $0x28] sm:$0xff] %vm2593, %v2582
        %2600 = vst.msk [vmem:[#allocation4 + $0x30] sm:$0xff] %vm2593, %v2583
        %2601 = vst.msk [vmem:[#allocation4 + $0x38] sm:$0xff] %vm2593, %v2584
        %2602 = vst.msk [vmem:[#allocation4 + $0x40] sm:$0xff] %vm2593, %v2585
        %2603 = vst.msk [vmem:[#allocation4 + $0x48] sm:$0xff] %vm2593, %v2586
        %2604 = vst.msk [vmem:[#allocation4 + $0x50] sm:$0xff] %vm2593, %v2587
        %2605 = vst.msk [vmem:[#allocation4 + $0x58] sm:$0xff] %vm2593, %v2588
        %2606 = vst.msk [vmem:[#allocation4 + $0x60] sm:$0xff] %vm2593, %v2589
        %2607 = vst.msk [vmem:[#allocation4 + $0x68] sm:$0xff] %vm2593, %v2590
        %2608 = vst.msk [vmem:[#allocation4 + $0x70] sm:$0xff] %vm2593, %v2591
        %2609 = vst.msk [vmem:[#allocation4 + $0x78] sm:$0xff] %vm2593, %v2592
        %v2610 = vld [vmem:[#allocation3] sm:$0xff]
        %v2611 = vld [vmem:[#allocation3 + $0x8] sm:$0xff]
        %v2612 = vld [vmem:[#allocation3 + $0x10] sm:$0xff]
        %v2613 = vld [vmem:[#allocation3 + $0x18] sm:$0xff]
        %v2614 = vld [vmem:[#allocation3 + $0x20] sm:$0xff]
        %v2615 = vld [vmem:[#allocation3 + $0x28] sm:$0xff]
        %v2616 = vld [vmem:[#allocation3 + $0x30] sm:$0xff]
        %v2617 = vld [vmem:[#allocation3 + $0x38] sm:$0xff]
        %v2618 = vld [vmem:[#allocation3 + $0x40] sm:$0xff]
        %v2619 = vld [vmem:[#allocation3 + $0x48] sm:$0xff]
        %v2620 = vld [vmem:[#allocation3 + $0x50] sm:$0xff]
        %v2621 = vld [vmem:[#allocation3 + $0x58] sm:$0xff]
        %v2622 = vld [vmem:[#allocation3 + $0x60] sm:$0xff]
        %v2623 = vld [vmem:[#allocation3 + $0x68] sm:$0xff]
        %v2624 = vld [vmem:[#allocation3 + $0x70] sm:$0xff]
        %v2625 = vld [vmem:[#allocation3 + $0x78] sm:$0xff]
        %v2626 = vpack.c.bf16 %v2482, %v2481
        %v2627 = vpack.c.bf16 %v2484, %v2483
        %v2628 = vpack.c.bf16 %v2486, %v2485
        %v2629 = vpack.c.bf16 %v2488, %v2487
        %v2630 = vpack.c.bf16 %v2490, %v2489
        %v2631 = vpack.c.bf16 %v2492, %v2491
        %v2632 = vpack.c.bf16 %v2494, %v2493
        %v2633 = vpack.c.bf16 %v2496, %v2495
        %v2634 = vpack.c.bf16 %v2146, %v2143
        %v2635 = vpack.c.bf16 %v2152, %v2149
        %v2636 = vpack.c.bf16 %v2158, %v2155
        %v2637 = vpack.c.bf16 %v2164, %v2161
        %v2638 = vpack.c.bf16 %v2170, %v2167
        %v2639 = vpack.c.bf16 %v2176, %v2173
        %v2640 = vpack.c.bf16 %v2182, %v2179
        %v2641 = vpack.c.bf16 %v2188, %v2185
        %v2642 = vpack.c.bf16 %v2514, %v2513
        %v2643 = vpack.c.bf16 %v2516, %v2515
        %v2644 = vpack.c.bf16 %v2518, %v2517
        %v2645 = vpack.c.bf16 %v2520, %v2519
        %v2646 = vpack.c.bf16 %v2522, %v2521
        %v2647 = vpack.c.bf16 %v2524, %v2523
        %v2648 = vpack.c.bf16 %v2526, %v2525
        %v2649 = vpack.c.bf16 %v2528, %v2527
        %v2650 = vpack.c.bf16 %v2148, %v2145
        %v2651 = vpack.c.bf16 %v2154, %v2151
        %v2652 = vpack.c.bf16 %v2160, %v2157
        %v2653 = vpack.c.bf16 %v2166, %v2163
        %v2654 = vpack.c.bf16 %v2172, %v2169
        %v2655 = vpack.c.bf16 %v2178, %v2175
        %v2656 = vpack.c.bf16 %v2184, %v2181
        %v2657 = vpack.c.bf16 %v2190, %v2187
        %2658 = vmatprep.subr.bf16.mxu0 0
        %2659 = vmatpush1.bf16.msra.mxu0 %v2650
        %2660 = vmatprep.subr.bf16.mxu0 0
        %2661 = vmatpush1.bf16.msra.mxu0 %v2651
        %2662 = vmatprep.subr.bf16.mxu0 0
        %2663 = vmatpush1.bf16.msra.mxu0 %v2652
        %2664 = vmatprep.subr.bf16.mxu0 0
        %2665 = vmatpush1.bf16.msra.mxu0 %v2653
        %2666 = vmatprep.subr.bf16.mxu0 0
        %2667 = vmatpush1.bf16.msra.mxu0 %v2654
        %2668 = vmatprep.subr.bf16.mxu0 0
        %2669 = vmatpush1.bf16.msra.mxu0 %v2655
        %2670 = vmatprep.subr.bf16.mxu0 0
        %2671 = vmatpush1.bf16.msra.mxu0 %v2656
        %2672 = vmatprep.subr.bf16.mxu0 0
        %2673 = vmatpush1.bf16.msra.mxu0 %v2657
        %2674 = vmatprep.subr.bf16.mxu0 0
        %2675 = vmatpush1.bf16.msra.mxu0 0
        %2676 = vmatprep.subr.bf16.mxu0 0
        %2677 = vmatpush1.bf16.msra.mxu0 0
        %2678 = vmatprep.subr.bf16.mxu0 0
        %2679 = vmatpush1.bf16.msra.mxu0 0
        %2680 = vmatprep.subr.bf16.mxu0 0
        %2681 = vmatpush1.bf16.msra.mxu0 0
        %2682 = vmatprep.subr.bf16.mxu0 0
        %2683 = vmatpush1.bf16.msra.mxu0 0
        %2684 = vmatprep.subr.bf16.mxu0 0
        %2685 = vmatpush1.bf16.msra.mxu0 0
        %2686 = vmatprep.subr.bf16.mxu0 0
        %2687 = vmatpush1.bf16.msra.mxu0 0
        %2688 = vmatprep.subr.bf16.mxu0 0
        %2689 = vmatpush1.bf16.msra.mxu0 0
        %2690 = vmatprep.mubr.bf16.mxu0 0
        %2691 = vmatmul.mubr.bf16.gmra.mrb[0].mxu0 %v2642
        %v2692 = vpop.f32.mrb[0].mxu0
        %v2693 = vadd.f32 0.0, %v2692
        %v2694 = vpop.f32.mrb[0].mxu0
        %v2695 = vpop.f32.mrb[0].mxu0
        %v2696 = vadd.f32 0.0, %v2695
        %v2697 = vpop.f32.mrb[0].mxu0
        %2698 = vmatprep.mubr.bf16.mxu0 0
        %2699 = vmatmul.mubr.bf16.gmra.mrb[0].mxu0 %v2643
        %v2700 = vpop.f32.mrb[0].mxu0
        %v2701 = vadd.f32 0.0, %v2700
        %v2702 = vpop.f32.mrb[0].mxu0
        %v2703 = vpop.f32.mrb[0].mxu0
        %v2704 = vadd.f32 0.0, %v2703
        %v2705 = vpop.f32.mrb[0].mxu0
        %2706 = vmatprep.mubr.bf16.mxu0 0
        %2707 = vmatmul.mubr.bf16.gmra.mrb[0].mxu0 %v2644
        %v2708 = vpop.f32.mrb[0].mxu0
        %v2709 = vadd.f32 0.0, %v2708
        %v2710 = vpop.f32.mrb[0].mxu0
        %v2711 = vpop.f32.mrb[0].mxu0
        %v2712 = vadd.f32 0.0, %v2711
        %v2713 = vpop.f32.mrb[0].mxu0
        %2714 = vmatprep.mubr.bf16.mxu0 0
        %2715 = vmatmul.mubr.bf16.gmra.mrb[0].mxu0 %v2645
        %v2716 = vpop.f32.mrb[0].mxu0
        %v2717 = vadd.f32 0.0, %v2716
        %v2718 = vpop.f32.mrb[0].mxu0
        %v2719 = vpop.f32.mrb[0].mxu0
        %v2720 = vadd.f32 0.0, %v2719
        %v2721 = vpop.f32.mrb[0].mxu0
        %2722 = vmatprep.mubr.bf16.mxu0 0
        %2723 = vmatmul.mubr.bf16.gmra.mrb[0].mxu0 %v2646
        %v2724 = vpop.f32.mrb[0].mxu0
        %v2725 = vadd.f32 0.0, %v2724
        %v2726 = vpop.f32.mrb[0].mxu0
        %v2727 = vpop.f32.mrb[0].mxu0
        %v2728 = vadd.f32 0.0, %v2727
        %v2729 = vpop.f32.mrb[0].mxu0
        %2730 = vmatprep.mubr.bf16.mxu0 0
        %2731 = vmatmul.mubr.bf16.gmra.mrb[0].mxu0 %v2647
        %v2732 = vpop.f32.mrb[0].mxu0
        %v2733 = vadd.f32 0.0, %v2732
        %v2734 = vpop.f32.mrb[0].mxu0
        %v2735 = vpop.f32.mrb[0].mxu0
        %v2736 = vadd.f32 0.0, %v2735
        %v2737 = vpop.f32.mrb[0].mxu0
        %2738 = vmatprep.mubr.bf16.mxu0 0
        %2739 = vmatmul.mubr.bf16.gmra.mrb[0].mxu0 %v2648
        %v2740 = vpop.f32.mrb[0].mxu0
        %v2741 = vadd.f32 0.0, %v2740
        %v2742 = vpop.f32.mrb[0].mxu0
        %v2743 = vpop.f32.mrb[0].mxu0
        %v2744 = vadd.f32 0.0, %v2743
        %v2745 = vpop.f32.mrb[0].mxu0
        %2746 = vmatprep.mubr.bf16.mxu0 0
        %2747 = vmatmul.mubr.bf16.gmra.mrb[0].mxu0 %v2649
        %v2748 = vpop.f32.mrb[0].mxu0
        %v2749 = vadd.f32 0.0, %v2748
        %v2750 = vpop.f32.mrb[0].mxu0
        %v2751 = vpop.f32.mrb[0].mxu0
        %v2752 = vadd.f32 0.0, %v2751
        %v2753 = vpop.f32.mrb[0].mxu0
        %2754 = vdwg.mxu0
        %2755 = vmatprep.subr.bf16.mxu0 0
        %2756 = vmatpush1.bf16.msra.mxu0 %v2634
        %2757 = vmatprep.subr.bf16.mxu0 0
        %2758 = vmatpush1.bf16.msra.mxu0 %v2635
        %2759 = vmatprep.subr.bf16.mxu0 0
        %2760 = vmatpush1.bf16.msra.mxu0 %v2636
        %2761 = vmatprep.subr.bf16.mxu0 0
        %2762 = vmatpush1.bf16.msra.mxu0 %v2637
        %2763 = vmatprep.subr.bf16.mxu0 0
        %2764 = vmatpush1.bf16.msra.mxu0 %v2638
        %2765 = vmatprep.subr.bf16.mxu0 0
        %2766 = vmatpush1.bf16.msra.mxu0 %v2639
        %2767 = vmatprep.subr.bf16.mxu0 0
        %2768 = vmatpush1.bf16.msra.mxu0 %v2640
        %2769 = vmatprep.subr.bf16.mxu0 0
        %2770 = vmatpush1.bf16.msra.mxu0 %v2641
        %2771 = vmatprep.subr.bf16.mxu0 0
        %2772 = vmatpush1.bf16.msra.mxu0 0
        %2773 = vmatprep.subr.bf16.mxu0 0
        %2774 = vmatpush1.bf16.msra.mxu0 0
        %2775 = vmatprep.subr.bf16.mxu0 0
        %2776 = vmatpush1.bf16.msra.mxu0 0
        %2777 = vmatprep.subr.bf16.mxu0 0
        %2778 = vmatpush1.bf16.msra.mxu0 0
        %2779 = vmatprep.subr.bf16.mxu0 0
        %2780 = vmatpush1.bf16.msra.mxu0 0
        %2781 = vmatprep.subr.bf16.mxu0 0
        %2782 = vmatpush1.bf16.msra.mxu0 0
        %2783 = vmatprep.subr.bf16.mxu0 0
        %2784 = vmatpush1.bf16.msra.mxu0 0
        %2785 = vmatprep.subr.bf16.mxu0 0
        %2786 = vmatpush1.bf16.msra.mxu0 0
        %2787 = vmatprep.mubr.bf16.mxu0 0
        %2788 = vmatmul.mubr.bf16.gmra.mrb[0].mxu0 %v2626
        %v2789 = vpop.f32.mrb[0].mxu0
        %v2790 = vadd.f32 %v2693, %v2789
        %v2791 = vpop.f32.mrb[0].mxu0
        %v2792 = vpop.f32.mrb[0].mxu0
        %v2793 = vadd.f32 %v2696, %v2792
        %v2794 = vpop.f32.mrb[0].mxu0
        %2795 = vmatprep.mubr.bf16.mxu0 0
        %2796 = vmatmul.mubr.bf16.gmra.mrb[0].mxu0 %v2627
        %v2797 = vpop.f32.mrb[0].mxu0
        %v2798 = vadd.f32 %v2701, %v2797
        %v2799 = vpop.f32.mrb[0].mxu0
        %v2800 = vpop.f32.mrb[0].mxu0
        %v2801 = vadd.f32 %v2704, %v2800
        %v2802 = vpop.f32.mrb[0].mxu0
        %2803 = vmatprep.mubr.bf16.mxu0 0
        %2804 = vmatmul.mubr.bf16.gmra.mrb[0].mxu0 %v2628
        %v2805 = vpop.f32.mrb[0].mxu0
        %v2806 = vadd.f32 %v2709, %v2805
        %v2807 = vpop.f32.mrb[0].mxu0
        %v2808 = vpop.f32.mrb[0].mxu0
        %v2809 = vadd.f32 %v2712, %v2808
        %v2810 = vpop.f32.mrb[0].mxu0
        %2811 = vmatprep.mubr.bf16.mxu0 0
        %2812 = vmatmul.mubr.bf16.gmra.mrb[0].mxu0 %v2629
        %v2813 = vpop.f32.mrb[0].mxu0
        %v2814 = vadd.f32 %v2717, %v2813
        %v2815 = vpop.f32.mrb[0].mxu0
        %v2816 = vpop.f32.mrb[0].mxu0
        %v2817 = vadd.f32 %v2720, %v2816
        %v2818 = vpop.f32.mrb[0].mxu0
        %2819 = vmatprep.mubr.bf16.mxu0 0
        %2820 = vmatmul.mubr.bf16.gmra.mrb[0].mxu0 %v2630
        %v2821 = vpop.f32.mrb[0].mxu0
        %v2822 = vadd.f32 %v2725, %v2821
        %v2823 = vpop.f32.mrb[0].mxu0
        %v2824 = vpop.f32.mrb[0].mxu0
        %v2825 = vadd.f32 %v2728, %v2824
        %v2826 = vpop.f32.mrb[0].mxu0
        %2827 = vmatprep.mubr.bf16.mxu0 0
        %2828 = vmatmul.mubr.bf16.gmra.mrb[0].mxu0 %v2631
        %v2829 = vpop.f32.mrb[0].mxu0
        %v2830 = vadd.f32 %v2733, %v2829
        %v2831 = vpop.f32.mrb[0].mxu0
        %v2832 = vpop.f32.mrb[0].mxu0
        %v2833 = vadd.f32 %v2736, %v2832
        %v2834 = vpop.f32.mrb[0].mxu0
        %2835 = vmatprep.mubr.bf16.mxu0 0
        %2836 = vmatmul.mubr.bf16.gmra.mrb[0].mxu0 %v2632
        %v2837 = vpop.f32.mrb[0].mxu0
        %v2838 = vadd.f32 %v2741, %v2837
        %v2839 = vpop.f32.mrb[0].mxu0
        %v2840 = vpop.f32.mrb[0].mxu0
        %v2841 = vadd.f32 %v2744, %v2840
        %v2842 = vpop.f32.mrb[0].mxu0
        %2843 = vmatprep.mubr.bf16.mxu0 0
        %2844 = vmatmul.mubr.bf16.gmra.mrb[0].mxu0 %v2633
        %v2845 = vpop.f32.mrb[0].mxu0
        %v2846 = vadd.f32 %v2749, %v2845
        %v2847 = vpop.f32.mrb[0].mxu0
        %v2848 = vpop.f32.mrb[0].mxu0
        %v2849 = vadd.f32 %v2752, %v2848
        %v2850 = vpop.f32.mrb[0].mxu0
        %2851 = vdwg.mxu0
        %v2852 = vadd.f32 %v2610, %v2790
        %v2853 = vadd.f32 %v2611, %v2793
        %v2854 = vadd.f32 %v2612, %v2798
        %v2855 = vadd.f32 %v2613, %v2801
        %v2856 = vadd.f32 %v2614, %v2806
        %v2857 = vadd.f32 %v2615, %v2809
        %v2858 = vadd.f32 %v2616, %v2814
        %v2859 = vadd.f32 %v2617, %v2817
        %v2860 = vadd.f32 %v2618, %v2822
        %v2861 = vadd.f32 %v2619, %v2825
        %v2862 = vadd.f32 %v2620, %v2830
        %v2863 = vadd.f32 %v2621, %v2833
        %v2864 = vadd.f32 %v2622, %v2838
        %v2865 = vadd.f32 %v2623, %v2841
        %v2866 = vadd.f32 %v2624, %v2846
        %v2867 = vadd.f32 %v2625, %v2849
        %2868 = vst [vmem:[#allocation3] sm:$0xff] %v2852
        %2869 = vst [vmem:[#allocation3 + $0x8] sm:$0xff] %v2853
        %2870 = vst [vmem:[#allocation3 + $0x10] sm:$0xff] %v2854
        %2871 = vst [vmem:[#allocation3 + $0x18] sm:$0xff] %v2855
        %2872 = vst [vmem:[#allocation3 + $0x20] sm:$0xff] %v2856
        %2873 = vst [vmem:[#allocation3 + $0x28] sm:$0xff] %v2857
        %2874 = vst [vmem:[#allocation3 + $0x30] sm:$0xff] %v2858
        %2875 = vst [vmem:[#allocation3 + $0x38] sm:$0xff] %v2859
        %2876 = vst [vmem:[#allocation3 + $0x40] sm:$0xff] %v2860
        %2877 = vst [vmem:[#allocation3 + $0x48] sm:$0xff] %v2861
        %2878 = vst [vmem:[#allocation3 + $0x50] sm:$0xff] %v2862
        %2879 = vst [vmem:[#allocation3 + $0x58] sm:$0xff] %v2863
        %2880 = vst [vmem:[#allocation3 + $0x60] sm:$0xff] %v2864
        %2881 = vst [vmem:[#allocation3 + $0x68] sm:$0xff] %v2865
        %2882 = vst [vmem:[#allocation3 + $0x70] sm:$0xff] %v2866
        %2883 = vst [vmem:[#allocation3 + $0x78] sm:$0xff] %v2867
        %p2884 = scmp.eq.s32.totalorder %s40, 1
        // Predicated region
        $region121: #{tpu_custom_call.1} parent=87 // pred_check
          %p2885 = pneg %p2884
        $region122: #{tpu_custom_call.1} parent=87 // pred_check_branch
          %2887 = sbr.rel (%p2885) target = $region124
        $region123: #{tpu_custom_call.1} parent=87 // pred_region
          %v2888 = vld [vmem:[#allocation3] sm:$0xff]
          %v2889 = vld [vmem:[#allocation3 + $0x8] sm:$0xff]
          %v2890 = vld [vmem:[#allocation3 + $0x10] sm:$0xff]
          %v2891 = vld [vmem:[#allocation3 + $0x18] sm:$0xff]
          %v2892 = vld [vmem:[#allocation3 + $0x20] sm:$0xff]
          %v2893 = vld [vmem:[#allocation3 + $0x28] sm:$0xff]
          %v2894 = vld [vmem:[#allocation3 + $0x30] sm:$0xff]
          %v2895 = vld [vmem:[#allocation3 + $0x38] sm:$0xff]
          %v2896 = vld [vmem:[#allocation3 + $0x40] sm:$0xff]
          %v2897 = vld [vmem:[#allocation3 + $0x48] sm:$0xff]
          %v2898 = vld [vmem:[#allocation3 + $0x50] sm:$0xff]
          %v2899 = vld [vmem:[#allocation3 + $0x58] sm:$0xff]
          %v2900 = vld [vmem:[#allocation3 + $0x60] sm:$0xff]
          %v2901 = vld [vmem:[#allocation3 + $0x68] sm:$0xff]
          %v2902 = vld [vmem:[#allocation3 + $0x70] sm:$0xff]
          %v2903 = vld [vmem:[#allocation3 + $0x78] sm:$0xff]
          %v2904 = vld [vmem:[#allocation4] sm:$0xff]
          %v2905 = vld [vmem:[#allocation4 + $0x8] sm:$0xff]
          %v2906 = vld [vmem:[#allocation4 + $0x10] sm:$0xff]
          %v2907 = vld [vmem:[#allocation4 + $0x18] sm:$0xff]
          %v2908 = vld [vmem:[#allocation4 + $0x20] sm:$0xff]
          %v2909 = vld [vmem:[#allocation4 + $0x28] sm:$0xff]
          %v2910 = vld [vmem:[#allocation4 + $0x30] sm:$0xff]
          %v2911 = vld [vmem:[#allocation4 + $0x38] sm:$0xff]
          %v2912 = vld [vmem:[#allocation4 + $0x40] sm:$0xff]
          %v2913 = vld [vmem:[#allocation4 + $0x48] sm:$0xff]
          %v2914 = vld [vmem:[#allocation4 + $0x50] sm:$0xff]
          %v2915 = vld [vmem:[#allocation4 + $0x58] sm:$0xff]
          %v2916 = vld [vmem:[#allocation4 + $0x60] sm:$0xff]
          %v2917 = vld [vmem:[#allocation4 + $0x68] sm:$0xff]
          %v2918 = vld [vmem:[#allocation4 + $0x70] sm:$0xff]
          %v2919 = vld [vmem:[#allocation4 + $0x78] sm:$0xff]
          %v2920 = vmax.f32 %v2904, 1.0
          %v2921 = vmax.f32 %v2905, 1.0
          %v2922 = vmax.f32 %v2906, 1.0
          %v2923 = vmax.f32 %v2907, 1.0
          %v2924 = vmax.f32 %v2908, 1.0
          %v2925 = vmax.f32 %v2909, 1.0
          %v2926 = vmax.f32 %v2910, 1.0
          %v2927 = vmax.f32 %v2911, 1.0
          %v2928 = vmax.f32 %v2912, 1.0
          %v2929 = vmax.f32 %v2913, 1.0
          %v2930 = vmax.f32 %v2914, 1.0
          %v2931 = vmax.f32 %v2915, 1.0
          %v2932 = vmax.f32 %v2916, 1.0
          %v2933 = vmax.f32 %v2917, 1.0
          %v2934 = vmax.f32 %v2918, 1.0
          %v2935 = vmax.f32 %v2919, 1.0
          %2937 = vset.pattern.permute.xlu0 0
          %2938 = vperm.xlu0 %2937, %v2920
          %v2939 = vpop.permute.xlu0 %2938
          %2942 = vset.pattern.permute.xlu0 0
          %2943 = vperm.xlu0 %2942, %v2921
          %v2944 = vpop.permute.xlu0 %2943
          %2947 = vset.pattern.permute.xlu0 0
          %2948 = vperm.xlu0 %2947, %v2922
          %v2949 = vpop.permute.xlu0 %2948
          %2952 = vset.pattern.permute.xlu0 0
          %2953 = vperm.xlu0 %2952, %v2923
          %v2954 = vpop.permute.xlu0 %2953
          %2957 = vset.pattern.permute.xlu0 0
          %2958 = vperm.xlu0 %2957, %v2924
          %v2959 = vpop.permute.xlu0 %2958
          %2962 = vset.pattern.permute.xlu0 0
          %2963 = vperm.xlu0 %2962, %v2925
          %v2964 = vpop.permute.xlu0 %2963
          %2967 = vset.pattern.permute.xlu0 0
          %2968 = vperm.xlu0 %2967, %v2926
          %v2969 = vpop.permute.xlu0 %2968
          %2972 = vset.pattern.permute.xlu0 0
          %2973 = vperm.xlu0 %2972, %v2927
          %v2974 = vpop.permute.xlu0 %2973
          %2977 = vset.pattern.permute.xlu0 0
          %2978 = vperm.xlu0 %2977, %v2928
          %v2979 = vpop.permute.xlu0 %2978
          %2982 = vset.pattern.permute.xlu0 0
          %2983 = vperm.xlu0 %2982, %v2929
          %v2984 = vpop.permute.xlu0 %2983
          %2987 = vset.pattern.permute.xlu0 0
          %2988 = vperm.xlu0 %2987, %v2930
          %v2989 = vpop.permute.xlu0 %2988
          %2992 = vset.pattern.permute.xlu0 0
          %2993 = vperm.xlu0 %2992, %v2931
          %v2994 = vpop.permute.xlu0 %2993
          %2997 = vset.pattern.permute.xlu0 0
          %2998 = vperm.xlu0 %2997, %v2932
          %v2999 = vpop.permute.xlu0 %2998
          %3002 = vset.pattern.permute.xlu0 0
          %3003 = vperm.xlu0 %3002, %v2933
          %v3004 = vpop.permute.xlu0 %3003
          %3007 = vset.pattern.permute.xlu0 0
          %3008 = vperm.xlu0 %3007, %v2934
          %v3009 = vpop.permute.xlu0 %3008
          %3012 = vset.pattern.permute.xlu0 0
          %3013 = vperm.xlu0 %3012, %v2935
          %v3014 = vpop.permute.xlu0 %3013
          %v3016 = vrcp.pop %v2939
          %v3017 = vmul.f32 %v2888, %v3016
          %v3018 = vrcp.pop %v2944
          %v3019 = vmul.f32 %v2889, %v3018
          %v3020 = vrcp.pop %v2949
          %v3021 = vmul.f32 %v2890, %v3020
          %v3022 = vrcp.pop %v2954
          %v3023 = vmul.f32 %v2891, %v3022
          %v3024 = vrcp.pop %v2959
          %v3025 = vmul.f32 %v2892, %v3024
          %v3026 = vrcp.pop %v2964
          %v3027 = vmul.f32 %v2893, %v3026
          %v3028 = vrcp.pop %v2969
          %v3029 = vmul.f32 %v2894, %v3028
          %v3030 = vrcp.pop %v2974
          %v3031 = vmul.f32 %v2895, %v3030
          %v3032 = vrcp.pop %v2979
          %v3033 = vmul.f32 %v2896, %v3032
          %v3034 = vrcp.pop %v2984
          %v3035 = vmul.f32 %v2897, %v3034
          %v3036 = vrcp.pop %v2989
          %v3037 = vmul.f32 %v2898, %v3036
          %v3038 = vrcp.pop %v2994
          %v3039 = vmul.f32 %v2899, %v3038
          %v3040 = vrcp.pop %v2999
          %v3041 = vmul.f32 %v2900, %v3040
          %v3042 = vrcp.pop %v3004
          %v3043 = vmul.f32 %v2901, %v3042
          %v3044 = vrcp.pop %v3009
          %v3045 = vmul.f32 %v2902, %v3044
          %v3046 = vrcp.pop %v3014
          %v3047 = vmul.f32 %v2903, %v3046
          %v3048 = vpack.c.bf16 %v3019, %v3017
          %v3049 = vpack.c.bf16 %v3023, %v3021
          %v3050 = vpack.c.bf16 %v3027, %v3025
          %v3051 = vpack.c.bf16 %v3031, %v3029
          %v3052 = vpack.c.bf16 %v3035, %v3033
          %v3053 = vpack.c.bf16 %v3039, %v3037
          %v3054 = vpack.c.bf16 %v3043, %v3041
          %v3055 = vpack.c.bf16 %v3047, %v3045
          %v3056 = vld [vmem:[#allocation11] sm:$0xf]
          %v3057 = vld [vmem:[#allocation11 + $0x4] sm:$0xf]
          %v3058 = vld [vmem:[#allocation11 + $0x8] sm:$0xf]
          %v3059 = vld [vmem:[#allocation11 + $0xc] sm:$0xf]
          %v3060 = vld [vmem:[#allocation11 + $0x10] sm:$0xf]
          %v3061 = vld [vmem:[#allocation11 + $0x14] sm:$0xf]
          %v3062 = vld [vmem:[#allocation11 + $0x18] sm:$0xf]
          %v3063 = vld [vmem:[#allocation11 + $0x1c] sm:$0xf]
          %v3064 = vld [vmem:[#allocation11 + $0x20] sm:$0xf]
          %v3065 = vld [vmem:[#allocation11 + $0x24] sm:$0xf]
          %v3066 = vld [vmem:[#allocation11 + $0x28] sm:$0xf]
          %v3067 = vld [vmem:[#allocation11 + $0x2c] sm:$0xf]
          %v3068 = vld [vmem:[#allocation11 + $0x30] sm:$0xf]
          %v3069 = vld [vmem:[#allocation11 + $0x34] sm:$0xf]
          %v3070 = vld [vmem:[#allocation11 + $0x38] sm:$0xf]
          %v3071 = vld [vmem:[#allocation11 + $0x3c] sm:$0xf]
          %v3072 = vld [vmem:[%s10] sm:$0x1]
          %v3074 = vlaneseq
          %v3075 = vshrl.u32 %v3074, 7
          %v3076 = vsub.s32 0, %v3075
          %v3077 = vrot.slane %v3072, %v3076
          %v3095 = vunpack.c.l.b16 %v3056
          %v3096 = vunpack.c.l.b16 %v3057
          %v3097 = vunpack.c.l.b16 %v3058
          %v3098 = vunpack.c.l.b16 %v3059
          %v3099 = vunpack.c.l.b16 %v3060
          %v3100 = vunpack.c.l.b16 %v3061
          %v3101 = vunpack.c.l.b16 %v3062
          %v3102 = vunpack.c.l.b16 %v3063
          %v3103 = vunpack.c.l.b16 %v3064
          %v3104 = vunpack.c.l.b16 %v3065
          %v3105 = vunpack.c.l.b16 %v3066
          %v3106 = vunpack.c.l.b16 %v3067
          %v3107 = vunpack.c.l.b16 %v3068
          %v3108 = vunpack.c.l.b16 %v3069
          %v3109 = vunpack.c.l.b16 %v3070
          %v3110 = vunpack.c.l.b16 %v3071
          %v3111 = vpack.c.b16 %v3096, %v3095
          %v3112 = vpack.c.b16 %v3098, %v3097
          %v3113 = vpack.c.b16 %v3100, %v3099
          %v3114 = vpack.c.b16 %v3102, %v3101
          %v3115 = vpack.c.b16 %v3104, %v3103
          %v3116 = vpack.c.b16 %v3106, %v3105
          %v3117 = vpack.c.b16 %v3108, %v3107
          %v3118 = vpack.c.b16 %v3110, %v3109
          %3127 = vmatprep.subr.bf16.mxu0 0
          %3128 = vmatpush1.bf16.msra.mxu0 %v3111
          %3129 = vmatprep.subr.bf16.mxu0 0
          %3130 = vmatpush1.bf16.msra.mxu0 %v3112
          %3131 = vmatprep.subr.bf16.mxu0 0
          %3132 = vmatpush1.bf16.msra.mxu0 %v3113
          %3133 = vmatprep.subr.bf16.mxu0 0
          %3134 = vmatpush1.bf16.msra.mxu0 %v3114
          %3135 = vmatprep.subr.bf16.mxu0 0
          %3136 = vmatpush1.bf16.msra.mxu0 %v3115
          %3137 = vmatprep.subr.bf16.mxu0 0
          %3138 = vmatpush1.bf16.msra.mxu0 %v3116
          %3139 = vmatprep.subr.bf16.mxu0 0
          %3140 = vmatpush1.bf16.msra.mxu0 %v3117
          %3141 = vmatprep.subr.bf16.mxu0 0
          %3142 = vmatpush1.bf16.msra.mxu0 %v3118
          %3143 = vmatprep.subr.bf16.mxu0 0
          %3144 = vmatpush1.bf16.msra.mxu0 0
          %3145 = vmatprep.subr.bf16.mxu0 0
          %3146 = vmatpush1.bf16.msra.mxu0 0
          %3147 = vmatprep.subr.bf16.mxu0 0
          %3148 = vmatpush1.bf16.msra.mxu0 0
          %3149 = vmatprep.subr.bf16.mxu0 0
          %3150 = vmatpush1.bf16.msra.mxu0 0
          %3151 = vmatprep.subr.bf16.mxu0 0
          %3152 = vmatpush1.bf16.msra.mxu0 0
          %3153 = vmatprep.subr.bf16.mxu0 0
          %3154 = vmatpush1.bf16.msra.mxu0 0
          %3155 = vmatprep.subr.bf16.mxu0 0
          %3156 = vmatpush1.bf16.msra.mxu0 0
          %3157 = vmatprep.subr.bf16.mxu0 0
          %3158 = vmatpush1.bf16.msra.mxu0 0
          %3159 = vmatprep.mubr.bf16.mxu0 0
          %3160 = vmatmul.mubr.bf16.gmra.mrb[0].mxu0 %v3048
          %v3161 = vpop.f32.mrb[0].mxu0
          %v3162 = vadd.f32 %v3077, %v3161
          %v3163 = vpop.f32.mrb[0].mxu0
          %v3164 = vpop.f32.mrb[0].mxu0
          %v3165 = vadd.f32 %v3077, %v3164
          %v3166 = vpop.f32.mrb[0].mxu0
          %3167 = vmatprep.mubr.bf16.mxu0 0
          %3168 = vmatmul.mubr.bf16.gmra.mrb[0].mxu0 %v3049
          %v3169 = vpop.f32.mrb[0].mxu0
          %v3170 = vadd.f32 %v3077, %v3169
          %v3171 = vpop.f32.mrb[0].mxu0
          %v3172 = vpop.f32.mrb[0].mxu0
          %v3173 = vadd.f32 %v3077, %v3172
          %v3174 = vpop.f32.mrb[0].mxu0
          %3175 = vmatprep.mubr.bf16.mxu0 0
          %3176 = vmatmul.mubr.bf16.gmra.mrb[0].mxu0 %v3050
          %v3177 = vpop.f32.mrb[0].mxu0
          %v3178 = vadd.f32 %v3077, %v3177
          %v3179 = vpop.f32.mrb[0].mxu0
          %v3180 = vpop.f32.mrb[0].mxu0
          %v3181 = vadd.f32 %v3077, %v3180
          %v3182 = vpop.f32.mrb[0].mxu0
          %3183 = vmatprep.mubr.bf16.mxu0 0
          %3184 = vmatmul.mubr.bf16.gmra.mrb[0].mxu0 %v3051
          %v3185 = vpop.f32.mrb[0].mxu0
          %v3186 = vadd.f32 %v3077, %v3185
          %v3187 = vpop.f32.mrb[0].mxu0
          %v3188 = vpop.f32.mrb[0].mxu0
          %v3189 = vadd.f32 %v3077, %v3188
          %v3190 = vpop.f32.mrb[0].mxu0
          %3191 = vmatprep.mubr.bf16.mxu0 0
          %3192 = vmatmul.mubr.bf16.gmra.mrb[0].mxu0 %v3052
          %v3193 = vpop.f32.mrb[0].mxu0
          %v3194 = vadd.f32 %v3077, %v3193
          %v3195 = vpop.f32.mrb[0].mxu0
          %v3196 = vpop.f32.mrb[0].mxu0
          %v3197 = vadd.f32 %v3077, %v3196
          %v3198 = vpop.f32.mrb[0].mxu0
          %3199 = vmatprep.mubr.bf16.mxu0 0
          %3200 = vmatmul.mubr.bf16.gmra.mrb[0].mxu0 %v3053
          %v3201 = vpop.f32.mrb[0].mxu0
          %v3202 = vadd.f32 %v3077, %v3201
          %v3203 = vpop.f32.mrb[0].mxu0
          %v3204 = vpop.f32.mrb[0].mxu0
          %v3205 = vadd.f32 %v3077, %v3204
          %v3206 = vpop.f32.mrb[0].mxu0
          %3207 = vmatprep.mubr.bf16.mxu0 0
          %3208 = vmatmul.mubr.bf16.gmra.mrb[0].mxu0 %v3054
          %v3209 = vpop.f32.mrb[0].mxu0
          %v3210 = vadd.f32 %v3077, %v3209
          %v3211 = vpop.f32.mrb[0].mxu0
          %v3212 = vpop.f32.mrb[0].mxu0
          %v3213 = vadd.f32 %v3077, %v3212
          %v3214 = vpop.f32.mrb[0].mxu0
          %3215 = vmatprep.mubr.bf16.mxu0 0
          %3216 = vmatmul.mubr.bf16.gmra.mrb[0].mxu0 %v3055
          %v3217 = vpop.f32.mrb[0].mxu0
          %v3218 = vadd.f32 %v3077, %v3217
          %v3219 = vpop.f32.mrb[0].mxu0
          %v3220 = vpop.f32.mrb[0].mxu0
          %v3221 = vadd.f32 %v3077, %v3220
          %v3222 = vpop.f32.mrb[0].mxu0
          %3223 = vdwg.mxu0
          %v3224 = vmax.f32 %v3162, 0.0
          %v3225 = vmax.f32 %v3165, 0.0
          %v3226 = vmax.f32 %v3170, 0.0
          %v3227 = vmax.f32 %v3173, 0.0
          %v3228 = vmax.f32 %v3178, 0.0
          %v3229 = vmax.f32 %v3181, 0.0
          %v3230 = vmax.f32 %v3186, 0.0
          %v3231 = vmax.f32 %v3189, 0.0
          %v3232 = vmax.f32 %v3194, 0.0
          %v3233 = vmax.f32 %v3197, 0.0
          %v3234 = vmax.f32 %v3202, 0.0
          %v3235 = vmax.f32 %v3205, 0.0
          %v3236 = vmax.f32 %v3210, 0.0
          %v3237 = vmax.f32 %v3213, 0.0
          %v3238 = vmax.f32 %v3218, 0.0
          %v3239 = vmax.f32 %v3221, 0.0
          %v3240 = vpack.c.bf16 %v3225, %v3224
          %v3241 = vpack.c.bf16 %v3227, %v3226
          %v3242 = vpack.c.bf16 %v3229, %v3228
          %v3243 = vpack.c.bf16 %v3231, %v3230
          %v3244 = vpack.c.bf16 %v3233, %v3232
          %v3245 = vpack.c.bf16 %v3235, %v3234
          %v3246 = vpack.c.bf16 %v3237, %v3236
          %v3247 = vpack.c.bf16 %v3239, %v3238
          %v3248 = vld [vmem:[#allocation13] sm:$0xf]
          %v3249 = vld [vmem:[#allocation13 + $0x4] sm:$0xf]
          %v3250 = vld [vmem:[#allocation13 + $0x8] sm:$0xf]
          %v3251 = vld [vmem:[#allocation13 + $0xc] sm:$0xf]
          %v3252 = vld [vmem:[#allocation13 + $0x10] sm:$0xf]
          %v3253 = vld [vmem:[#allocation13 + $0x14] sm:$0xf]
          %v3254 = vld [vmem:[#allocation13 + $0x18] sm:$0xf]
          %v3255 = vld [vmem:[#allocation13 + $0x1c] sm:$0xf]
          %v3256 = vld [vmem:[#allocation13 + $0x20] sm:$0xf]
          %v3257 = vld [vmem:[#allocation13 + $0x24] sm:$0xf]
          %v3258 = vld [vmem:[#allocation13 + $0x28] sm:$0xf]
          %v3259 = vld [vmem:[#allocation13 + $0x2c] sm:$0xf]
          %v3260 = vld [vmem:[#allocation13 + $0x30] sm:$0xf]
          %v3261 = vld [vmem:[#allocation13 + $0x34] sm:$0xf]
          %v3262 = vld [vmem:[#allocation13 + $0x38] sm:$0xf]
          %v3263 = vld [vmem:[#allocation13 + $0x3c] sm:$0xf]
          %v3264 = vld [vmem:[%s12] sm:$0x1]
          %v3266 = vlaneseq
          %v3267 = vshrl.u32 %v3266, 7
          %v3268 = vsub.s32 0, %v3267
          %v3269 = vrot.slane %v3264, %v3268
          %v3287 = vunpack.c.l.b16 %v3248
          %v3288 = vunpack.c.l.b16 %v3249
          %v3289 = vunpack.c.l.b16 %v3250
          %v3290 = vunpack.c.l.b16 %v3251
          %v3291 = vunpack.c.l.b16 %v3252
          %v3292 = vunpack.c.l.b16 %v3253
          %v3293 = vunpack.c.l.b16 %v3254
          %v3294 = vunpack.c.l.b16 %v3255
          %v3295 = vunpack.c.l.b16 %v3256
          %v3296 = vunpack.c.l.b16 %v3257
          %v3297 = vunpack.c.l.b16 %v3258
          %v3298 = vunpack.c.l.b16 %v3259
          %v3299 = vunpack.c.l.b16 %v3260
          %v3300 = vunpack.c.l.b16 %v3261
          %v3301 = vunpack.c.l.b16 %v3262
          %v3302 = vunpack.c.l.b16 %v3263
          %v3303 = vpack.c.b16 %v3288, %v3287
          %v3304 = vpack.c.b16 %v3290, %v3289
          %v3305 = vpack.c.b16 %v3292, %v3291
          %v3306 = vpack.c.b16 %v3294, %v3293
          %v3307 = vpack.c.b16 %v3296, %v3295
          %v3308 = vpack.c.b16 %v3298, %v3297
          %v3309 = vpack.c.b16 %v3300, %v3299
          %v3310 = vpack.c.b16 %v3302, %v3301
          %3319 = vmatprep.subr.bf16.mxu0 0
          %3320 = vmatpush1.bf16.msra.mxu0 %v3303
          %3321 = vmatprep.subr.bf16.mxu0 0
          %3322 = vmatpush1.bf16.msra.mxu0 %v3304
          %3323 = vmatprep.subr.bf16.mxu0 0
          %3324 = vmatpush1.bf16.msra.mxu0 %v3305
          %3325 = vmatprep.subr.bf16.mxu0 0
          %3326 = vmatpush1.bf16.msra.mxu0 %v3306
          %3327 = vmatprep.subr.bf16.mxu0 0
          %3328 = vmatpush1.bf16.msra.mxu0 %v3307
          %3329 = vmatprep.subr.bf16.mxu0 0
          %3330 = vmatpush1.bf16.msra.mxu0 %v3308
          %3331 = vmatprep.subr.bf16.mxu0 0
          %3332 = vmatpush1.bf16.msra.mxu0 %v3309
          %3333 = vmatprep.subr.bf16.mxu0 0
          %3334 = vmatpush1.bf16.msra.mxu0 %v3310
          %3335 = vmatprep.subr.bf16.mxu0 0
          %3336 = vmatpush1.bf16.msra.mxu0 0
          %3337 = vmatprep.subr.bf16.mxu0 0
          %3338 = vmatpush1.bf16.msra.mxu0 0
          %3339 = vmatprep.subr.bf16.mxu0 0
          %3340 = vmatpush1.bf16.msra.mxu0 0
          %3341 = vmatprep.subr.bf16.mxu0 0
          %3342 = vmatpush1.bf16.msra.mxu0 0
          %3343 = vmatprep.subr.bf16.mxu0 0
          %3344 = vmatpush1.bf16.msra.mxu0 0
          %3345 = vmatprep.subr.bf16.mxu0 0
          %3346 = vmatpush1.bf16.msra.mxu0 0
          %3347 = vmatprep.subr.bf16.mxu0 0
          %3348 = vmatpush1.bf16.msra.mxu0 0
          %3349 = vmatprep.subr.bf16.mxu0 0
          %3350 = vmatpush1.bf16.msra.mxu0 0
          %3351 = vmatprep.mubr.bf16.mxu0 0
          %3352 = vmatmul.mubr.bf16.gmra.mrb[0].mxu0 %v3240
          %v3353 = vpop.f32.mrb[0].mxu0
          %v3354 = vadd.f32 %v3269, %v3353
          %v3355 = vpop.f32.mrb[0].mxu0
          %v3356 = vpop.f32.mrb[0].mxu0
          %v3357 = vadd.f32 %v3269, %v3356
          %v3358 = vpop.f32.mrb[0].mxu0
          %3359 = vmatprep.mubr.bf16.mxu0 0
          %3360 = vmatmul.mubr.bf16.gmra.mrb[0].mxu0 %v3241
          %v3361 = vpop.f32.mrb[0].mxu0
          %v3362 = vadd.f32 %v3269, %v3361
          %v3363 = vpop.f32.mrb[0].mxu0
          %v3364 = vpop.f32.mrb[0].mxu0
          %v3365 = vadd.f32 %v3269, %v3364
          %v3366 = vpop.f32.mrb[0].mxu0
          %3367 = vmatprep.mubr.bf16.mxu0 0
          %3368 = vmatmul.mubr.bf16.gmra.mrb[0].mxu0 %v3242
          %v3369 = vpop.f32.mrb[0].mxu0
          %v3370 = vadd.f32 %v3269, %v3369
          %v3371 = vpop.f32.mrb[0].mxu0
          %v3372 = vpop.f32.mrb[0].mxu0
          %v3373 = vadd.f32 %v3269, %v3372
          %v3374 = vpop.f32.mrb[0].mxu0
          %3375 = vmatprep.mubr.bf16.mxu0 0
          %3376 = vmatmul.mubr.bf16.gmra.mrb[0].mxu0 %v3243
          %v3377 = vpop.f32.mrb[0].mxu0
          %v3378 = vadd.f32 %v3269, %v3377
          %v3379 = vpop.f32.mrb[0].mxu0
          %v3380 = vpop.f32.mrb[0].mxu0
          %v3381 = vadd.f32 %v3269, %v3380
          %v3382 = vpop.f32.mrb[0].mxu0
          %3383 = vmatprep.mubr.bf16.mxu0 0
          %3384 = vmatmul.mubr.bf16.gmra.mrb[0].mxu0 %v3244
          %v3385 = vpop.f32.mrb[0].mxu0
          %v3386 = vadd.f32 %v3269, %v3385
          %v3387 = vpop.f32.mrb[0].mxu0
          %v3388 = vpop.f32.mrb[0].mxu0
          %v3389 = vadd.f32 %v3269, %v3388
          %v3390 = vpop.f32.mrb[0].mxu0
          %3391 = vmatprep.mubr.bf16.mxu0 0
          %3392 = vmatmul.mubr.bf16.gmra.mrb[0].mxu0 %v3245
          %v3393 = vpop.f32.mrb[0].mxu0
          %v3394 = vadd.f32 %v3269, %v3393
          %v3395 = vpop.f32.mrb[0].mxu0
          %v3396 = vpop.f32.mrb[0].mxu0
          %v3397 = vadd.f32 %v3269, %v3396
          %v3398 = vpop.f32.mrb[0].mxu0
          %3399 = vmatprep.mubr.bf16.mxu0 0
          %3400 = vmatmul.mubr.bf16.gmra.mrb[0].mxu0 %v3246
          %v3401 = vpop.f32.mrb[0].mxu0
          %v3402 = vadd.f32 %v3269, %v3401
          %v3403 = vpop.f32.mrb[0].mxu0
          %v3404 = vpop.f32.mrb[0].mxu0
          %v3405 = vadd.f32 %v3269, %v3404
          %v3406 = vpop.f32.mrb[0].mxu0
          %3407 = vmatprep.mubr.bf16.mxu0 0
          %3408 = vmatmul.mubr.bf16.gmra.mrb[0].mxu0 %v3247
          %v3409 = vpop.f32.mrb[0].mxu0
          %v3410 = vadd.f32 %v3269, %v3409
          %v3411 = vpop.f32.mrb[0].mxu0
          %v3412 = vpop.f32.mrb[0].mxu0
          %v3413 = vadd.f32 %v3269, %v3412
          %v3414 = vpop.f32.mrb[0].mxu0
          %3415 = vdwg.mxu0
          %v3416 = vmax.f32 %v3354, 0.0
          %v3417 = vmax.f32 %v3357, 0.0
          %v3418 = vmax.f32 %v3362, 0.0
          %v3419 = vmax.f32 %v3365, 0.0
          %v3420 = vmax.f32 %v3370, 0.0
          %v3421 = vmax.f32 %v3373, 0.0
          %v3422 = vmax.f32 %v3378, 0.0
          %v3423 = vmax.f32 %v3381, 0.0
          %v3424 = vmax.f32 %v3386, 0.0
          %v3425 = vmax.f32 %v3389, 0.0
          %v3426 = vmax.f32 %v3394, 0.0
          %v3427 = vmax.f32 %v3397, 0.0
          %v3428 = vmax.f32 %v3402, 0.0
          %v3429 = vmax.f32 %v3405, 0.0
          %v3430 = vmax.f32 %v3410, 0.0
          %v3431 = vmax.f32 %v3413, 0.0
          %v3432 = vld [vmem:[%s3] sm:$0xf]
          %v3433 = vld [vmem:[%s3 + $0x4] sm:$0xf]
          %v3434 = vld [vmem:[%s3 + $0x8] sm:$0xf]
          %v3435 = vld [vmem:[%s3 + $0xc] sm:$0xf]
          %v3436 = vld [vmem:[%s3 + $0x10] sm:$0xf]
          %v3437 = vld [vmem:[%s3 + $0x14] sm:$0xf]
          %v3438 = vld [vmem:[%s3 + $0x18] sm:$0xf]
          %v3439 = vld [vmem:[%s3 + $0x1c] sm:$0xf]
          %v3440 = vld [vmem:[%s3 + $0x20] sm:$0xf]
          %v3441 = vld [vmem:[%s3 + $0x24] sm:$0xf]
          %v3442 = vld [vmem:[%s3 + $0x28] sm:$0xf]
          %v3443 = vld [vmem:[%s3 + $0x2c] sm:$0xf]
          %v3444 = vld [vmem:[%s3 + $0x30] sm:$0xf]
          %v3445 = vld [vmem:[%s3 + $0x34] sm:$0xf]
          %v3446 = vld [vmem:[%s3 + $0x38] sm:$0xf]
          %v3447 = vld [vmem:[%s3 + $0x3c] sm:$0xf]
          %v3448 = vld [vmem:[#allocation14] sm:$0xf]
          %v3449 = vld [vmem:[#allocation14 + $0x4] sm:$0xf]
          %v3450 = vld [vmem:[#allocation14 + $0x8] sm:$0xf]
          %v3451 = vld [vmem:[#allocation14 + $0xc] sm:$0xf]
          %v3452 = vld [vmem:[#allocation14 + $0x10] sm:$0xf]
          %v3453 = vld [vmem:[#allocation14 + $0x14] sm:$0xf]
          %v3454 = vld [vmem:[#allocation14 + $0x18] sm:$0xf]
          %v3455 = vld [vmem:[#allocation14 + $0x1c] sm:$0xf]
          %v3456 = vld [vmem:[#allocation14 + $0x20] sm:$0xf]
          %v3457 = vld [vmem:[#allocation14 + $0x24] sm:$0xf]
          %v3458 = vld [vmem:[#allocation14 + $0x28] sm:$0xf]
          %v3459 = vld [vmem:[#allocation14 + $0x2c] sm:$0xf]
          %v3460 = vld [vmem:[#allocation14 + $0x30] sm:$0xf]
          %v3461 = vld [vmem:[#allocation14 + $0x34] sm:$0xf]
          %v3462 = vld [vmem:[#allocation14 + $0x38] sm:$0xf]
          %v3463 = vld [vmem:[#allocation14 + $0x3c] sm:$0xf]
          %v3464 = vld [vmem:[%s14] sm:$0x1]
          %v3466 = vlaneseq
          %v3467 = vshrl.u32 %v3466, 7
          %v3468 = vsub.s32 0, %v3467
          %v3469 = vrot.slane %v3464, %v3468
          %v3487 = vunpack.c.l.b16 %v3432
          %v3488 = vunpack.c.l.b16 %v3433
          %v3489 = vunpack.c.l.b16 %v3434
          %v3490 = vunpack.c.l.b16 %v3435
          %v3491 = vunpack.c.l.b16 %v3436
          %v3492 = vunpack.c.l.b16 %v3437
          %v3493 = vunpack.c.l.b16 %v3438
          %v3494 = vunpack.c.l.b16 %v3439
          %v3495 = vunpack.c.l.b16 %v3440
          %v3496 = vunpack.c.l.b16 %v3441
          %v3497 = vunpack.c.l.b16 %v3442
          %v3498 = vunpack.c.l.b16 %v3443
          %v3499 = vunpack.c.l.b16 %v3444
          %v3500 = vunpack.c.l.b16 %v3445
          %v3501 = vunpack.c.l.b16 %v3446
          %v3502 = vunpack.c.l.b16 %v3447
          %v3503 = vpack.c.b16 %v3488, %v3487
          %v3504 = vpack.c.b16 %v3490, %v3489
          %v3505 = vpack.c.b16 %v3492, %v3491
          %v3506 = vpack.c.b16 %v3494, %v3493
          %v3507 = vpack.c.b16 %v3496, %v3495
          %v3508 = vpack.c.b16 %v3498, %v3497
          %v3509 = vpack.c.b16 %v3500, %v3499
          %v3510 = vpack.c.b16 %v3502, %v3501
          %v3535 = vunpack.c.l.b16 %v3448
          %v3536 = vunpack.c.l.b16 %v3449
          %v3537 = vunpack.c.l.b16 %v3450
          %v3538 = vunpack.c.l.b16 %v3451
          %v3539 = vunpack.c.l.b16 %v3452
          %v3540 = vunpack.c.l.b16 %v3453
          %v3541 = vunpack.c.l.b16 %v3454
          %v3542 = vunpack.c.l.b16 %v3455
          %v3543 = vunpack.c.l.b16 %v3456
          %v3544 = vunpack.c.l.b16 %v3457
          %v3545 = vunpack.c.l.b16 %v3458
          %v3546 = vunpack.c.l.b16 %v3459
          %v3547 = vunpack.c.l.b16 %v3460
          %v3548 = vunpack.c.l.b16 %v3461
          %v3549 = vunpack.c.l.b16 %v3462
          %v3550 = vunpack.c.l.b16 %v3463
          %v3551 = vpack.c.b16 %v3536, %v3535
          %v3552 = vpack.c.b16 %v3538, %v3537
          %v3553 = vpack.c.b16 %v3540, %v3539
          %v3554 = vpack.c.b16 %v3542, %v3541
          %v3555 = vpack.c.b16 %v3544, %v3543
          %v3556 = vpack.c.b16 %v3546, %v3545
          %v3557 = vpack.c.b16 %v3548, %v3547
          %v3558 = vpack.c.b16 %v3550, %v3549
          %3567 = vmatprep.subr.bf16.mxu0 0
          %3568 = vmatpush1.bf16.msra.mxu0 %v3551
          %3569 = vmatprep.subr.bf16.mxu0 0
          %3570 = vmatpush1.bf16.msra.mxu0 %v3552
          %3571 = vmatprep.subr.bf16.mxu0 0
          %3572 = vmatpush1.bf16.msra.mxu0 %v3553
          %3573 = vmatprep.subr.bf16.mxu0 0
          %3574 = vmatpush1.bf16.msra.mxu0 %v3554
          %3575 = vmatprep.subr.bf16.mxu0 0
          %3576 = vmatpush1.bf16.msra.mxu0 %v3555
          %3577 = vmatprep.subr.bf16.mxu0 0
          %3578 = vmatpush1.bf16.msra.mxu0 %v3556
          %3579 = vmatprep.subr.bf16.mxu0 0
          %3580 = vmatpush1.bf16.msra.mxu0 %v3557
          %3581 = vmatprep.subr.bf16.mxu0 0
          %3582 = vmatpush1.bf16.msra.mxu0 %v3558
          %3583 = vmatprep.subr.bf16.mxu0 0
          %3584 = vmatpush1.bf16.msra.mxu0 0
          %3585 = vmatprep.subr.bf16.mxu0 0
          %3586 = vmatpush1.bf16.msra.mxu0 0
          %3587 = vmatprep.subr.bf16.mxu0 0
          %3588 = vmatpush1.bf16.msra.mxu0 0
          %3589 = vmatprep.subr.bf16.mxu0 0
          %3590 = vmatpush1.bf16.msra.mxu0 0
          %3591 = vmatprep.subr.bf16.mxu0 0
          %3592 = vmatpush1.bf16.msra.mxu0 0
          %3593 = vmatprep.subr.bf16.mxu0 0
          %3594 = vmatpush1.bf16.msra.mxu0 0
          %3595 = vmatprep.subr.bf16.mxu0 0
          %3596 = vmatpush1.bf16.msra.mxu0 0
          %3597 = vmatprep.subr.bf16.mxu0 0
          %3598 = vmatpush1.bf16.msra.mxu0 0
          %3599 = vmatprep.mubr.bf16.mxu0 0
          %3600 = vmatmul.mubr.bf16.gmra.mrb[0].mxu0 %v3503
          %v3601 = vpop.f32.mrb[0].mxu0
          %v3602 = vadd.f32 %v3469, %v3601
          %v3603 = vpop.f32.mrb[0].mxu0
          %v3604 = vpop.f32.mrb[0].mxu0
          %v3605 = vadd.f32 %v3469, %v3604
          %v3606 = vpop.f32.mrb[0].mxu0
          %3607 = vmatprep.mubr.bf16.mxu0 0
          %3608 = vmatmul.mubr.bf16.gmra.mrb[0].mxu0 %v3504
          %v3609 = vpop.f32.mrb[0].mxu0
          %v3610 = vadd.f32 %v3469, %v3609
          %v3611 = vpop.f32.mrb[0].mxu0
          %v3612 = vpop.f32.mrb[0].mxu0
          %v3613 = vadd.f32 %v3469, %v3612
          %v3614 = vpop.f32.mrb[0].mxu0
          %3615 = vmatprep.mubr.bf16.mxu0 0
          %3616 = vmatmul.mubr.bf16.gmra.mrb[0].mxu0 %v3505
          %v3617 = vpop.f32.mrb[0].mxu0
          %v3618 = vadd.f32 %v3469, %v3617
          %v3619 = vpop.f32.mrb[0].mxu0
          %v3620 = vpop.f32.mrb[0].mxu0
          %v3621 = vadd.f32 %v3469, %v3620
          %v3622 = vpop.f32.mrb[0].mxu0
          %3623 = vmatprep.mubr.bf16.mxu0 0
          %3624 = vmatmul.mubr.bf16.gmra.mrb[0].mxu0 %v3506
          %v3625 = vpop.f32.mrb[0].mxu0
          %v3626 = vadd.f32 %v3469, %v3625
          %v3627 = vpop.f32.mrb[0].mxu0
          %v3628 = vpop.f32.mrb[0].mxu0
          %v3629 = vadd.f32 %v3469, %v3628
          %v3630 = vpop.f32.mrb[0].mxu0
          %3631 = vmatprep.mubr.bf16.mxu0 0
          %3632 = vmatmul.mubr.bf16.gmra.mrb[0].mxu0 %v3507
          %v3633 = vpop.f32.mrb[0].mxu0
          %v3634 = vadd.f32 %v3469, %v3633
          %v3635 = vpop.f32.mrb[0].mxu0
          %v3636 = vpop.f32.mrb[0].mxu0
          %v3637 = vadd.f32 %v3469, %v3636
          %v3638 = vpop.f32.mrb[0].mxu0
          %3639 = vmatprep.mubr.bf16.mxu0 0
          %3640 = vmatmul.mubr.bf16.gmra.mrb[0].mxu0 %v3508
          %v3641 = vpop.f32.mrb[0].mxu0
          %v3642 = vadd.f32 %v3469, %v3641
          %v3643 = vpop.f32.mrb[0].mxu0
          %v3644 = vpop.f32.mrb[0].mxu0
          %v3645 = vadd.f32 %v3469, %v3644
          %v3646 = vpop.f32.mrb[0].mxu0
          %3647 = vmatprep.mubr.bf16.mxu0 0
          %3648 = vmatmul.mubr.bf16.gmra.mrb[0].mxu0 %v3509
          %v3649 = vpop.f32.mrb[0].mxu0
          %v3650 = vadd.f32 %v3469, %v3649
          %v3651 = vpop.f32.mrb[0].mxu0
          %v3652 = vpop.f32.mrb[0].mxu0
          %v3653 = vadd.f32 %v3469, %v3652
          %v3654 = vpop.f32.mrb[0].mxu0
          %3655 = vmatprep.mubr.bf16.mxu0 0
          %3656 = vmatmul.mubr.bf16.gmra.mrb[0].mxu0 %v3510
          %v3657 = vpop.f32.mrb[0].mxu0
          %v3658 = vadd.f32 %v3469, %v3657
          %v3659 = vpop.f32.mrb[0].mxu0
          %v3660 = vpop.f32.mrb[0].mxu0
          %v3661 = vadd.f32 %v3469, %v3660
          %v3662 = vpop.f32.mrb[0].mxu0
          %3663 = vdwg.mxu0
          %v3664 = vadd.f32 %v3416, %v3602
          %v3665 = vadd.f32 %v3417, %v3605
          %v3666 = vadd.f32 %v3418, %v3610
          %v3667 = vadd.f32 %v3419, %v3613
          %v3668 = vadd.f32 %v3420, %v3618
          %v3669 = vadd.f32 %v3421, %v3621
          %v3670 = vadd.f32 %v3422, %v3626
          %v3671 = vadd.f32 %v3423, %v3629
          %v3672 = vadd.f32 %v3424, %v3634
          %v3673 = vadd.f32 %v3425, %v3637
          %v3674 = vadd.f32 %v3426, %v3642
          %v3675 = vadd.f32 %v3427, %v3645
          %v3676 = vadd.f32 %v3428, %v3650
          %v3677 = vadd.f32 %v3429, %v3653
          %v3678 = vadd.f32 %v3430, %v3658
          %v3679 = vadd.f32 %v3431, %v3661
          %3680 = vst [vmem:[#allocation18] sm:$0xff] %v3664
          %3681 = vst [vmem:[#allocation18 + $0x8] sm:$0xff] %v3665
          %3682 = vst [vmem:[#allocation18 + $0x10] sm:$0xff] %v3666
          %3683 = vst [vmem:[#allocation18 + $0x18] sm:$0xff] %v3667
          %3684 = vst [vmem:[#allocation18 + $0x20] sm:$0xff] %v3668
          %3685 = vst [vmem:[#allocation18 + $0x28] sm:$0xff] %v3669
          %3686 = vst [vmem:[#allocation18 + $0x30] sm:$0xff] %v3670
          %3687 = vst [vmem:[#allocation18 + $0x38] sm:$0xff] %v3671
          %3688 = vst [vmem:[#allocation18 + $0x40] sm:$0xff] %v3672
          %3689 = vst [vmem:[#allocation18 + $0x48] sm:$0xff] %v3673
          %3690 = vst [vmem:[#allocation18 + $0x50] sm:$0xff] %v3674
          %3691 = vst [vmem:[#allocation18 + $0x58] sm:$0xff] %v3675
          %3692 = vst [vmem:[#allocation18 + $0x60] sm:$0xff] %v3676
          %3693 = vst [vmem:[#allocation18 + $0x68] sm:$0xff] %v3677
          %3694 = vst [vmem:[#allocation18 + $0x70] sm:$0xff] %v3678
          %3695 = vst [vmem:[#allocation18 + $0x78] sm:$0xff] %v3679
        $region124: #{tpu_custom_call.1} parent=87 // pred_fallthru
          _
        %s3696 = sand.u32 %s420, 1
        %s3697 = scalar_lea.sflag [#allocation7], %s3696
        %s3698 = sand.u32 %s420, 1
        %s3699 = smul.addr %s3698, 128
        %s3700 = scalar_lea.vmem [#allocation17], %s3699
        // Predicated region
        $region125: #{tpu_custom_call.1} parent=87 // pred_check
          %p3701 = pneg %p430
        $region126: #{tpu_custom_call.1} parent=87 // pred_check_branch
          %3703 = sbr.rel (%p3701) target = $region128
        $region127: #{tpu_custom_call.1} parent=87 // pred_region
          %s3704 = smul.u32 16, %s40
          %s3706 = ssub.s32 2048, 2048
          %3707 = vsyncadd %s3697, %s3706
          %s3708 = smul.addr %s3704, 128
          %s3709 = scalar_lea.hbm %s17, %s3708
          %s3710 = sshll.u32 %s3700, 4
          %s3711 = int_to_ptr.vmem [resolvable:$true] %s3710
          %3716 = dma.vmem_to_hbm [thread:$0]  %s3711, 2048, %s3709, %s3697, 128, 128, 8
        $region128: #{tpu_custom_call.1} parent=87 // pred_fallthru
          _
        // Predicated region
        $region129: #{tpu_custom_call.1} parent=87 // pred_check
          %p3717 = pneg %p451
        $region130: #{tpu_custom_call.1} parent=87 // pred_check_branch
          %3719 = sbr.rel (%p3717) target = $region132
        $region131: #{tpu_custom_call.1} parent=87 // pred_region
          %s3721 = ssub.s32 2048, 2048
          %3722 = vsyncadd [#allocation19], %s3721
          %s3723 = sshll.u32 [#allocation18], 4
          %s3724 = int_to_ptr.vmem [resolvable:$true] %s3723
          %3729 = dma.vmem_to_hbm [thread:$0]  %s3724, 2048, %s18, [#allocation19], 128, 128, 8
        $region132: #{tpu_custom_call.1} parent=87 // pred_fallthru
          _
        // Predicated region
        $region133: #{tpu_custom_call.1} parent=87 // pred_check
          %p3730 = pneg %p451
        $region134: #{tpu_custom_call.1} parent=87 // pred_check_branch
          %3732 = sbr.rel (%p3730) target = $region136
        $region135: #{tpu_custom_call.1} parent=87 // pred_region
          %3733 = dma.done [#allocation19], 2048
        $region136: #{tpu_custom_call.1} parent=87 // pred_fallthru
          _
      $region88: #{tpu_custom_call.1} parent=5 // pred_fallthru
        _
      %p3734 = scmp.le.s32.totalorder 2, %s35
      // Predicated region
      $region137: #{tpu_custom_call.1} parent=5 // pred_check
        %p3735 = pneg %p3734
      $region138: #{tpu_custom_call.1} parent=5 // pred_check_branch
        %3737 = sbr.rel (%p3735) target = $region140
      $region139: #{tpu_custom_call.1} parent=5 // pred_region
        %s3738 = ssub.s32 %s35, 2
        // Predicated region
        $region141: #{tpu_custom_call.1} parent=139 // pred_check
          %p3739 = pneg %p436
        $region142: #{tpu_custom_call.1} parent=139 // pred_check_branch
          %3741 = sbr.rel (%p3739) target = $region144
        $region143: #{tpu_custom_call.1} parent=139 // pred_region
          %s3742 = sand.u32 %s421, 1
          %s3743 = scalar_lea.sflag [#allocation7], %s3742
          %s3744 = sand.u32 %s421, 1
          %s3745 = smul.addr %s3744, 128
          %s3746 = scalar_lea.vmem [#allocation17], %s3745
          %3747 = dma.done %s3743, 2048
        $region144: #{tpu_custom_call.1} parent=139 // pred_fallthru
          _
      $region140: #{tpu_custom_call.1} parent=5 // pred_fallthru
        _
    $region6: #{tpu_custom_call.1} parent=1 // loop_footer
      %s39 = sadd.s32 1, %s35
    $region7: #{tpu_custom_call.1} parent=1 // loop_footer_branch
      %34 = sbr.rel target = $region3
    $region8: #{tpu_custom_call.1} parent=1 // loop_exit
      _
    %3748 = vsyncpa [#allocation6], 1
    %s3749 = scalar_lea.sflag [#allocation6], 1
    %3750 = vsyncpa %s3749, 1
    %3751 = vsyncpa [#allocation9], 1
    %3752 = vsyncpa [#allocation12], 1
    %3753 = vsyncpa [#allocation15], 1
    %3754 = vsyncpa [#allocation7], 1
    %s3755 = scalar_lea.sflag [#allocation7], 1
    %3756 = vsyncpa %s3755, 1
    %3757 = vsyncpa [#allocation19], 1

</llo_original>
